<compile_context>
chip_gen: v5e
topology: v5e:2x2
jax: 0.10.0
libtpu: 0.0.40
codegen_flags: <defaults>
</compile_context>

<pallas_src>
import jax
import jax.numpy as jnp
from jax.experimental import pallas as pl
from jax.experimental.pallas import tpu as pltpu


def _seq2seq_kernel(ids_ref, wf_ref, b1_ref, w2_ref, b2_ref, out_ref, acc_ref):
    """One grid step = one (batch tile j, sequence block i).

    ids_ref : (rows, 1) int32   token ids for this tile (row = t*tb + b)
    wf_ref  : (V, H)    bf16    fused embedding @ Linear1 table (grid-resident)
    b1_ref  : (1, H)    f32
    w2_ref  : (H, Cp)   bf16    output weights, lane-padded to Cp (multiple of 128)
    b2_ref  : (1, Cp)   f32
    out_ref : (tb, Cp)  f32
    acc_ref : (tb, H)   f32     running max over sequence blocks
    """
    s_blk = pl.program_id(1)
    rows = ids_ref.shape[0]
    vocab, hidden = wf_ref.shape
    tb = acc_ref.shape[0]
    ts = rows // tb

    # Fused Embedding + Linear1 via exact one-hot row selection on the MXU.
    # (Out-of-range ids would select an all-zero row instead of raising — callers must
    # guarantee 0 <= id < V, matching nn.Embedding's contract.)
    ids = ids_ref[...]                                                   # (rows, 1)
    vocab_iota = jax.lax.broadcasted_iota(jnp.int32, (rows, vocab), 1)   # (rows, V)
    onehot = (vocab_iota == ids).astype(jnp.bfloat16)                    # single cast
    h = jnp.dot(onehot, wf_ref[...],
                preferred_element_type=jnp.float32) + b1_ref[...]        # (rows, H)
    h = jnp.maximum(h, 0.0)

    # In-block max over the ts timesteps, kept in values (tb % 8 == 0 -> pure
    # sublane-aligned vmax, no XLU); exactly one scratch store per grid step.
    blk_max = jnp.max(h.reshape(ts, tb, hidden), axis=0)                 # (tb, H)

    @pl.when(s_blk == 0)
    def _():
        acc_ref[...] = blk_max

    @pl.when(s_blk > 0)
    def _():
        acc_ref[...] = jnp.maximum(acc_ref[...], blk_max)

    # Final linear once per batch tile; lane-dense padded output (unmasked vst).
    @pl.when(s_blk == pl.num_programs(1) - 1)
    def _():
        out = jnp.dot(acc_ref[...].astype(jnp.bfloat16), w2_ref[...],
                      preferred_element_type=jnp.float32) + b2_ref[...]
        out_ref[...] = out.astype(out_ref.dtype)


def _resident_spec(shape, single_buffer):
    """BlockSpec for a weight whose block is identical at every grid step."""
    index_map = lambda j, i: (0,) * len(shape)
    if single_buffer:
        # No point double-buffering a block whose index never changes; halves its VMEM
        # footprint (relevant for large V on v7x's 64 MiB VMEM).
        return pl.BlockSpec(shape, index_map, pipeline_mode=pl.Buffered(1))
    return pl.BlockSpec(shape, index_map)


def custom_seq2seq_forward(input_seq, params, *, ts=64, tb=None):
    """input_seq: (S, B) int32, sequence-major (matches torch.max over dim=0).
    Returns (B, C) float32 logits."""
    emb, w1, b1, w2, b2 = (params["emb"], params["w1"], params["b1"],
                           params["w2"], params["b2"])
    S, B = input_seq.shape
    V, E = emb.shape
    H = w1.shape[1]
    C = w2.shape[1]

    if tb is None:
        # Favor big rows-per-step (amortize per-step overhead); at large batch keep
        # several batch tiles so the "parallel" axis can feed both v7x TensorCores.
        tb = B if B <= 128 else 128
    ts = min(ts, S)
    tb = min(tb, B)
    assert S % ts == 0 and B % tb == 0, "demo tiling requires divisibility"
    assert tb % 8 == 0, "batch tile must be a sublane multiple"
    n_s, n_b = S // ts, B // tb
    rows = ts * tb

    # --- Parameter prep (in real use: precompute once, not per forward call). ---
    # Algebraic fusion: onehot @ (emb @ w1) == (onehot @ emb) @ w1 exactly; round once.
    w_fused = (emb.astype(jnp.float32) @ w1.astype(jnp.float32)).astype(jnp.bfloat16)
    # Lane-dense output: pad tiny C up to a multiple of 128 (sliced off below).
    c_pad = ((C + 127) // 128) * 128
    w2p = jnp.zeros((H, c_pad), w2.dtype).at[:, :C].set(w2)
    b2p = jnp.zeros((1, c_pad), b2.dtype).at[:, :C].set(b2)

    # Regroup token ids so each grid step reads one contiguous (rows, 1) block:
    #   ids5[i, j, t*tb + bb, 0] == input_seq[i*ts + t, j*tb + bb]
    # With the default tb == B (n_b == 1) the transpose only moves a size-1 axis, i.e.
    # it is a free metadata reshape — no extra HBM round trip of the id tensor.
    ids5 = (input_seq.reshape(n_s, ts, n_b, tb)
            .transpose(0, 2, 1, 3)
            .reshape(n_s, n_b, rows, 1))

    def build(single_buffer):
        grid_spec = pltpu.PrefetchScalarGridSpec(
            num_scalar_prefetch=0,
            grid=(n_b, n_s),                     # (parallel batch tiles, seq blocks)
            in_specs=[
                pl.BlockSpec((None, None, rows, 1), lambda j, i: (i, j, 0, 0)),
                _resident_spec((V, H), single_buffer),      # fused emb@w1 table
                _resident_spec((1, H), single_buffer),
                _resident_spec((H, c_pad), single_buffer),
                _resident_spec((1, c_pad), single_buffer),
            ],
            out_specs=pl.BlockSpec((tb, c_pad), lambda j, i: (j, 0)),
            scratch_shapes=[pltpu.VMEM((tb, H), jnp.float32)],
        )
        return pl.pallas_call(
            _seq2seq_kernel,
            out_shape=jax.ShapeDtypeStruct((B, c_pad), jnp.float32),
            grid_spec=grid_spec,
            compiler_params=pltpu.CompilerParams(
                dimension_semantics=("parallel", "arbitrary")),
        )

    try:
        out_padded = build(single_buffer=True)(ids5, w_fused, b1, w2p, b2p)
    except Exception:
        # pipeline_mode=pl.Buffered(1) unsupported on this jax build/backend: fall back
        # to default double buffering (identical results; only costs weight VMEM).
        out_padded = build(single_buffer=False)(ids5, w_fused, b1, w2p, b2p)

    return out_padded[:, :C]


def init_params(key, vocab_size, emb_size, hidden_size, num_classes):
    k0, k1, k2, k3, k4 = jax.random.split(key, 5)
    # Matmul weights in bf16 (MXU path), biases in f32.
    emb = (jax.random.normal(k0, (vocab_size, emb_size), jnp.float32) * 0.1
           ).astype(jnp.bfloat16)
    w1 = (jax.random.normal(k1, (emb_size, hidden_size), jnp.float32) * 0.1
          ).astype(jnp.bfloat16)
    b1 = jax.random.normal(k2, (1, hidden_size), jnp.float32) * 0.1
    w2 = (jax.random.normal(k3, (hidden_size, num_classes), jnp.float32) * 0.1
          ).astype(jnp.bfloat16)
    b2 = jax.random.normal(k4, (1, num_classes), jnp.float32) * 0.1
    return {"emb": emb, "w1": w1, "b1": b1, "w2": w2, "b2": b2}


def reference_forward(input_seq, params):
    """Pure-JAX reference matching the kernel's numerics (fused bf16 emb@w1 table,
    bf16 MXU inputs with f32 accumulation)."""
    w_fused = (params["emb"].astype(jnp.float32)
               @ params["w1"].astype(jnp.float32)).astype(jnp.bfloat16)      # (V, H)
    h = jnp.take(w_fused, input_seq, axis=0).astype(jnp.float32) + params["b1"][0]
    h = jnp.maximum(h, 0.0)                                                  # (S, B, H)
    pooled = jnp.max(h, axis=0)                                              # (B, H)
    pooled = pooled.astype(jnp.bfloat16).astype(jnp.float32)                 # kernel feeds bf16 MXU
    return pooled @ params["w2"].astype(jnp.float32) + params["b2"][0]       # (B, C)


if __name__ == "__main__":
    vocab_size, emb_size, hidden_size, num_classes = 128, 128, 128, 2
    S, B = 64, 16

    key = jax.random.PRNGKey(0)
    kp, kx = jax.random.split(key)
    params = init_params(kp, vocab_size, emb_size, hidden_size, num_classes)
    input_seq = jax.random.randint(kx, (S, B), 0, vocab_size, dtype=jnp.int32)

    out = custom_seq2seq_forward(input_seq, params)
    out = jax.block_until_ready(out)

    ref = reference_forward(input_seq, params)
    assert out.shape == (B, num_classes)
    assert jnp.allclose(out, ref, atol=5e-3, rtol=1e-3), (out, ref)

    print("KERNEL_OK")
</pallas_src>

<mosaic_0001>
module attributes {stable_mosaic.version = 11 : i64} {
  func.func @_seq2seq_kernel(%arg0: i32, %arg1: i32, %arg2: memref<1x1x1024x1xi32, #tpu.memory_space<vmem>>, %arg3: memref<128x128xbf16, #tpu.memory_space<vmem>>, %arg4: memref<1x128xf32, #tpu.memory_space<vmem>>, %arg5: memref<128x128xbf16, #tpu.memory_space<vmem>>, %arg6: memref<1x128xf32, #tpu.memory_space<vmem>>, %arg7: memref<16x128xf32, #tpu.memory_space<vmem>>, %arg8: memref<16x128xf32, #tpu.memory_space<vmem>>) attributes {dimension_semantics = [#tpu.dimension_semantics<parallel>, #tpu.dimension_semantics<arbitrary>], iteration_bounds = array<i64: 1, 1>, scalar_prefetch = 0 : i64, scratch_operands = 1 : i64, tpu.core_type = #tpu.core_type<tc>, window_params = [{transform_indices = @transform_0, window_bounds = array<i64: 1, 1, 1024, 1>}, {pipeline_mode = #tpu.pipeline_mode<synchronous>, transform_indices = @transform_1, window_bounds = array<i64: 128, 128>}, {pipeline_mode = #tpu.pipeline_mode<synchronous>, transform_indices = @transform_2, window_bounds = array<i64: 1, 128>}, {pipeline_mode = #tpu.pipeline_mode<synchronous>, transform_indices = @transform_3, window_bounds = array<i64: 128, 128>}, {pipeline_mode = #tpu.pipeline_mode<synchronous>, transform_indices = @transform_4, window_bounds = array<i64: 1, 128>}, {transform_indices = @transform_5, window_bounds = array<i64: 16, 128>}]} {
    %c0 = arith.constant 0 : index
    %c0_0 = arith.constant 0 : index
    %c0_1 = arith.constant 0 : index
    %c0_2 = arith.constant 0 : index
    %0 = vector.load %arg2[%c0, %c0_0, %c0_1, %c0_2] : memref<1x1x1024x1xi32, #tpu.memory_space<vmem>>, vector<1x1x1024x1xi32>
    %1 = vector.shape_cast %0 : vector<1x1x1024x1xi32> to vector<1024x1xi32>
    %2 = tpu.iota {dimensions = array<i32: 1>} : vector<1024x128xi32>
    %3 = vector.broadcast %1 : vector<1024x1xi32> to vector<1024x128xi32>
    %4 = arith.cmpi eq, %2, %3 : vector<1024x128xi32>
    %5 = arith.extui %4 : vector<1024x128xi1> to vector<1024x128xi32>
    %6 = arith.sitofp %5 : vector<1024x128xi32> to vector<1024x128xf32>
    %7 = arith.truncf %6 : vector<1024x128xf32> to vector<1024x128xbf16>
    %c0_3 = arith.constant 0 : index
    %c0_4 = arith.constant 0 : index
    %8 = vector.load %arg3[%c0_3, %c0_4] : memref<128x128xbf16, #tpu.memory_space<vmem>>, vector<128x128xbf16>
    %cst = arith.constant dense<0.000000e+00> : vector<1024x128xf32>
    %9 = tpu.matmul %7, %8, %cst {dimension_numbers = #tpu.dot_dimension_numbers<[1], [0], [0], [1], [0, 0, 1, 1], [], []>} : vector<1024x128xbf16>, vector<128x128xbf16>, vector<1024x128xf32> -> vector<1024x128xf32>
    %c0_5 = arith.constant 0 : index
    %c0_6 = arith.constant 0 : index
    %10 = vector.load %arg4[%c0_5, %c0_6] : memref<1x128xf32, #tpu.memory_space<vmem>>, vector<1x128xf32>
    %11 = vector.broadcast %10 : vector<1x128xf32> to vector<1024x128xf32>
    %12 = arith.addf %9, %11 : vector<1024x128xf32>
    %cst_7 = arith.constant 0.000000e+00 : f32
    %13 = vector.broadcast %cst_7 : f32 to vector<1024x128xf32>
    %14 = arith.maximumf %12, %13 : vector<1024x128xf32>
    %15 = vector.shape_cast %14 : vector<1024x128xf32> to vector<64x16x128xf32>
    %cst_8 = arith.constant dense<0xFF800000> : vector<16x128xf32>
    %16 = vector.multi_reduction <maximumf>, %15, %cst_8 [0] : vector<64x16x128xf32> to vector<16x128xf32>
    %c0_i32 = arith.constant 0 : i32
    %17 = arith.cmpi eq, %arg1, %c0_i32 : i32
    %18 = arith.extui %17 : i1 to i32
    %c0_i32_9 = arith.constant 0 : i32
    %19 = arith.cmpi ne, %18, %c0_i32_9 : i32
    scf.if %19 {
      %c0_14 = arith.constant 0 : index
      %c0_15 = arith.constant 0 : index
      %26 = vector.load %arg8[%c0_14, %c0_15] : memref<16x128xf32, #tpu.memory_space<vmem>>, vector<16x128xf32>
      tpu.vector_store %arg8[%c0_14, %c0_15], %16 {strides = array<i32>} : memref<16x128xf32, #tpu.memory_space<vmem>>, vector<16x128xf32>,
    } else {
    }
    %c0_i32_10 = arith.constant 0 : i32
    %20 = arith.cmpi sgt, %arg1, %c0_i32_10 : i32
    %21 = arith.extui %20 : i1 to i32
    %c0_i32_11 = arith.constant 0 : i32
    %22 = arith.cmpi ne, %21, %c0_i32_11 : i32
    scf.if %22 {
      %c0_14 = arith.constant 0 : index
      %c0_15 = arith.constant 0 : index
      %26 = vector.load %arg8[%c0_14, %c0_15] : memref<16x128xf32, #tpu.memory_space<vmem>>, vector<16x128xf32>
      %27 = arith.maximumf %26, %16 : vector<16x128xf32>
      %c0_16 = arith.constant 0 : index
      %c0_17 = arith.constant 0 : index
      %28 = vector.load %arg8[%c0_16, %c0_17] : memref<16x128xf32, #tpu.memory_space<vmem>>, vector<16x128xf32>
      tpu.vector_store %arg8[%c0_16, %c0_17], %27 {strides = array<i32>} : memref<16x128xf32, #tpu.memory_space<vmem>>, vector<16x128xf32>,
    } else {
    }
    %c0_i32_12 = arith.constant 0 : i32
    %23 = arith.cmpi eq, %arg1, %c0_i32_12 : i32
    %24 = arith.extui %23 : i1 to i32
    %c0_i32_13 = arith.constant 0 : i32
    %25 = arith.cmpi ne, %24, %c0_i32_13 : i32
    scf.if %25 {
      %c0_14 = arith.constant 0 : index
      %c0_15 = arith.constant 0 : index
      %26 = vector.load %arg8[%c0_14, %c0_15] : memref<16x128xf32, #tpu.memory_space<vmem>>, vector<16x128xf32>
      %27 = arith.truncf %26 : vector<16x128xf32> to vector<16x128xbf16>
      %c0_16 = arith.constant 0 : index
      %c0_17 = arith.constant 0 : index
      %28 = vector.load %arg5[%c0_16, %c0_17] : memref<128x128xbf16, #tpu.memory_space<vmem>>, vector<128x128xbf16>
      %cst_18 = arith.constant dense<0.000000e+00> : vector<16x128xf32>
      %29 = tpu.matmul %27, %28, %cst_18 {dimension_numbers = #tpu.dot_dimension_numbers<[1], [0], [0], [1], [0, 0, 1, 1], [], []>} : vector<16x128xbf16>, vector<128x128xbf16>, vector<16x128xf32> -> vector<16x128xf32>
      %c0_19 = arith.constant 0 : index
      %c0_20 = arith.constant 0 : index
      %30 = vector.load %arg6[%c0_19, %c0_20] : memref<1x128xf32, #tpu.memory_space<vmem>>, vector<1x128xf32>
      %31 = vector.broadcast %30 : vector<1x128xf32> to vector<16x128xf32>
      %32 = arith.addf %29, %31 : vector<16x128xf32>
      %c0_21 = arith.constant 0 : index
      %c0_22 = arith.constant 0 : index
      %33 = vector.load %arg7[%c0_21, %c0_22] : memref<16x128xf32, #tpu.memory_space<vmem>>, vector<16x128xf32>
      tpu.vector_store %arg7[%c0_21, %c0_22], %32 {strides = array<i32>} : memref<16x128xf32, #tpu.memory_space<vmem>>, vector<16x128xf32>,
    } else {
    }
    return
  }
  func.func @transform_0(%arg0: i32, %arg1: i32) -> (i32, i32, i32, i32) {
    %c0_i32 = arith.constant 0 : i32
    %c0_i32_0 = arith.constant 0 : i32
    %c0_i32_1 = arith.constant 0 : i32
    return %arg1, %arg0, %c0_i32, %c0_i32_0 : i32, i32, i32, i32
  }
  func.func @transform_1(%arg0: i32, %arg1: i32) -> (i32, i32) {
    %c0_i32 = arith.constant 0 : i32
    %c0_i32_0 = arith.constant 0 : i32
    %c0_i32_1 = arith.constant 0 : i32
    return %c0_i32, %c0_i32_0 : i32, i32
  }
  func.func @transform_2(%arg0: i32, %arg1: i32) -> (i32, i32) {
    %c0_i32 = arith.constant 0 : i32
    %c0_i32_0 = arith.constant 0 : i32
    %c0_i32_1 = arith.constant 0 : i32
    return %c0_i32, %c0_i32_0 : i32, i32
  }
  func.func @transform_3(%arg0: i32, %arg1: i32) -> (i32, i32) {
    %c0_i32 = arith.constant 0 : i32
    %c0_i32_0 = arith.constant 0 : i32
    %c0_i32_1 = arith.constant 0 : i32
    return %c0_i32, %c0_i32_0 : i32, i32
  }
  func.func @transform_4(%arg0: i32, %arg1: i32) -> (i32, i32) {
    %c0_i32 = arith.constant 0 : i32
    %c0_i32_0 = arith.constant 0 : i32
    %c0_i32_1 = arith.constant 0 : i32
    return %c0_i32, %c0_i32_0 : i32, i32
  }
  func.func @transform_5(%arg0: i32, %arg1: i32) -> (i32, i32) {
    %c0_i32 = arith.constant 0 : i32
    %c0_i32_0 = arith.constant 0 : i32
    return %arg0, %c0_i32 : i32, i32
  }
}

module attributes {stable_mosaic.version = 11 : i64} {
  func.func @_seq2seq_kernel(%arg0: i32, %arg1: i32, %arg2: memref<1x1x1024x1xi32, #tpu.memory_space<vmem>>, %arg3: memref<128x128xbf16, #tpu.memory_space<vmem>>, %arg4: memref<1x128xf32, #tpu.memory_space<vmem>>, %arg5: memref<128x128xbf16, #tpu.memory_space<vmem>>, %arg6: memref<1x128xf32, #tpu.memory_space<vmem>>, %arg7: memref<16x128xf32, #tpu.memory_space<vmem>>, %arg8: memref<16x128xf32, #tpu.memory_space<vmem>>) attributes {dimension_semantics = [#tpu.dimension_semantics<parallel>, #tpu.dimension_semantics<arbitrary>], iteration_bounds = array<i64: 1, 1>, scalar_prefetch = 0 : i64, scratch_operands = 1 : i64, tpu.core_type = #tpu.core_type<tc>, window_params = [{transform_indices = @transform_0, window_bounds = array<i64: 1, 1, 1024, 1>}, {pipeline_mode = #tpu.pipeline_mode<synchronous>, transform_indices = @transform_1, window_bounds = array<i64: 128, 128>}, {pipeline_mode = #tpu.pipeline_mode<synchronous>, transform_indices = @transform_2, window_bounds = array<i64: 1, 128>}, {pipeline_mode = #tpu.pipeline_mode<synchronous>, transform_indices = @transform_3, window_bounds = array<i64: 128, 128>}, {pipeline_mode = #tpu.pipeline_mode<synchronous>, transform_indices = @transform_4, window_bounds = array<i64: 1, 128>}, {transform_indices = @transform_5, window_bounds = array<i64: 16, 128>}]} {
    %c0 = arith.constant 0 : index
    %c0_0 = arith.constant 0 : index
    %c0_1 = arith.constant 0 : index
    %c0_2 = arith.constant 0 : index
    %0 = vector.load %arg2[%c0, %c0_0, %c0_1, %c0_2] : memref<1x1x1024x1xi32, #tpu.memory_space<vmem>>, vector<1x1x1024x1xi32>
    %1 = vector.shape_cast %0 : vector<1x1x1024x1xi32> to vector<1024x1xi32>
    %2 = tpu.iota {dimensions = array<i32: 1>} : vector<1024x128xi32>
    %3 = vector.broadcast %1 : vector<1024x1xi32> to vector<1024x128xi32>
    %4 = arith.cmpi eq, %2, %3 : vector<1024x128xi32>
    %5 = arith.extui %4 : vector<1024x128xi1> to vector<1024x128xi32>
    %6 = arith.sitofp %5 : vector<1024x128xi32> to vector<1024x128xf32>
    %7 = arith.truncf %6 : vector<1024x128xf32> to vector<1024x128xbf16>
    %c0_3 = arith.constant 0 : index
    %c0_4 = arith.constant 0 : index
    %8 = vector.load %arg3[%c0_3, %c0_4] : memref<128x128xbf16, #tpu.memory_space<vmem>>, vector<128x128xbf16>
    %cst = arith.constant dense<0.000000e+00> : vector<1024x128xf32>
    %9 = tpu.matmul %7, %8, %cst {dimension_numbers = #tpu.dot_dimension_numbers<[1], [0], [0], [1], [0, 0, 1, 1], [], []>} : vector<1024x128xbf16>, vector<128x128xbf16>, vector<1024x128xf32> -> vector<1024x128xf32>
    %c0_5 = arith.constant 0 : index
    %c0_6 = arith.constant 0 : index
    %10 = vector.load %arg4[%c0_5, %c0_6] : memref<1x128xf32, #tpu.memory_space<vmem>>, vector<1x128xf32>
    %11 = vector.broadcast %10 : vector<1x128xf32> to vector<1024x128xf32>
    %12 = arith.addf %9, %11 : vector<1024x128xf32>
    %cst_7 = arith.constant 0.000000e+00 : f32
    %13 = vector.broadcast %cst_7 : f32 to vector<1024x128xf32>
    %14 = arith.maximumf %12, %13 : vector<1024x128xf32>
    %15 = vector.shape_cast %14 : vector<1024x128xf32> to vector<64x16x128xf32>
    %cst_8 = arith.constant dense<0xFF800000> : vector<16x128xf32>
    %16 = vector.multi_reduction <maximumf>, %15, %cst_8 [0] : vector<64x16x128xf32> to vector<16x128xf32>
    %c0_i32 = arith.constant 0 : i32
    %17 = arith.cmpi eq, %arg1, %c0_i32 : i32
    %18 = arith.extui %17 : i1 to i32
    %c0_i32_9 = arith.constant 0 : i32
    %19 = arith.cmpi ne, %18, %c0_i32_9 : i32
    scf.if %19 {
      %c0_14 = arith.constant 0 : index
      %c0_15 = arith.constant 0 : index
      %26 = vector.load %arg8[%c0_14, %c0_15] : memref<16x128xf32, #tpu.memory_space<vmem>>, vector<16x128xf32>
      tpu.vector_store %arg8[%c0_14, %c0_15], %16 {strides = array<i32>} : memref<16x128xf32, #tpu.memory_space<vmem>>, vector<16x128xf32>,
    } else {
    }
    %c0_i32_10 = arith.constant 0 : i32
    %20 = arith.cmpi sgt, %arg1, %c0_i32_10 : i32
    %21 = arith.extui %20 : i1 to i32
    %c0_i32_11 = arith.constant 0 : i32
    %22 = arith.cmpi ne, %21, %c0_i32_11 : i32
    scf.if %22 {
      %c0_14 = arith.constant 0 : index
      %c0_15 = arith.constant 0 : index
      %26 = vector.load %arg8[%c0_14, %c0_15] : memref<16x128xf32, #tpu.memory_space<vmem>>, vector<16x128xf32>
      %27 = arith.maximumf %26, %16 : vector<16x128xf32>
      %c0_16 = arith.constant 0 : index
      %c0_17 = arith.constant 0 : index
      %28 = vector.load %arg8[%c0_16, %c0_17] : memref<16x128xf32, #tpu.memory_space<vmem>>, vector<16x128xf32>
      tpu.vector_store %arg8[%c0_16, %c0_17], %27 {strides = array<i32>} : memref<16x128xf32, #tpu.memory_space<vmem>>, vector<16x128xf32>,
    } else {
    }
    %c0_i32_12 = arith.constant 0 : i32
    %23 = arith.cmpi eq, %arg1, %c0_i32_12 : i32
    %24 = arith.extui %23 : i1 to i32
    %c0_i32_13 = arith.constant 0 : i32
    %25 = arith.cmpi ne, %24, %c0_i32_13 : i32
    scf.if %25 {
      %c0_14 = arith.constant 0 : index
      %c0_15 = arith.constant 0 : index
      %26 = vector.load %arg8[%c0_14, %c0_15] : memref<16x128xf32, #tpu.memory_space<vmem>>, vector<16x128xf32>
      %27 = arith.truncf %26 : vector<16x128xf32> to vector<16x128xbf16>
      %c0_16 = arith.constant 0 : index
      %c0_17 = arith.constant 0 : index
      %28 = vector.load %arg5[%c0_16, %c0_17] : memref<128x128xbf16, #tpu.memory_space<vmem>>, vector<128x128xbf16>
      %cst_18 = arith.constant dense<0.000000e+00> : vector<16x128xf32>
      %29 = tpu.matmul %27, %28, %cst_18 {dimension_numbers = #tpu.dot_dimension_numbers<[1], [0], [0], [1], [0, 0, 1, 1], [], []>} : vector<16x128xbf16>, vector<128x128xbf16>, vector<16x128xf32> -> vector<16x128xf32>
      %c0_19 = arith.constant 0 : index
      %c0_20 = arith.constant 0 : index
      %30 = vector.load %arg6[%c0_19, %c0_20] : memref<1x128xf32, #tpu.memory_space<vmem>>, vector<1x128xf32>
      %31 = vector.broadcast %30 : vector<1x128xf32> to vector<16x128xf32>
      %32 = arith.addf %29, %31 : vector<16x128xf32>
      %c0_21 = arith.constant 0 : index
      %c0_22 = arith.constant 0 : index
      %33 = vector.load %arg7[%c0_21, %c0_22] : memref<16x128xf32, #tpu.memory_space<vmem>>, vector<16x128xf32>
      tpu.vector_store %arg7[%c0_21, %c0_22], %32 {strides = array<i32>} : memref<16x128xf32, #tpu.memory_space<vmem>>, vector<16x128xf32>,
    } else {
    }
    return
  }
  func.func @transform_0(%arg0: i32, %arg1: i32) -> (i32, i32, i32, i32) {
    %c0_i32 = arith.constant 0 : i32
    %c0_i32_0 = arith.constant 0 : i32
    %c0_i32_1 = arith.constant 0 : i32
    return %arg1, %arg0, %c0_i32, %c0_i32_0 : i32, i32, i32, i32
  }
  func.func @transform_1(%arg0: i32, %arg1: i32) -> (i32, i32) {
    %c0_i32 = arith.constant 0 : i32
    %c0_i32_0 = arith.constant 0 : i32
    %c0_i32_1 = arith.constant 0 : i32
    return %c0_i32, %c0_i32_0 : i32, i32
  }
  func.func @transform_2(%arg0: i32, %arg1: i32) -> (i32, i32) {
    %c0_i32 = arith.constant 0 : i32
    %c0_i32_0 = arith.constant 0 : i32
    %c0_i32_1 = arith.constant 0 : i32
    return %c0_i32, %c0_i32_0 : i32, i32
  }
  func.func @transform_3(%arg0: i32, %arg1: i32) -> (i32, i32) {
    %c0_i32 = arith.constant 0 : i32
    %c0_i32_0 = arith.constant 0 : i32
    %c0_i32_1 = arith.constant 0 : i32
    return %c0_i32, %c0_i32_0 : i32, i32
  }
  func.func @transform_4(%arg0: i32, %arg1: i32) -> (i32, i32) {
    %c0_i32 = arith.constant 0 : i32
    %c0_i32_0 = arith.constant 0 : i32
    %c0_i32_1 = arith.constant 0 : i32
    return %c0_i32, %c0_i32_0 : i32, i32
  }
  func.func @transform_5(%arg0: i32, %arg1: i32) -> (i32, i32) {
    %c0_i32 = arith.constant 0 : i32
    %c0_i32_0 = arith.constant 0 : i32
    return %arg0, %c0_i32 : i32, i32
  }
}

</mosaic_0001>

<llo_original>
// kernel: tpu_custom_call.1
$region0: #{tpu_custom_call.1}
  #allocation0 [shape = 'u32[]', space=smem, size = 0x4, offset = 0x4, fixed_abs, tag = 'smem constant byte address 0x4 - core index']
  #allocation1 [shape = 'u32[72,128]{1,0:T(1,128)}', space=vmem, size = 0x9000, scoped, tag = 'internal scratch']
  #allocation2 [shape = 'f32[16,128]{1,0:T(8,128)}', space=vmem, size = 0x2000, scoped, tag = 'scratch operand']
  %s0 = inlined_call_operand.vmem [shape: s32[1,1,1024,1], index: 0, kind: input, shape index: {}]
  %s1 = inlined_call_operand.vmem [shape: bf16[128,128], index: 1, kind: input, shape index: {}]
  %s2 = inlined_call_operand.vmem [shape: f32[1,128], index: 2, kind: input, shape index: {}]
  %s3 = inlined_call_operand.vmem [shape: bf16[128,128], index: 3, kind: input, shape index: {}]
  %s4 = inlined_call_operand.vmem [shape: f32[1,128], index: 4, kind: input, shape index: {}]
  %s5 = inlined_call_operand.hbm [shape: f32[16,128], index: 5, kind: output, shape index: {}]
  %s6 = sld [smem:[#allocation0]]
  $region42: #{tpu_custom_call.1} parent=0
    _
  %s8 = ssub.s32 1, %s6
  %s9 = scalar_select 0, %s8, %s6
  $region1: #{tpu_custom_call.1} parent=0
    #allocation3 [shape = 'u8[8192]{0}', space=vmem, size = 0x2000, scoped, tag = 'output window, operand 0, single buffered']
    #allocation4 [shape = 's32[1]{0}', space=sflag, size = 0x4, scoped, tag = 'scoped memory for tpu_custom_call.1']
    %10 = vsyncpa [#allocation4], 0
    // Predicated region
    $region2: #{tpu_custom_call.1} parent=1 // pred_check
      _
    $region3: #{tpu_custom_call.1} parent=1 // pred_check_branch
      %12 = sbr.rel (0) target = $region5
    $region4: #{tpu_custom_call.1} parent=1 // pred_region
      _
    $region5: #{tpu_custom_call.1} parent=1 // pred_fallthru
      _
    // Predicated region
    $region6: #{tpu_custom_call.1} parent=1 // pred_check
      _
    $region7: #{tpu_custom_call.1} parent=1 // pred_check_branch
      %14 = sbr.rel (0) target = $region9
    $region8: #{tpu_custom_call.1} parent=1 // pred_region
      _
    $region9: #{tpu_custom_call.1} parent=1 // pred_fallthru
      _
    // Predicated region
    $region10: #{tpu_custom_call.1} parent=1 // pred_check
      _
    $region11: #{tpu_custom_call.1} parent=1 // pred_check_branch
      %16 = sbr.rel (0) target = $region13
    $region12: #{tpu_custom_call.1} parent=1 // pred_region
      _
    $region13: #{tpu_custom_call.1} parent=1 // pred_fallthru
      _
    // Predicated region
    $region14: #{tpu_custom_call.1} parent=1 // pred_check
      _
    $region15: #{tpu_custom_call.1} parent=1 // pred_check_branch
      %18 = sbr.rel (0) target = $region17
    $region16: #{tpu_custom_call.1} parent=1 // pred_region
      _
    $region17: #{tpu_custom_call.1} parent=1 // pred_fallthru
      _
    // Predicated region
    $region18: #{tpu_custom_call.1} parent=1 // pred_check
      _
    $region19: #{tpu_custom_call.1} parent=1 // pred_check_branch
      %20 = sbr.rel (0) target = $region21
    $region20: #{tpu_custom_call.1} parent=1 // pred_region
      _
    $region21: #{tpu_custom_call.1} parent=1 // pred_fallthru
      _
    %v21 = vld [vmem:[%s0] sm:$0xff]
    %v22 = vld [vmem:[%s0 + $0x8] sm:$0xff]
    %v23 = vld [vmem:[%s0 + $0x10] sm:$0xff]
    %v24 = vld [vmem:[%s0 + $0x18] sm:$0xff]
    %v25 = vld [vmem:[%s0 + $0x20] sm:$0xff]
    %v26 = vld [vmem:[%s0 + $0x28] sm:$0xff]
    %v27 = vld [vmem:[%s0 + $0x30] sm:$0xff]
    %v28 = vld [vmem:[%s0 + $0x38] sm:$0xff]
    %v29 = vld [vmem:[%s0 + $0x40] sm:$0xff]
    %v30 = vld [vmem:[%s0 + $0x48] sm:$0xff]
    %v31 = vld [vmem:[%s0 + $0x50] sm:$0xff]
    %v32 = vld [vmem:[%s0 + $0x58] sm:$0xff]
    %v33 = vld [vmem:[%s0 + $0x60] sm:$0xff]
    %v34 = vld [vmem:[%s0 + $0x68] sm:$0xff]
    %v35 = vld [vmem:[%s0 + $0x70] sm:$0xff]
    %v36 = vld [vmem:[%s0 + $0x78] sm:$0xff]
    %v37 = vld [vmem:[%s0 + $0x80] sm:$0xff]
    %v38 = vld [vmem:[%s0 + $0x88] sm:$0xff]
    %v39 = vld [vmem:[%s0 + $0x90] sm:$0xff]
    %v40 = vld [vmem:[%s0 + $0x98] sm:$0xff]
    %v41 = vld [vmem:[%s0 + $0xa0] sm:$0xff]
    %v42 = vld [vmem:[%s0 + $0xa8] sm:$0xff]
    %v43 = vld [vmem:[%s0 + $0xb0] sm:$0xff]
    %v44 = vld [vmem:[%s0 + $0xb8] sm:$0xff]
    %v45 = vld [vmem:[%s0 + $0xc0] sm:$0xff]
    %v46 = vld [vmem:[%s0 + $0xc8] sm:$0xff]
    %v47 = vld [vmem:[%s0 + $0xd0] sm:$0xff]
    %v48 = vld [vmem:[%s0 + $0xd8] sm:$0xff]
    %v49 = vld [vmem:[%s0 + $0xe0] sm:$0xff]
    %v50 = vld [vmem:[%s0 + $0xe8] sm:$0xff]
    %v51 = vld [vmem:[%s0 + $0xf0] sm:$0xff]
    %v52 = vld [vmem:[%s0 + $0xf8] sm:$0xff]
    %v53 = vld [vmem:[%s0 + $0x100] sm:$0xff]
    %v54 = vld [vmem:[%s0 + $0x108] sm:$0xff]
    %v55 = vld [vmem:[%s0 + $0x110] sm:$0xff]
    %v56 = vld [vmem:[%s0 + $0x118] sm:$0xff]
    %v57 = vld [vmem:[%s0 + $0x120] sm:$0xff]
    %v58 = vld [vmem:[%s0 + $0x128] sm:$0xff]
    %v59 = vld [vmem:[%s0 + $0x130] sm:$0xff]
    %v60 = vld [vmem:[%s0 + $0x138] sm:$0xff]
    %v61 = vld [vmem:[%s0 + $0x140] sm:$0xff]
    %v62 = vld [vmem:[%s0 + $0x148] sm:$0xff]
    %v63 = vld [vmem:[%s0 + $0x150] sm:$0xff]
    %v64 = vld [vmem:[%s0 + $0x158] sm:$0xff]
    %v65 = vld [vmem:[%s0 + $0x160] sm:$0xff]
    %v66 = vld [vmem:[%s0 + $0x168] sm:$0xff]
    %v67 = vld [vmem:[%s0 + $0x170] sm:$0xff]
    %v68 = vld [vmem:[%s0 + $0x178] sm:$0xff]
    %v69 = vld [vmem:[%s0 + $0x180] sm:$0xff]
    %v70 = vld [vmem:[%s0 + $0x188] sm:$0xff]
    %v71 = vld [vmem:[%s0 + $0x190] sm:$0xff]
    %v72 = vld [vmem:[%s0 + $0x198] sm:$0xff]
    %v73 = vld [vmem:[%s0 + $0x1a0] sm:$0xff]
    %v74 = vld [vmem:[%s0 + $0x1a8] sm:$0xff]
    %v75 = vld [vmem:[%s0 + $0x1b0] sm:$0xff]
    %v76 = vld [vmem:[%s0 + $0x1b8] sm:$0xff]
    %v77 = vld [vmem:[%s0 + $0x1c0] sm:$0xff]
    %v78 = vld [vmem:[%s0 + $0x1c8] sm:$0xff]
    %v79 = vld [vmem:[%s0 + $0x1d0] sm:$0xff]
    %v80 = vld [vmem:[%s0 + $0x1d8] sm:$0xff]
    %v81 = vld [vmem:[%s0 + $0x1e0] sm:$0xff]
    %v82 = vld [vmem:[%s0 + $0x1e8] sm:$0xff]
    %v83 = vld [vmem:[%s0 + $0x1f0] sm:$0xff]
    %v84 = vld [vmem:[%s0 + $0x1f8] sm:$0xff]
    %v85 = vld [vmem:[%s0 + $0x200] sm:$0xff]
    %v86 = vld [vmem:[%s0 + $0x208] sm:$0xff]
    %v87 = vld [vmem:[%s0 + $0x210] sm:$0xff]
    %v88 = vld [vmem:[%s0 + $0x218] sm:$0xff]
    %v89 = vld [vmem:[%s0 + $0x220] sm:$0xff]
    %v90 = vld [vmem:[%s0 + $0x228] sm:$0xff]
    %v91 = vld [vmem:[%s0 + $0x230] sm:$0xff]
    %v92 = vld [vmem:[%s0 + $0x238] sm:$0xff]
    %v93 = vld [vmem:[%s0 + $0x240] sm:$0xff]
    %v94 = vld [vmem:[%s0 + $0x248] sm:$0xff]
    %v95 = vld [vmem:[%s0 + $0x250] sm:$0xff]
    %v96 = vld [vmem:[%s0 + $0x258] sm:$0xff]
    %v97 = vld [vmem:[%s0 + $0x260] sm:$0xff]
    %v98 = vld [vmem:[%s0 + $0x268] sm:$0xff]
    %v99 = vld [vmem:[%s0 + $0x270] sm:$0xff]
    %v100 = vld [vmem:[%s0 + $0x278] sm:$0xff]
    %v101 = vld [vmem:[%s0 + $0x280] sm:$0xff]
    %v102 = vld [vmem:[%s0 + $0x288] sm:$0xff]
    %v103 = vld [vmem:[%s0 + $0x290] sm:$0xff]
    %v104 = vld [vmem:[%s0 + $0x298] sm:$0xff]
    %v105 = vld [vmem:[%s0 + $0x2a0] sm:$0xff]
    %v106 = vld [vmem:[%s0 + $0x2a8] sm:$0xff]
    %v107 = vld [vmem:[%s0 + $0x2b0] sm:$0xff]
    %v108 = vld [vmem:[%s0 + $0x2b8] sm:$0xff]
    %v109 = vld [vmem:[%s0 + $0x2c0] sm:$0xff]
    %v110 = vld [vmem:[%s0 + $0x2c8] sm:$0xff]
    %v111 = vld [vmem:[%s0 + $0x2d0] sm:$0xff]
    %v112 = vld [vmem:[%s0 + $0x2d8] sm:$0xff]
    %v113 = vld [vmem:[%s0 + $0x2e0] sm:$0xff]
    %v114 = vld [vmem:[%s0 + $0x2e8] sm:$0xff]
    %v115 = vld [vmem:[%s0 + $0x2f0] sm:$0xff]
    %v116 = vld [vmem:[%s0 + $0x2f8] sm:$0xff]
    %v117 = vld [vmem:[%s0 + $0x300] sm:$0xff]
    %v118 = vld [vmem:[%s0 + $0x308] sm:$0xff]
    %v119 = vld [vmem:[%s0 + $0x310] sm:$0xff]
    %v120 = vld [vmem:[%s0 + $0x318] sm:$0xff]
    %v121 = vld [vmem:[%s0 + $0x320] sm:$0xff]
    %v122 = vld [vmem:[%s0 + $0x328] sm:$0xff]
    %v123 = vld [vmem:[%s0 + $0x330] sm:$0xff]
    %v124 = vld [vmem:[%s0 + $0x338] sm:$0xff]
    %v125 = vld [vmem:[%s0 + $0x340] sm:$0xff]
    %v126 = vld [vmem:[%s0 + $0x348] sm:$0xff]
    %v127 = vld [vmem:[%s0 + $0x350] sm:$0xff]
    %v128 = vld [vmem:[%s0 + $0x358] sm:$0xff]
    %v129 = vld [vmem:[%s0 + $0x360] sm:$0xff]
    %v130 = vld [vmem:[%s0 + $0x368] sm:$0xff]
    %v131 = vld [vmem:[%s0 + $0x370] sm:$0xff]
    %v132 = vld [vmem:[%s0 + $0x378] sm:$0xff]
    %v133 = vld [vmem:[%s0 + $0x380] sm:$0xff]
    %v134 = vld [vmem:[%s0 + $0x388] sm:$0xff]
    %v135 = vld [vmem:[%s0 + $0x390] sm:$0xff]
    %v136 = vld [vmem:[%s0 + $0x398] sm:$0xff]
    %v137 = vld [vmem:[%s0 + $0x3a0] sm:$0xff]
    %v138 = vld [vmem:[%s0 + $0x3a8] sm:$0xff]
    %v139 = vld [vmem:[%s0 + $0x3b0] sm:$0xff]
    %v140 = vld [vmem:[%s0 + $0x3b8] sm:$0xff]
    %v141 = vld [vmem:[%s0 + $0x3c0] sm:$0xff]
    %v142 = vld [vmem:[%s0 + $0x3c8] sm:$0xff]
    %v143 = vld [vmem:[%s0 + $0x3d0] sm:$0xff]
    %v144 = vld [vmem:[%s0 + $0x3d8] sm:$0xff]
    %v145 = vld [vmem:[%s0 + $0x3e0] sm:$0xff]
    %v146 = vld [vmem:[%s0 + $0x3e8] sm:$0xff]
    %v147 = vld [vmem:[%s0 + $0x3f0] sm:$0xff]
    %v148 = vld [vmem:[%s0 + $0x3f8] sm:$0xff]
    %v149 = vlaneseq
    %v150 = vand.u32 %v149, 127
    %151 = vset.pattern.permute.xlu0 0
    %152 = vperm.xlu0 %151, %v21
    %v153 = vpop.permute.xlu0 %152
    %154 = vset.pattern.permute.xlu0 0
    %155 = vperm.xlu0 %154, %v22
    %v156 = vpop.permute.xlu0 %155
    %157 = vset.pattern.permute.xlu0 0
    %158 = vperm.xlu0 %157, %v23
    %v159 = vpop.permute.xlu0 %158
    %160 = vset.pattern.permute.xlu0 0
    %161 = vperm.xlu0 %160, %v24
    %v162 = vpop.permute.xlu0 %161
    %163 = vset.pattern.permute.xlu0 0
    %164 = vperm.xlu0 %163, %v25
    %v165 = vpop.permute.xlu0 %164
    %166 = vset.pattern.permute.xlu0 0
    %167 = vperm.xlu0 %166, %v26
    %v168 = vpop.permute.xlu0 %167
    %169 = vset.pattern.permute.xlu0 0
    %170 = vperm.xlu0 %169, %v27
    %v171 = vpop.permute.xlu0 %170
    %172 = vset.pattern.permute.xlu0 0
    %173 = vperm.xlu0 %172, %v28
    %v174 = vpop.permute.xlu0 %173
    %175 = vset.pattern.permute.xlu0 0
    %176 = vperm.xlu0 %175, %v29
    %v177 = vpop.permute.xlu0 %176
    %178 = vset.pattern.permute.xlu0 0
    %179 = vperm.xlu0 %178, %v30
    %v180 = vpop.permute.xlu0 %179
    %181 = vset.pattern.permute.xlu0 0
    %182 = vperm.xlu0 %181, %v31
    %v183 = vpop.permute.xlu0 %182
    %184 = vset.pattern.permute.xlu0 0
    %185 = vperm.xlu0 %184, %v32
    %v186 = vpop.permute.xlu0 %185
    %187 = vset.pattern.permute.xlu0 0
    %188 = vperm.xlu0 %187, %v33
    %v189 = vpop.permute.xlu0 %188
    %190 = vset.pattern.permute.xlu0 0
    %191 = vperm.xlu0 %190, %v34
    %v192 = vpop.permute.xlu0 %191
    %193 = vset.pattern.permute.xlu0 0
    %194 = vperm.xlu0 %193, %v35
    %v195 = vpop.permute.xlu0 %194
    %196 = vset.pattern.permute.xlu0 0
    %197 = vperm.xlu0 %196, %v36
    %v198 = vpop.permute.xlu0 %197
    %199 = vset.pattern.permute.xlu0 0
    %200 = vperm.xlu0 %199, %v37
    %v201 = vpop.permute.xlu0 %200
    %202 = vset.pattern.permute.xlu0 0
    %203 = vperm.xlu0 %202, %v38
    %v204 = vpop.permute.xlu0 %203
    %205 = vset.pattern.permute.xlu0 0
    %206 = vperm.xlu0 %205, %v39
    %v207 = vpop.permute.xlu0 %206
    %208 = vset.pattern.permute.xlu0 0
    %209 = vperm.xlu0 %208, %v40
    %v210 = vpop.permute.xlu0 %209
    %211 = vset.pattern.permute.xlu0 0
    %212 = vperm.xlu0 %211, %v41
    %v213 = vpop.permute.xlu0 %212
    %214 = vset.pattern.permute.xlu0 0
    %215 = vperm.xlu0 %214, %v42
    %v216 = vpop.permute.xlu0 %215
    %217 = vset.pattern.permute.xlu0 0
    %218 = vperm.xlu0 %217, %v43
    %v219 = vpop.permute.xlu0 %218
    %220 = vset.pattern.permute.xlu0 0
    %221 = vperm.xlu0 %220, %v44
    %v222 = vpop.permute.xlu0 %221
    %223 = vset.pattern.permute.xlu0 0
    %224 = vperm.xlu0 %223, %v45
    %v225 = vpop.permute.xlu0 %224
    %226 = vset.pattern.permute.xlu0 0
    %227 = vperm.xlu0 %226, %v46
    %v228 = vpop.permute.xlu0 %227
    %229 = vset.pattern.permute.xlu0 0
    %230 = vperm.xlu0 %229, %v47
    %v231 = vpop.permute.xlu0 %230
    %232 = vset.pattern.permute.xlu0 0
    %233 = vperm.xlu0 %232, %v48
    %v234 = vpop.permute.xlu0 %233
    %235 = vset.pattern.permute.xlu0 0
    %236 = vperm.xlu0 %235, %v49
    %v237 = vpop.permute.xlu0 %236
    %238 = vset.pattern.permute.xlu0 0
    %239 = vperm.xlu0 %238, %v50
    %v240 = vpop.permute.xlu0 %239
    %241 = vset.pattern.permute.xlu0 0
    %242 = vperm.xlu0 %241, %v51
    %v243 = vpop.permute.xlu0 %242
    %244 = vset.pattern.permute.xlu0 0
    %245 = vperm.xlu0 %244, %v52
    %v246 = vpop.permute.xlu0 %245
    %247 = vset.pattern.permute.xlu0 0
    %248 = vperm.xlu0 %247, %v53
    %v249 = vpop.permute.xlu0 %248
    %250 = vset.pattern.permute.xlu0 0
    %251 = vperm.xlu0 %250, %v54
    %v252 = vpop.permute.xlu0 %251
    %253 = vset.pattern.permute.xlu0 0
    %254 = vperm.xlu0 %253, %v55
    %v255 = vpop.permute.xlu0 %254
    %256 = vset.pattern.permute.xlu0 0
    %257 = vperm.xlu0 %256, %v56
    %v258 = vpop.permute.xlu0 %257
    %259 = vset.pattern.permute.xlu0 0
    %260 = vperm.xlu0 %259, %v57
    %v261 = vpop.permute.xlu0 %260
    %262 = vset.pattern.permute.xlu0 0
    %263 = vperm.xlu0 %262, %v58
    %v264 = vpop.permute.xlu0 %263
    %265 = vset.pattern.permute.xlu0 0
    %266 = vperm.xlu0 %265, %v59
    %v267 = vpop.permute.xlu0 %266
    %268 = vset.pattern.permute.xlu0 0
    %269 = vperm.xlu0 %268, %v60
    %v270 = vpop.permute.xlu0 %269
    %271 = vset.pattern.permute.xlu0 0
    %272 = vperm.xlu0 %271, %v61
    %v273 = vpop.permute.xlu0 %272
    %274 = vset.pattern.permute.xlu0 0
    %275 = vperm.xlu0 %274, %v62
    %v276 = vpop.permute.xlu0 %275
    %277 = vset.pattern.permute.xlu0 0
    %278 = vperm.xlu0 %277, %v63
    %v279 = vpop.permute.xlu0 %278
    %280 = vset.pattern.permute.xlu0 0
    %281 = vperm.xlu0 %280, %v64
    %v282 = vpop.permute.xlu0 %281
    %283 = vset.pattern.permute.xlu0 0
    %284 = vperm.xlu0 %283, %v65
    %v285 = vpop.permute.xlu0 %284
    %286 = vset.pattern.permute.xlu0 0
    %287 = vperm.xlu0 %286, %v66
    %v288 = vpop.permute.xlu0 %287
    %289 = vset.pattern.permute.xlu0 0
    %290 = vperm.xlu0 %289, %v67
    %v291 = vpop.permute.xlu0 %290
    %292 = vset.pattern.permute.xlu0 0
    %293 = vperm.xlu0 %292, %v68
    %v294 = vpop.permute.xlu0 %293
    %295 = vset.pattern.permute.xlu0 0
    %296 = vperm.xlu0 %295, %v69
    %v297 = vpop.permute.xlu0 %296
    %298 = vset.pattern.permute.xlu0 0
    %299 = vperm.xlu0 %298, %v70
    %v300 = vpop.permute.xlu0 %299
    %301 = vset.pattern.permute.xlu0 0
    %302 = vperm.xlu0 %301, %v71
    %v303 = vpop.permute.xlu0 %302
    %304 = vset.pattern.permute.xlu0 0
    %305 = vperm.xlu0 %304, %v72
    %v306 = vpop.permute.xlu0 %305
    %307 = vset.pattern.permute.xlu0 0
    %308 = vperm.xlu0 %307, %v73
    %v309 = vpop.permute.xlu0 %308
    %310 = vset.pattern.permute.xlu0 0
    %311 = vperm.xlu0 %310, %v74
    %v312 = vpop.permute.xlu0 %311
    %313 = vset.pattern.permute.xlu0 0
    %314 = vperm.xlu0 %313, %v75
    %v315 = vpop.permute.xlu0 %314
    %316 = vset.pattern.permute.xlu0 0
    %317 = vperm.xlu0 %316, %v76
    %v318 = vpop.permute.xlu0 %317
    %319 = vset.pattern.permute.xlu0 0
    %320 = vperm.xlu0 %319, %v77
    %v321 = vpop.permute.xlu0 %320
    %322 = vset.pattern.permute.xlu0 0
    %323 = vperm.xlu0 %322, %v78
    %v324 = vpop.permute.xlu0 %323
    %325 = vset.pattern.permute.xlu0 0
    %326 = vperm.xlu0 %325, %v79
    %v327 = vpop.permute.xlu0 %326
    %328 = vset.pattern.permute.xlu0 0
    %329 = vperm.xlu0 %328, %v80
    %v330 = vpop.permute.xlu0 %329
    %331 = vset.pattern.permute.xlu0 0
    %332 = vperm.xlu0 %331, %v81
    %v333 = vpop.permute.xlu0 %332
    %334 = vset.pattern.permute.xlu0 0
    %335 = vperm.xlu0 %334, %v82
    %v336 = vpop.permute.xlu0 %335
    %337 = vset.pattern.permute.xlu0 0
    %338 = vperm.xlu0 %337, %v83
    %v339 = vpop.permute.xlu0 %338
    %340 = vset.pattern.permute.xlu0 0
    %341 = vperm.xlu0 %340, %v84
    %v342 = vpop.permute.xlu0 %341
    %343 = vset.pattern.permute.xlu0 0
    %344 = vperm.xlu0 %343, %v85
    %v345 = vpop.permute.xlu0 %344
    %346 = vset.pattern.permute.xlu0 0
    %347 = vperm.xlu0 %346, %v86
    %v348 = vpop.permute.xlu0 %347
    %349 = vset.pattern.permute.xlu0 0
    %350 = vperm.xlu0 %349, %v87
    %v351 = vpop.permute.xlu0 %350
    %352 = vset.pattern.permute.xlu0 0
    %353 = vperm.xlu0 %352, %v88
    %v354 = vpop.permute.xlu0 %353
    %355 = vset.pattern.permute.xlu0 0
    %356 = vperm.xlu0 %355, %v89
    %v357 = vpop.permute.xlu0 %356
    %358 = vset.pattern.permute.xlu0 0
    %359 = vperm.xlu0 %358, %v90
    %v360 = vpop.permute.xlu0 %359
    %361 = vset.pattern.permute.xlu0 0
    %362 = vperm.xlu0 %361, %v91
    %v363 = vpop.permute.xlu0 %362
    %364 = vset.pattern.permute.xlu0 0
    %365 = vperm.xlu0 %364, %v92
    %v366 = vpop.permute.xlu0 %365
    %367 = vset.pattern.permute.xlu0 0
    %368 = vperm.xlu0 %367, %v93
    %v369 = vpop.permute.xlu0 %368
    %370 = vset.pattern.permute.xlu0 0
    %371 = vperm.xlu0 %370, %v94
    %v372 = vpop.permute.xlu0 %371
    %373 = vset.pattern.permute.xlu0 0
    %374 = vperm.xlu0 %373, %v95
    %v375 = vpop.permute.xlu0 %374
    %376 = vset.pattern.permute.xlu0 0
    %377 = vperm.xlu0 %376, %v96
    %v378 = vpop.permute.xlu0 %377
    %379 = vset.pattern.permute.xlu0 0
    %380 = vperm.xlu0 %379, %v97
    %v381 = vpop.permute.xlu0 %380
    %382 = vset.pattern.permute.xlu0 0
    %383 = vperm.xlu0 %382, %v98
    %v384 = vpop.permute.xlu0 %383
    %385 = vset.pattern.permute.xlu0 0
    %386 = vperm.xlu0 %385, %v99
    %v387 = vpop.permute.xlu0 %386
    %388 = vset.pattern.permute.xlu0 0
    %389 = vperm.xlu0 %388, %v100
    %v390 = vpop.permute.xlu0 %389
    %391 = vset.pattern.permute.xlu0 0
    %392 = vperm.xlu0 %391, %v101
    %v393 = vpop.permute.xlu0 %392
    %394 = vset.pattern.permute.xlu0 0
    %395 = vperm.xlu0 %394, %v102
    %v396 = vpop.permute.xlu0 %395
    %397 = vset.pattern.permute.xlu0 0
    %398 = vperm.xlu0 %397, %v103
    %v399 = vpop.permute.xlu0 %398
    %400 = vset.pattern.permute.xlu0 0
    %401 = vperm.xlu0 %400, %v104
    %v402 = vpop.permute.xlu0 %401
    %403 = vset.pattern.permute.xlu0 0
    %404 = vperm.xlu0 %403, %v105
    %v405 = vpop.permute.xlu0 %404
    %406 = vset.pattern.permute.xlu0 0
    %407 = vperm.xlu0 %406, %v106
    %v408 = vpop.permute.xlu0 %407
    %409 = vset.pattern.permute.xlu0 0
    %410 = vperm.xlu0 %409, %v107
    %v411 = vpop.permute.xlu0 %410
    %412 = vset.pattern.permute.xlu0 0
    %413 = vperm.xlu0 %412, %v108
    %v414 = vpop.permute.xlu0 %413
    %415 = vset.pattern.permute.xlu0 0
    %416 = vperm.xlu0 %415, %v109
    %v417 = vpop.permute.xlu0 %416
    %418 = vset.pattern.permute.xlu0 0
    %419 = vperm.xlu0 %418, %v110
    %v420 = vpop.permute.xlu0 %419
    %421 = vset.pattern.permute.xlu0 0
    %422 = vperm.xlu0 %421, %v111
    %v423 = vpop.permute.xlu0 %422
    %424 = vset.pattern.permute.xlu0 0
    %425 = vperm.xlu0 %424, %v112
    %v426 = vpop.permute.xlu0 %425
    %427 = vset.pattern.permute.xlu0 0
    %428 = vperm.xlu0 %427, %v113
    %v429 = vpop.permute.xlu0 %428
    %430 = vset.pattern.permute.xlu0 0
    %431 = vperm.xlu0 %430, %v114
    %v432 = vpop.permute.xlu0 %431
    %433 = vset.pattern.permute.xlu0 0
    %434 = vperm.xlu0 %433, %v115
    %v435 = vpop.permute.xlu0 %434
    %436 = vset.pattern.permute.xlu0 0
    %437 = vperm.xlu0 %436, %v116
    %v438 = vpop.permute.xlu0 %437
    %439 = vset.pattern.permute.xlu0 0
    %440 = vperm.xlu0 %439, %v117
    %v441 = vpop.permute.xlu0 %440
    %442 = vset.pattern.permute.xlu0 0
    %443 = vperm.xlu0 %442, %v118
    %v444 = vpop.permute.xlu0 %443
    %445 = vset.pattern.permute.xlu0 0
    %446 = vperm.xlu0 %445, %v119
    %v447 = vpop.permute.xlu0 %446
    %448 = vset.pattern.permute.xlu0 0
    %449 = vperm.xlu0 %448, %v120
    %v450 = vpop.permute.xlu0 %449
    %451 = vset.pattern.permute.xlu0 0
    %452 = vperm.xlu0 %451, %v121
    %v453 = vpop.permute.xlu0 %452
    %454 = vset.pattern.permute.xlu0 0
    %455 = vperm.xlu0 %454, %v122
    %v456 = vpop.permute.xlu0 %455
    %457 = vset.pattern.permute.xlu0 0
    %458 = vperm.xlu0 %457, %v123
    %v459 = vpop.permute.xlu0 %458
    %460 = vset.pattern.permute.xlu0 0
    %461 = vperm.xlu0 %460, %v124
    %v462 = vpop.permute.xlu0 %461
    %463 = vset.pattern.permute.xlu0 0
    %464 = vperm.xlu0 %463, %v125
    %v465 = vpop.permute.xlu0 %464
    %466 = vset.pattern.permute.xlu0 0
    %467 = vperm.xlu0 %466, %v126
    %v468 = vpop.permute.xlu0 %467
    %469 = vset.pattern.permute.xlu0 0
    %470 = vperm.xlu0 %469, %v127
    %v471 = vpop.permute.xlu0 %470
    %472 = vset.pattern.permute.xlu0 0
    %473 = vperm.xlu0 %472, %v128
    %v474 = vpop.permute.xlu0 %473
    %475 = vset.pattern.permute.xlu0 0
    %476 = vperm.xlu0 %475, %v129
    %v477 = vpop.permute.xlu0 %476
    %478 = vset.pattern.permute.xlu0 0
    %479 = vperm.xlu0 %478, %v130
    %v480 = vpop.permute.xlu0 %479
    %481 = vset.pattern.permute.xlu0 0
    %482 = vperm.xlu0 %481, %v131
    %v483 = vpop.permute.xlu0 %482
    %484 = vset.pattern.permute.xlu0 0
    %485 = vperm.xlu0 %484, %v132
    %v486 = vpop.permute.xlu0 %485
    %487 = vset.pattern.permute.xlu0 0
    %488 = vperm.xlu0 %487, %v133
    %v489 = vpop.permute.xlu0 %488
    %490 = vset.pattern.permute.xlu0 0
    %491 = vperm.xlu0 %490, %v134
    %v492 = vpop.permute.xlu0 %491
    %493 = vset.pattern.permute.xlu0 0
    %494 = vperm.xlu0 %493, %v135
    %v495 = vpop.permute.xlu0 %494
    %496 = vset.pattern.permute.xlu0 0
    %497 = vperm.xlu0 %496, %v136
    %v498 = vpop.permute.xlu0 %497
    %499 = vset.pattern.permute.xlu0 0
    %500 = vperm.xlu0 %499, %v137
    %v501 = vpop.permute.xlu0 %500
    %502 = vset.pattern.permute.xlu0 0
    %503 = vperm.xlu0 %502, %v138
    %v504 = vpop.permute.xlu0 %503
    %505 = vset.pattern.permute.xlu0 0
    %506 = vperm.xlu0 %505, %v139
    %v507 = vpop.permute.xlu0 %506
    %508 = vset.pattern.permute.xlu0 0
    %509 = vperm.xlu0 %508, %v140
    %v510 = vpop.permute.xlu0 %509
    %511 = vset.pattern.permute.xlu0 0
    %512 = vperm.xlu0 %511, %v141
    %v513 = vpop.permute.xlu0 %512
    %514 = vset.pattern.permute.xlu0 0
    %515 = vperm.xlu0 %514, %v142
    %v516 = vpop.permute.xlu0 %515
    %517 = vset.pattern.permute.xlu0 0
    %518 = vperm.xlu0 %517, %v143
    %v519 = vpop.permute.xlu0 %518
    %520 = vset.pattern.permute.xlu0 0
    %521 = vperm.xlu0 %520, %v144
    %v522 = vpop.permute.xlu0 %521
    %523 = vset.pattern.permute.xlu0 0
    %524 = vperm.xlu0 %523, %v145
    %v525 = vpop.permute.xlu0 %524
    %526 = vset.pattern.permute.xlu0 0
    %527 = vperm.xlu0 %526, %v146
    %v528 = vpop.permute.xlu0 %527
    %529 = vset.pattern.permute.xlu0 0
    %530 = vperm.xlu0 %529, %v147
    %v531 = vpop.permute.xlu0 %530
    %532 = vset.pattern.permute.xlu0 0
    %533 = vperm.xlu0 %532, %v148
    %v534 = vpop.permute.xlu0 %533
    %vm535 = vcmp.eq.s32.totalorder %v150, %v153
    %vm536 = vcmp.eq.s32.totalorder %v150, %v156
    %vm537 = vcmp.eq.s32.totalorder %v150, %v159
    %vm538 = vcmp.eq.s32.totalorder %v150, %v162
    %vm539 = vcmp.eq.s32.totalorder %v150, %v165
    %vm540 = vcmp.eq.s32.totalorder %v150, %v168
    %vm541 = vcmp.eq.s32.totalorder %v150, %v171
    %vm542 = vcmp.eq.s32.totalorder %v150, %v174
    %vm543 = vcmp.eq.s32.totalorder %v150, %v177
    %vm544 = vcmp.eq.s32.totalorder %v150, %v180
    %vm545 = vcmp.eq.s32.totalorder %v150, %v183
    %vm546 = vcmp.eq.s32.totalorder %v150, %v186
    %vm547 = vcmp.eq.s32.totalorder %v150, %v189
    %vm548 = vcmp.eq.s32.totalorder %v150, %v192
    %vm549 = vcmp.eq.s32.totalorder %v150, %v195
    %vm550 = vcmp.eq.s32.totalorder %v150, %v198
    %vm551 = vcmp.eq.s32.totalorder %v150, %v201
    %vm552 = vcmp.eq.s32.totalorder %v150, %v204
    %vm553 = vcmp.eq.s32.totalorder %v150, %v207
    %vm554 = vcmp.eq.s32.totalorder %v150, %v210
    %vm555 = vcmp.eq.s32.totalorder %v150, %v213
    %vm556 = vcmp.eq.s32.totalorder %v150, %v216
    %vm557 = vcmp.eq.s32.totalorder %v150, %v219
    %vm558 = vcmp.eq.s32.totalorder %v150, %v222
    %vm559 = vcmp.eq.s32.totalorder %v150, %v225
    %vm560 = vcmp.eq.s32.totalorder %v150, %v228
    %vm561 = vcmp.eq.s32.totalorder %v150, %v231
    %vm562 = vcmp.eq.s32.totalorder %v150, %v234
    %vm563 = vcmp.eq.s32.totalorder %v150, %v237
    %vm564 = vcmp.eq.s32.totalorder %v150, %v240
    %vm565 = vcmp.eq.s32.totalorder %v150, %v243
    %vm566 = vcmp.eq.s32.totalorder %v150, %v246
    %vm567 = vcmp.eq.s32.totalorder %v150, %v249
    %vm568 = vcmp.eq.s32.totalorder %v150, %v252
    %vm569 = vcmp.eq.s32.totalorder %v150, %v255
    %vm570 = vcmp.eq.s32.totalorder %v150, %v258
    %vm571 = vcmp.eq.s32.totalorder %v150, %v261
    %vm572 = vcmp.eq.s32.totalorder %v150, %v264
    %vm573 = vcmp.eq.s32.totalorder %v150, %v267
    %vm574 = vcmp.eq.s32.totalorder %v150, %v270
    %vm575 = vcmp.eq.s32.totalorder %v150, %v273
    %vm576 = vcmp.eq.s32.totalorder %v150, %v276
    %vm577 = vcmp.eq.s32.totalorder %v150, %v279
    %vm578 = vcmp.eq.s32.totalorder %v150, %v282
    %vm579 = vcmp.eq.s32.totalorder %v150, %v285
    %vm580 = vcmp.eq.s32.totalorder %v150, %v288
    %vm581 = vcmp.eq.s32.totalorder %v150, %v291
    %vm582 = vcmp.eq.s32.totalorder %v150, %v294
    %vm583 = vcmp.eq.s32.totalorder %v150, %v297
    %vm584 = vcmp.eq.s32.totalorder %v150, %v300
    %vm585 = vcmp.eq.s32.totalorder %v150, %v303
    %vm586 = vcmp.eq.s32.totalorder %v150, %v306
    %vm587 = vcmp.eq.s32.totalorder %v150, %v309
    %vm588 = vcmp.eq.s32.totalorder %v150, %v312
    %vm589 = vcmp.eq.s32.totalorder %v150, %v315
    %vm590 = vcmp.eq.s32.totalorder %v150, %v318
    %vm591 = vcmp.eq.s32.totalorder %v150, %v321
    %vm592 = vcmp.eq.s32.totalorder %v150, %v324
    %vm593 = vcmp.eq.s32.totalorder %v150, %v327
    %vm594 = vcmp.eq.s32.totalorder %v150, %v330
    %vm595 = vcmp.eq.s32.totalorder %v150, %v333
    %vm596 = vcmp.eq.s32.totalorder %v150, %v336
    %vm597 = vcmp.eq.s32.totalorder %v150, %v339
    %vm598 = vcmp.eq.s32.totalorder %v150, %v342
    %vm599 = vcmp.eq.s32.totalorder %v150, %v345
    %vm600 = vcmp.eq.s32.totalorder %v150, %v348
    %vm601 = vcmp.eq.s32.totalorder %v150, %v351
    %vm602 = vcmp.eq.s32.totalorder %v150, %v354
    %vm603 = vcmp.eq.s32.totalorder %v150, %v357
    %vm604 = vcmp.eq.s32.totalorder %v150, %v360
    %vm605 = vcmp.eq.s32.totalorder %v150, %v363
    %vm606 = vcmp.eq.s32.totalorder %v150, %v366
    %vm607 = vcmp.eq.s32.totalorder %v150, %v369
    %vm608 = vcmp.eq.s32.totalorder %v150, %v372
    %vm609 = vcmp.eq.s32.totalorder %v150, %v375
    %vm610 = vcmp.eq.s32.totalorder %v150, %v378
    %vm611 = vcmp.eq.s32.totalorder %v150, %v381
    %vm612 = vcmp.eq.s32.totalorder %v150, %v384
    %vm613 = vcmp.eq.s32.totalorder %v150, %v387
    %vm614 = vcmp.eq.s32.totalorder %v150, %v390
    %vm615 = vcmp.eq.s32.totalorder %v150, %v393
    %vm616 = vcmp.eq.s32.totalorder %v150, %v396
    %vm617 = vcmp.eq.s32.totalorder %v150, %v399
    %vm618 = vcmp.eq.s32.totalorder %v150, %v402
    %vm619 = vcmp.eq.s32.totalorder %v150, %v405
    %vm620 = vcmp.eq.s32.totalorder %v150, %v408
    %vm621 = vcmp.eq.s32.totalorder %v150, %v411
    %vm622 = vcmp.eq.s32.totalorder %v150, %v414
    %vm623 = vcmp.eq.s32.totalorder %v150, %v417
    %vm624 = vcmp.eq.s32.totalorder %v150, %v420
    %vm625 = vcmp.eq.s32.totalorder %v150, %v423
    %vm626 = vcmp.eq.s32.totalorder %v150, %v426
    %vm627 = vcmp.eq.s32.totalorder %v150, %v429
    %vm628 = vcmp.eq.s32.totalorder %v150, %v432
    %vm629 = vcmp.eq.s32.totalorder %v150, %v435
    %vm630 = vcmp.eq.s32.totalorder %v150, %v438
    %vm631 = vcmp.eq.s32.totalorder %v150, %v441
    %vm632 = vcmp.eq.s32.totalorder %v150, %v444
    %vm633 = vcmp.eq.s32.totalorder %v150, %v447
    %vm634 = vcmp.eq.s32.totalorder %v150, %v450
    %vm635 = vcmp.eq.s32.totalorder %v150, %v453
    %vm636 = vcmp.eq.s32.totalorder %v150, %v456
    %vm637 = vcmp.eq.s32.totalorder %v150, %v459
    %vm638 = vcmp.eq.s32.totalorder %v150, %v462
    %vm639 = vcmp.eq.s32.totalorder %v150, %v465
    %vm640 = vcmp.eq.s32.totalorder %v150, %v468
    %vm641 = vcmp.eq.s32.totalorder %v150, %v471
    %vm642 = vcmp.eq.s32.totalorder %v150, %v474
    %vm643 = vcmp.eq.s32.totalorder %v150, %v477
    %vm644 = vcmp.eq.s32.totalorder %v150, %v480
    %vm645 = vcmp.eq.s32.totalorder %v150, %v483
    %vm646 = vcmp.eq.s32.totalorder %v150, %v486
    %vm647 = vcmp.eq.s32.totalorder %v150, %v489
    %vm648 = vcmp.eq.s32.totalorder %v150, %v492
    %vm649 = vcmp.eq.s32.totalorder %v150, %v495
    %vm650 = vcmp.eq.s32.totalorder %v150, %v498
    %vm651 = vcmp.eq.s32.totalorder %v150, %v501
    %vm652 = vcmp.eq.s32.totalorder %v150, %v504
    %vm653 = vcmp.eq.s32.totalorder %v150, %v507
    %vm654 = vcmp.eq.s32.totalorder %v150, %v510
    %vm655 = vcmp.eq.s32.totalorder %v150, %v513
    %vm656 = vcmp.eq.s32.totalorder %v150, %v516
    %vm657 = vcmp.eq.s32.totalorder %v150, %v519
    %vm658 = vcmp.eq.s32.totalorder %v150, %v522
    %vm659 = vcmp.eq.s32.totalorder %v150, %v525
    %vm660 = vcmp.eq.s32.totalorder %v150, %v528
    %vm661 = vcmp.eq.s32.totalorder %v150, %v531
    %vm662 = vcmp.eq.s32.totalorder %v150, %v534
    %v663 = vsel %vm535, 1, 0
    %v664 = vsel %vm536, 1, 0
    %v665 = vsel %vm537, 1, 0
    %v666 = vsel %vm538, 1, 0
    %v667 = vsel %vm539, 1, 0
    %v668 = vsel %vm540, 1, 0
    %v669 = vsel %vm541, 1, 0
    %v670 = vsel %vm542, 1, 0
    %v671 = vsel %vm543, 1, 0
    %v672 = vsel %vm544, 1, 0
    %v673 = vsel %vm545, 1, 0
    %v674 = vsel %vm546, 1, 0
    %v675 = vsel %vm547, 1, 0
    %v676 = vsel %vm548, 1, 0
    %v677 = vsel %vm549, 1, 0
    %v678 = vsel %vm550, 1, 0
    %v679 = vsel %vm551, 1, 0
    %v680 = vsel %vm552, 1, 0
    %v681 = vsel %vm553, 1, 0
    %v682 = vsel %vm554, 1, 0
    %v683 = vsel %vm555, 1, 0
    %v684 = vsel %vm556, 1, 0
    %v685 = vsel %vm557, 1, 0
    %v686 = vsel %vm558, 1, 0
    %v687 = vsel %vm559, 1, 0
    %v688 = vsel %vm560, 1, 0
    %v689 = vsel %vm561, 1, 0
    %v690 = vsel %vm562, 1, 0
    %v691 = vsel %vm563, 1, 0
    %v692 = vsel %vm564, 1, 0
    %v693 = vsel %vm565, 1, 0
    %v694 = vsel %vm566, 1, 0
    %v695 = vsel %vm567, 1, 0
    %v696 = vsel %vm568, 1, 0
    %v697 = vsel %vm569, 1, 0
    %v698 = vsel %vm570, 1, 0
    %v699 = vsel %vm571, 1, 0
    %v700 = vsel %vm572, 1, 0
    %v701 = vsel %vm573, 1, 0
    %v702 = vsel %vm574, 1, 0
    %v703 = vsel %vm575, 1, 0
    %v704 = vsel %vm576, 1, 0
    %v705 = vsel %vm577, 1, 0
    %v706 = vsel %vm578, 1, 0
    %v707 = vsel %vm579, 1, 0
    %v708 = vsel %vm580, 1, 0
    %v709 = vsel %vm581, 1, 0
    %v710 = vsel %vm582, 1, 0
    %v711 = vsel %vm583, 1, 0
    %v712 = vsel %vm584, 1, 0
    %v713 = vsel %vm585, 1, 0
    %v714 = vsel %vm586, 1, 0
    %v715 = vsel %vm587, 1, 0
    %v716 = vsel %vm588, 1, 0
    %v717 = vsel %vm589, 1, 0
    %v718 = vsel %vm590, 1, 0
    %v719 = vsel %vm591, 1, 0
    %v720 = vsel %vm592, 1, 0
    %v721 = vsel %vm593, 1, 0
    %v722 = vsel %vm594, 1, 0
    %v723 = vsel %vm595, 1, 0
    %v724 = vsel %vm596, 1, 0
    %v725 = vsel %vm597, 1, 0
    %v726 = vsel %vm598, 1, 0
    %v727 = vsel %vm599, 1, 0
    %v728 = vsel %vm600, 1, 0
    %v729 = vsel %vm601, 1, 0
    %v730 = vsel %vm602, 1, 0
    %v731 = vsel %vm603, 1, 0
    %v732 = vsel %vm604, 1, 0
    %v733 = vsel %vm605, 1, 0
    %v734 = vsel %vm606, 1, 0
    %v735 = vsel %vm607, 1, 0
    %v736 = vsel %vm608, 1, 0
    %v737 = vsel %vm609, 1, 0
    %v738 = vsel %vm610, 1, 0
    %v739 = vsel %vm611, 1, 0
    %v740 = vsel %vm612, 1, 0
    %v741 = vsel %vm613, 1, 0
    %v742 = vsel %vm614, 1, 0
    %v743 = vsel %vm615, 1, 0
    %v744 = vsel %vm616, 1, 0
    %v745 = vsel %vm617, 1, 0
    %v746 = vsel %vm618, 1, 0
    %v747 = vsel %vm619, 1, 0
    %v748 = vsel %vm620, 1, 0
    %v749 = vsel %vm621, 1, 0
    %v750 = vsel %vm622, 1, 0
    %v751 = vsel %vm623, 1, 0
    %v752 = vsel %vm624, 1, 0
    %v753 = vsel %vm625, 1, 0
    %v754 = vsel %vm626, 1, 0
    %v755 = vsel %vm627, 1, 0
    %v756 = vsel %vm628, 1, 0
    %v757 = vsel %vm629, 1, 0
    %v758 = vsel %vm630, 1, 0
    %v759 = vsel %vm631, 1, 0
    %v760 = vsel %vm632, 1, 0
    %v761 = vsel %vm633, 1, 0
    %v762 = vsel %vm634, 1, 0
    %v763 = vsel %vm635, 1, 0
    %v764 = vsel %vm636, 1, 0
    %v765 = vsel %vm637, 1, 0
    %v766 = vsel %vm638, 1, 0
    %v767 = vsel %vm639, 1, 0
    %v768 = vsel %vm640, 1, 0
    %v769 = vsel %vm641, 1, 0
    %v770 = vsel %vm642, 1, 0
    %v771 = vsel %vm643, 1, 0
    %v772 = vsel %vm644, 1, 0
    %v773 = vsel %vm645, 1, 0
    %v774 = vsel %vm646, 1, 0
    %v775 = vsel %vm647, 1, 0
    %v776 = vsel %vm648, 1, 0
    %v777 = vsel %vm649, 1, 0
    %v778 = vsel %vm650, 1, 0
    %v779 = vsel %vm651, 1, 0
    %v780 = vsel %vm652, 1, 0
    %v781 = vsel %vm653, 1, 0
    %v782 = vsel %vm654, 1, 0
    %v783 = vsel %vm655, 1, 0
    %v784 = vsel %vm656, 1, 0
    %v785 = vsel %vm657, 1, 0
    %v786 = vsel %vm658, 1, 0
    %v787 = vsel %vm659, 1, 0
    %v788 = vsel %vm660, 1, 0
    %v789 = vsel %vm661, 1, 0
    %v790 = vsel %vm662, 1, 0
    %v791 = vcvt.s32.f32 %v663
    %v792 = vcvt.s32.f32 %v664
    %v793 = vcvt.s32.f32 %v665
    %v794 = vcvt.s32.f32 %v666
    %v795 = vcvt.s32.f32 %v667
    %v796 = vcvt.s32.f32 %v668
    %v797 = vcvt.s32.f32 %v669
    %v798 = vcvt.s32.f32 %v670
    %v799 = vcvt.s32.f32 %v671
    %v800 = vcvt.s32.f32 %v672
    %v801 = vcvt.s32.f32 %v673
    %v802 = vcvt.s32.f32 %v674
    %v803 = vcvt.s32.f32 %v675
    %v804 = vcvt.s32.f32 %v676
    %v805 = vcvt.s32.f32 %v677
    %v806 = vcvt.s32.f32 %v678
    %v807 = vcvt.s32.f32 %v679
    %v808 = vcvt.s32.f32 %v680
    %v809 = vcvt.s32.f32 %v681
    %v810 = vcvt.s32.f32 %v682
    %v811 = vcvt.s32.f32 %v683
    %v812 = vcvt.s32.f32 %v684
    %v813 = vcvt.s32.f32 %v685
    %v814 = vcvt.s32.f32 %v686
    %v815 = vcvt.s32.f32 %v687
    %v816 = vcvt.s32.f32 %v688
    %v817 = vcvt.s32.f32 %v689
    %v818 = vcvt.s32.f32 %v690
    %v819 = vcvt.s32.f32 %v691
    %v820 = vcvt.s32.f32 %v692
    %v821 = vcvt.s32.f32 %v693
    %v822 = vcvt.s32.f32 %v694
    %v823 = vcvt.s32.f32 %v695
    %v824 = vcvt.s32.f32 %v696
    %v825 = vcvt.s32.f32 %v697
    %v826 = vcvt.s32.f32 %v698
    %v827 = vcvt.s32.f32 %v699
    %v828 = vcvt.s32.f32 %v700
    %v829 = vcvt.s32.f32 %v701
    %v830 = vcvt.s32.f32 %v702
    %v831 = vcvt.s32.f32 %v703
    %v832 = vcvt.s32.f32 %v704
    %v833 = vcvt.s32.f32 %v705
    %v834 = vcvt.s32.f32 %v706
    %v835 = vcvt.s32.f32 %v707
    %v836 = vcvt.s32.f32 %v708
    %v837 = vcvt.s32.f32 %v709
    %v838 = vcvt.s32.f32 %v710
    %v839 = vcvt.s32.f32 %v711
    %v840 = vcvt.s32.f32 %v712
    %v841 = vcvt.s32.f32 %v713
    %v842 = vcvt.s32.f32 %v714
    %v843 = vcvt.s32.f32 %v715
    %v844 = vcvt.s32.f32 %v716
    %v845 = vcvt.s32.f32 %v717
    %v846 = vcvt.s32.f32 %v718
    %v847 = vcvt.s32.f32 %v719
    %v848 = vcvt.s32.f32 %v720
    %v849 = vcvt.s32.f32 %v721
    %v850 = vcvt.s32.f32 %v722
    %v851 = vcvt.s32.f32 %v723
    %v852 = vcvt.s32.f32 %v724
    %v853 = vcvt.s32.f32 %v725
    %v854 = vcvt.s32.f32 %v726
    %v855 = vcvt.s32.f32 %v727
    %v856 = vcvt.s32.f32 %v728
    %v857 = vcvt.s32.f32 %v729
    %v858 = vcvt.s32.f32 %v730
    %v859 = vcvt.s32.f32 %v731
    %v860 = vcvt.s32.f32 %v732
    %v861 = vcvt.s32.f32 %v733
    %v862 = vcvt.s32.f32 %v734
    %v863 = vcvt.s32.f32 %v735
    %v864 = vcvt.s32.f32 %v736
    %v865 = vcvt.s32.f32 %v737
    %v866 = vcvt.s32.f32 %v738
    %v867 = vcvt.s32.f32 %v739
    %v868 = vcvt.s32.f32 %v740
    %v869 = vcvt.s32.f32 %v741
    %v870 = vcvt.s32.f32 %v742
    %v871 = vcvt.s32.f32 %v743
    %v872 = vcvt.s32.f32 %v744
    %v873 = vcvt.s32.f32 %v745
    %v874 = vcvt.s32.f32 %v746
    %v875 = vcvt.s32.f32 %v747
    %v876 = vcvt.s32.f32 %v748
    %v877 = vcvt.s32.f32 %v749
    %v878 = vcvt.s32.f32 %v750
    %v879 = vcvt.s32.f32 %v751
    %v880 = vcvt.s32.f32 %v752
    %v881 = vcvt.s32.f32 %v753
    %v882 = vcvt.s32.f32 %v754
    %v883 = vcvt.s32.f32 %v755
    %v884 = vcvt.s32.f32 %v756
    %v885 = vcvt.s32.f32 %v757
    %v886 = vcvt.s32.f32 %v758
    %v887 = vcvt.s32.f32 %v759
    %v888 = vcvt.s32.f32 %v760
    %v889 = vcvt.s32.f32 %v761
    %v890 = vcvt.s32.f32 %v762
    %v891 = vcvt.s32.f32 %v763
    %v892 = vcvt.s32.f32 %v764
    %v893 = vcvt.s32.f32 %v765
    %v894 = vcvt.s32.f32 %v766
    %v895 = vcvt.s32.f32 %v767
    %v896 = vcvt.s32.f32 %v768
    %v897 = vcvt.s32.f32 %v769
    %v898 = vcvt.s32.f32 %v770
    %v899 = vcvt.s32.f32 %v771
    %v900 = vcvt.s32.f32 %v772
    %v901 = vcvt.s32.f32 %v773
    %v902 = vcvt.s32.f32 %v774
    %v903 = vcvt.s32.f32 %v775
    %v904 = vcvt.s32.f32 %v776
    %v905 = vcvt.s32.f32 %v777
    %v906 = vcvt.s32.f32 %v778
    %v907 = vcvt.s32.f32 %v779
    %v908 = vcvt.s32.f32 %v780
    %v909 = vcvt.s32.f32 %v781
    %v910 = vcvt.s32.f32 %v782
    %v911 = vcvt.s32.f32 %v783
    %v912 = vcvt.s32.f32 %v784
    %v913 = vcvt.s32.f32 %v785
    %v914 = vcvt.s32.f32 %v786
    %v915 = vcvt.s32.f32 %v787
    %v916 = vcvt.s32.f32 %v788
    %v917 = vcvt.s32.f32 %v789
    %v918 = vcvt.s32.f32 %v790
    %v919 = vpack.c.bf16 %v792, %v791
    %v920 = vpack.c.bf16 %v794, %v793
    %v921 = vpack.c.bf16 %v796, %v795
    %v922 = vpack.c.bf16 %v798, %v797
    %v923 = vpack.c.bf16 %v800, %v799
    %v924 = vpack.c.bf16 %v802, %v801
    %v925 = vpack.c.bf16 %v804, %v803
    %v926 = vpack.c.bf16 %v806, %v805
    %v927 = vpack.c.bf16 %v808, %v807
    %v928 = vpack.c.bf16 %v810, %v809
    %v929 = vpack.c.bf16 %v812, %v811
    %v930 = vpack.c.bf16 %v814, %v813
    %v931 = vpack.c.bf16 %v816, %v815
    %v932 = vpack.c.bf16 %v818, %v817
    %v933 = vpack.c.bf16 %v820, %v819
    %v934 = vpack.c.bf16 %v822, %v821
    %v935 = vpack.c.bf16 %v824, %v823
    %v936 = vpack.c.bf16 %v826, %v825
    %v937 = vpack.c.bf16 %v828, %v827
    %v938 = vpack.c.bf16 %v830, %v829
    %v939 = vpack.c.bf16 %v832, %v831
    %v940 = vpack.c.bf16 %v834, %v833
    %v941 = vpack.c.bf16 %v836, %v835
    %v942 = vpack.c.bf16 %v838, %v837
    %v943 = vpack.c.bf16 %v840, %v839
    %v944 = vpack.c.bf16 %v842, %v841
    %v945 = vpack.c.bf16 %v844, %v843
    %v946 = vpack.c.bf16 %v846, %v845
    %v947 = vpack.c.bf16 %v848, %v847
    %v948 = vpack.c.bf16 %v850, %v849
    %v949 = vpack.c.bf16 %v852, %v851
    %v950 = vpack.c.bf16 %v854, %v853
    %v951 = vpack.c.bf16 %v856, %v855
    %v952 = vpack.c.bf16 %v858, %v857
    %v953 = vpack.c.bf16 %v860, %v859
    %v954 = vpack.c.bf16 %v862, %v861
    %v955 = vpack.c.bf16 %v864, %v863
    %v956 = vpack.c.bf16 %v866, %v865
    %v957 = vpack.c.bf16 %v868, %v867
    %v958 = vpack.c.bf16 %v870, %v869
    %v959 = vpack.c.bf16 %v872, %v871
    %v960 = vpack.c.bf16 %v874, %v873
    %v961 = vpack.c.bf16 %v876, %v875
    %v962 = vpack.c.bf16 %v878, %v877
    %v963 = vpack.c.bf16 %v880, %v879
    %v964 = vpack.c.bf16 %v882, %v881
    %v965 = vpack.c.bf16 %v884, %v883
    %v966 = vpack.c.bf16 %v886, %v885
    %v967 = vpack.c.bf16 %v888, %v887
    %v968 = vpack.c.bf16 %v890, %v889
    %v969 = vpack.c.bf16 %v892, %v891
    %v970 = vpack.c.bf16 %v894, %v893
    %v971 = vpack.c.bf16 %v896, %v895
    %v972 = vpack.c.bf16 %v898, %v897
    %v973 = vpack.c.bf16 %v900, %v899
    %v974 = vpack.c.bf16 %v902, %v901
    %v975 = vpack.c.bf16 %v904, %v903
    %v976 = vpack.c.bf16 %v906, %v905
    %v977 = vpack.c.bf16 %v908, %v907
    %v978 = vpack.c.bf16 %v910, %v909
    %v979 = vpack.c.bf16 %v912, %v911
    %v980 = vpack.c.bf16 %v914, %v913
    %v981 = vpack.c.bf16 %v916, %v915
    %v982 = vpack.c.bf16 %v918, %v917
    %v983 = vld [vmem:[%s1] sm:$0xf]
    %v984 = vld [vmem:[%s1 + $0x4] sm:$0xf]
    %v985 = vld [vmem:[%s1 + $0x8] sm:$0xf]
    %v986 = vld [vmem:[%s1 + $0xc] sm:$0xf]
    %v987 = vld [vmem:[%s1 + $0x10] sm:$0xf]
    %v988 = vld [vmem:[%s1 + $0x14] sm:$0xf]
    %v989 = vld [vmem:[%s1 + $0x18] sm:$0xf]
    %v990 = vld [vmem:[%s1 + $0x1c] sm:$0xf]
    %v991 = vld [vmem:[%s1 + $0x20] sm:$0xf]
    %v992 = vld [vmem:[%s1 + $0x24] sm:$0xf]
    %v993 = vld [vmem:[%s1 + $0x28] sm:$0xf]
    %v994 = vld [vmem:[%s1 + $0x2c] sm:$0xf]
    %v995 = vld [vmem:[%s1 + $0x30] sm:$0xf]
    %v996 = vld [vmem:[%s1 + $0x34] sm:$0xf]
    %v997 = vld [vmem:[%s1 + $0x38] sm:$0xf]
    %v998 = vld [vmem:[%s1 + $0x3c] sm:$0xf]
    %v999 = vld [vmem:[%s2] sm:$0x1]
    %v1001 = vperm.slane %v999, 0
    %v1019 = vunpack.c.l.b16 %v983
    %v1020 = vunpack.c.l.b16 %v984
    %v1021 = vunpack.c.l.b16 %v985
    %v1022 = vunpack.c.l.b16 %v986
    %v1023 = vunpack.c.l.b16 %v987
    %v1024 = vunpack.c.l.b16 %v988
    %v1025 = vunpack.c.l.b16 %v989
    %v1026 = vunpack.c.l.b16 %v990
    %v1027 = vunpack.c.l.b16 %v991
    %v1028 = vunpack.c.l.b16 %v992
    %v1029 = vunpack.c.l.b16 %v993
    %v1030 = vunpack.c.l.b16 %v994
    %v1031 = vunpack.c.l.b16 %v995
    %v1032 = vunpack.c.l.b16 %v996
    %v1033 = vunpack.c.l.b16 %v997
    %v1034 = vunpack.c.l.b16 %v998
    %v1035 = vpack.c.b16 %v1020, %v1019
    %v1036 = vpack.c.b16 %v1022, %v1021
    %v1037 = vpack.c.b16 %v1024, %v1023
    %v1038 = vpack.c.b16 %v1026, %v1025
    %v1039 = vpack.c.b16 %v1028, %v1027
    %v1040 = vpack.c.b16 %v1030, %v1029
    %v1041 = vpack.c.b16 %v1032, %v1031
    %v1042 = vpack.c.b16 %v1034, %v1033
    %1051 = vmatpush.bf16.msra.mxu0 %v1042
    %1052 = vmatpush.bf16.msra.mxu0 %v1041
    %1053 = vmatpush.bf16.msra.mxu0 %v1040
    %1054 = vmatpush.bf16.msra.mxu0 %v1039
    %1055 = vmatpush.bf16.msra.mxu0 %v1038
    %1056 = vmatpush.bf16.msra.mxu0 %v1037
    %1057 = vmatpush.bf16.msra.mxu0 %v1036
    %1058 = vmatpush.bf16.msra.mxu0 %v1035
    %1059 = vmatmul.bf16.gmra.mxu0 %v919
    %v1060 = vpop.f32.mrf.mxu0
    %v1061 = vadd.f32 %v1001, %v1060
    %v1062 = vpop.f32.mrf.mxu0
    %v1063 = vadd.f32 %v1001, %v1062
    %1064 = vmatmul.bf16.gmra.mxu0 %v920
    %v1065 = vpop.f32.mrf.mxu0
    %v1066 = vadd.f32 %v1001, %v1065
    %v1067 = vpop.f32.mrf.mxu0
    %v1068 = vadd.f32 %v1001, %v1067
    %1069 = vmatmul.bf16.gmra.mxu0 %v921
    %v1070 = vpop.f32.mrf.mxu0
    %v1071 = vadd.f32 %v1001, %v1070
    %v1072 = vpop.f32.mrf.mxu0
    %v1073 = vadd.f32 %v1001, %v1072
    %1074 = vmatmul.bf16.gmra.mxu0 %v922
    %v1075 = vpop.f32.mrf.mxu0
    %v1076 = vadd.f32 %v1001, %v1075
    %v1077 = vpop.f32.mrf.mxu0
    %v1078 = vadd.f32 %v1001, %v1077
    %1079 = vmatmul.bf16.gmra.mxu0 %v923
    %v1080 = vpop.f32.mrf.mxu0
    %v1081 = vadd.f32 %v1001, %v1080
    %v1082 = vpop.f32.mrf.mxu0
    %v1083 = vadd.f32 %v1001, %v1082
    %1084 = vmatmul.bf16.gmra.mxu0 %v924
    %v1085 = vpop.f32.mrf.mxu0
    %v1086 = vadd.f32 %v1001, %v1085
    %v1087 = vpop.f32.mrf.mxu0
    %v1088 = vadd.f32 %v1001, %v1087
    %1089 = vmatmul.bf16.gmra.mxu0 %v925
    %v1090 = vpop.f32.mrf.mxu0
    %v1091 = vadd.f32 %v1001, %v1090
    %v1092 = vpop.f32.mrf.mxu0
    %v1093 = vadd.f32 %v1001, %v1092
    %1094 = vmatmul.bf16.gmra.mxu0 %v926
    %v1095 = vpop.f32.mrf.mxu0
    %v1096 = vadd.f32 %v1001, %v1095
    %v1097 = vpop.f32.mrf.mxu0
    %v1098 = vadd.f32 %v1001, %v1097
    %1099 = vmatmul.bf16.gmra.mxu0 %v927
    %v1100 = vpop.f32.mrf.mxu0
    %v1101 = vadd.f32 %v1001, %v1100
    %v1102 = vpop.f32.mrf.mxu0
    %v1103 = vadd.f32 %v1001, %v1102
    %1104 = vmatmul.bf16.gmra.mxu0 %v928
    %v1105 = vpop.f32.mrf.mxu0
    %v1106 = vadd.f32 %v1001, %v1105
    %v1107 = vpop.f32.mrf.mxu0
    %v1108 = vadd.f32 %v1001, %v1107
    %1109 = vmatmul.bf16.gmra.mxu0 %v929
    %v1110 = vpop.f32.mrf.mxu0
    %v1111 = vadd.f32 %v1001, %v1110
    %v1112 = vpop.f32.mrf.mxu0
    %v1113 = vadd.f32 %v1001, %v1112
    %1114 = vmatmul.bf16.gmra.mxu0 %v930
    %v1115 = vpop.f32.mrf.mxu0
    %v1116 = vadd.f32 %v1001, %v1115
    %v1117 = vpop.f32.mrf.mxu0
    %v1118 = vadd.f32 %v1001, %v1117
    %1119 = vmatmul.bf16.gmra.mxu0 %v931
    %v1120 = vpop.f32.mrf.mxu0
    %v1121 = vadd.f32 %v1001, %v1120
    %v1122 = vpop.f32.mrf.mxu0
    %v1123 = vadd.f32 %v1001, %v1122
    %1124 = vmatmul.bf16.gmra.mxu0 %v932
    %v1125 = vpop.f32.mrf.mxu0
    %v1126 = vadd.f32 %v1001, %v1125
    %v1127 = vpop.f32.mrf.mxu0
    %v1128 = vadd.f32 %v1001, %v1127
    %1129 = vmatmul.bf16.gmra.mxu0 %v933
    %v1130 = vpop.f32.mrf.mxu0
    %v1131 = vadd.f32 %v1001, %v1130
    %v1132 = vpop.f32.mrf.mxu0
    %v1133 = vadd.f32 %v1001, %v1132
    %1134 = vmatmul.bf16.gmra.mxu0 %v934
    %v1135 = vpop.f32.mrf.mxu0
    %v1136 = vadd.f32 %v1001, %v1135
    %v1137 = vpop.f32.mrf.mxu0
    %v1138 = vadd.f32 %v1001, %v1137
    %1139 = vmatmul.bf16.gmra.mxu0 %v935
    %v1140 = vpop.f32.mrf.mxu0
    %v1141 = vadd.f32 %v1001, %v1140
    %v1142 = vpop.f32.mrf.mxu0
    %v1143 = vadd.f32 %v1001, %v1142
    %1144 = vmatmul.bf16.gmra.mxu0 %v936
    %v1145 = vpop.f32.mrf.mxu0
    %v1146 = vadd.f32 %v1001, %v1145
    %v1147 = vpop.f32.mrf.mxu0
    %v1148 = vadd.f32 %v1001, %v1147
    %1149 = vmatmul.bf16.gmra.mxu0 %v937
    %v1150 = vpop.f32.mrf.mxu0
    %v1151 = vadd.f32 %v1001, %v1150
    %v1152 = vpop.f32.mrf.mxu0
    %v1153 = vadd.f32 %v1001, %v1152
    %1154 = vmatmul.bf16.gmra.mxu0 %v938
    %v1155 = vpop.f32.mrf.mxu0
    %v1156 = vadd.f32 %v1001, %v1155
    %v1157 = vpop.f32.mrf.mxu0
    %v1158 = vadd.f32 %v1001, %v1157
    %1159 = vmatmul.bf16.gmra.mxu0 %v939
    %v1160 = vpop.f32.mrf.mxu0
    %v1161 = vadd.f32 %v1001, %v1160
    %v1162 = vpop.f32.mrf.mxu0
    %v1163 = vadd.f32 %v1001, %v1162
    %1164 = vmatmul.bf16.gmra.mxu0 %v940
    %v1165 = vpop.f32.mrf.mxu0
    %v1166 = vadd.f32 %v1001, %v1165
    %v1167 = vpop.f32.mrf.mxu0
    %v1168 = vadd.f32 %v1001, %v1167
    %1169 = vmatmul.bf16.gmra.mxu0 %v941
    %v1170 = vpop.f32.mrf.mxu0
    %v1171 = vadd.f32 %v1001, %v1170
    %v1172 = vpop.f32.mrf.mxu0
    %v1173 = vadd.f32 %v1001, %v1172
    %1174 = vmatmul.bf16.gmra.mxu0 %v942
    %v1175 = vpop.f32.mrf.mxu0
    %v1176 = vadd.f32 %v1001, %v1175
    %v1177 = vpop.f32.mrf.mxu0
    %v1178 = vadd.f32 %v1001, %v1177
    %1179 = vmatmul.bf16.gmra.mxu0 %v943
    %v1180 = vpop.f32.mrf.mxu0
    %v1181 = vadd.f32 %v1001, %v1180
    %v1182 = vpop.f32.mrf.mxu0
    %v1183 = vadd.f32 %v1001, %v1182
    %1184 = vmatmul.bf16.gmra.mxu0 %v944
    %v1185 = vpop.f32.mrf.mxu0
    %v1186 = vadd.f32 %v1001, %v1185
    %v1187 = vpop.f32.mrf.mxu0
    %v1188 = vadd.f32 %v1001, %v1187
    %1189 = vmatmul.bf16.gmra.mxu0 %v945
    %v1190 = vpop.f32.mrf.mxu0
    %v1191 = vadd.f32 %v1001, %v1190
    %v1192 = vpop.f32.mrf.mxu0
    %v1193 = vadd.f32 %v1001, %v1192
    %1194 = vmatmul.bf16.gmra.mxu0 %v946
    %v1195 = vpop.f32.mrf.mxu0
    %v1196 = vadd.f32 %v1001, %v1195
    %v1197 = vpop.f32.mrf.mxu0
    %v1198 = vadd.f32 %v1001, %v1197
    %1199 = vmatmul.bf16.gmra.mxu0 %v947
    %v1200 = vpop.f32.mrf.mxu0
    %v1201 = vadd.f32 %v1001, %v1200
    %v1202 = vpop.f32.mrf.mxu0
    %v1203 = vadd.f32 %v1001, %v1202
    %1204 = vmatmul.bf16.gmra.mxu0 %v948
    %v1205 = vpop.f32.mrf.mxu0
    %v1206 = vadd.f32 %v1001, %v1205
    %v1207 = vpop.f32.mrf.mxu0
    %v1208 = vadd.f32 %v1001, %v1207
    %1209 = vmatmul.bf16.gmra.mxu0 %v949
    %v1210 = vpop.f32.mrf.mxu0
    %v1211 = vadd.f32 %v1001, %v1210
    %v1212 = vpop.f32.mrf.mxu0
    %v1213 = vadd.f32 %v1001, %v1212
    %1214 = vmatmul.bf16.gmra.mxu0 %v950
    %v1215 = vpop.f32.mrf.mxu0
    %v1216 = vadd.f32 %v1001, %v1215
    %v1217 = vpop.f32.mrf.mxu0
    %v1218 = vadd.f32 %v1001, %v1217
    %1219 = vmatmul.bf16.gmra.mxu0 %v951
    %v1220 = vpop.f32.mrf.mxu0
    %v1221 = vadd.f32 %v1001, %v1220
    %v1222 = vpop.f32.mrf.mxu0
    %v1223 = vadd.f32 %v1001, %v1222
    %1224 = vmatmul.bf16.gmra.mxu0 %v952
    %v1225 = vpop.f32.mrf.mxu0
    %v1226 = vadd.f32 %v1001, %v1225
    %v1227 = vpop.f32.mrf.mxu0
    %v1228 = vadd.f32 %v1001, %v1227
    %1229 = vmatmul.bf16.gmra.mxu0 %v953
    %v1230 = vpop.f32.mrf.mxu0
    %v1231 = vadd.f32 %v1001, %v1230
    %v1232 = vpop.f32.mrf.mxu0
    %v1233 = vadd.f32 %v1001, %v1232
    %1234 = vmatmul.bf16.gmra.mxu0 %v954
    %v1235 = vpop.f32.mrf.mxu0
    %v1236 = vadd.f32 %v1001, %v1235
    %v1237 = vpop.f32.mrf.mxu0
    %v1238 = vadd.f32 %v1001, %v1237
    %1239 = vmatmul.bf16.gmra.mxu0 %v955
    %v1240 = vpop.f32.mrf.mxu0
    %v1241 = vadd.f32 %v1001, %v1240
    %v1242 = vpop.f32.mrf.mxu0
    %v1243 = vadd.f32 %v1001, %v1242
    %1244 = vmatmul.bf16.gmra.mxu0 %v956
    %v1245 = vpop.f32.mrf.mxu0
    %v1246 = vadd.f32 %v1001, %v1245
    %v1247 = vpop.f32.mrf.mxu0
    %v1248 = vadd.f32 %v1001, %v1247
    %1249 = vmatmul.bf16.gmra.mxu0 %v957
    %v1250 = vpop.f32.mrf.mxu0
    %v1251 = vadd.f32 %v1001, %v1250
    %v1252 = vpop.f32.mrf.mxu0
    %v1253 = vadd.f32 %v1001, %v1252
    %1254 = vmatmul.bf16.gmra.mxu0 %v958
    %v1255 = vpop.f32.mrf.mxu0
    %v1256 = vadd.f32 %v1001, %v1255
    %v1257 = vpop.f32.mrf.mxu0
    %v1258 = vadd.f32 %v1001, %v1257
    %1259 = vmatmul.bf16.gmra.mxu0 %v959
    %v1260 = vpop.f32.mrf.mxu0
    %v1261 = vadd.f32 %v1001, %v1260
    %v1262 = vpop.f32.mrf.mxu0
    %v1263 = vadd.f32 %v1001, %v1262
    %1264 = vmatmul.bf16.gmra.mxu0 %v960
    %v1265 = vpop.f32.mrf.mxu0
    %v1266 = vadd.f32 %v1001, %v1265
    %v1267 = vpop.f32.mrf.mxu0
    %v1268 = vadd.f32 %v1001, %v1267
    %1269 = vmatmul.bf16.gmra.mxu0 %v961
    %v1270 = vpop.f32.mrf.mxu0
    %v1271 = vadd.f32 %v1001, %v1270
    %v1272 = vpop.f32.mrf.mxu0
    %v1273 = vadd.f32 %v1001, %v1272
    %1274 = vmatmul.bf16.gmra.mxu0 %v962
    %v1275 = vpop.f32.mrf.mxu0
    %v1276 = vadd.f32 %v1001, %v1275
    %v1277 = vpop.f32.mrf.mxu0
    %v1278 = vadd.f32 %v1001, %v1277
    %1279 = vmatmul.bf16.gmra.mxu0 %v963
    %v1280 = vpop.f32.mrf.mxu0
    %v1281 = vadd.f32 %v1001, %v1280
    %v1282 = vpop.f32.mrf.mxu0
    %v1283 = vadd.f32 %v1001, %v1282
    %1284 = vmatmul.bf16.gmra.mxu0 %v964
    %v1285 = vpop.f32.mrf.mxu0
    %v1286 = vadd.f32 %v1001, %v1285
    %v1287 = vpop.f32.mrf.mxu0
    %v1288 = vadd.f32 %v1001, %v1287
    %1289 = vmatmul.bf16.gmra.mxu0 %v965
    %v1290 = vpop.f32.mrf.mxu0
    %v1291 = vadd.f32 %v1001, %v1290
    %v1292 = vpop.f32.mrf.mxu0
    %v1293 = vadd.f32 %v1001, %v1292
    %1294 = vmatmul.bf16.gmra.mxu0 %v966
    %v1295 = vpop.f32.mrf.mxu0
    %v1296 = vadd.f32 %v1001, %v1295
    %v1297 = vpop.f32.mrf.mxu0
    %v1298 = vadd.f32 %v1001, %v1297
    %1299 = vmatmul.bf16.gmra.mxu0 %v967
    %v1300 = vpop.f32.mrf.mxu0
    %v1301 = vadd.f32 %v1001, %v1300
    %v1302 = vpop.f32.mrf.mxu0
    %v1303 = vadd.f32 %v1001, %v1302
    %1304 = vmatmul.bf16.gmra.mxu0 %v968
    %v1305 = vpop.f32.mrf.mxu0
    %v1306 = vadd.f32 %v1001, %v1305
    %v1307 = vpop.f32.mrf.mxu0
    %v1308 = vadd.f32 %v1001, %v1307
    %1309 = vmatmul.bf16.gmra.mxu0 %v969
    %v1310 = vpop.f32.mrf.mxu0
    %v1311 = vadd.f32 %v1001, %v1310
    %v1312 = vpop.f32.mrf.mxu0
    %v1313 = vadd.f32 %v1001, %v1312
    %1314 = vmatmul.bf16.gmra.mxu0 %v970
    %v1315 = vpop.f32.mrf.mxu0
    %v1316 = vadd.f32 %v1001, %v1315
    %v1317 = vpop.f32.mrf.mxu0
    %v1318 = vadd.f32 %v1001, %v1317
    %1319 = vmatmul.bf16.gmra.mxu0 %v971
    %v1320 = vpop.f32.mrf.mxu0
    %v1321 = vadd.f32 %v1001, %v1320
    %v1322 = vpop.f32.mrf.mxu0
    %v1323 = vadd.f32 %v1001, %v1322
    %1324 = vmatmul.bf16.gmra.mxu0 %v972
    %v1325 = vpop.f32.mrf.mxu0
    %v1326 = vadd.f32 %v1001, %v1325
    %v1327 = vpop.f32.mrf.mxu0
    %v1328 = vadd.f32 %v1001, %v1327
    %1329 = vmatmul.bf16.gmra.mxu0 %v973
    %v1330 = vpop.f32.mrf.mxu0
    %v1331 = vadd.f32 %v1001, %v1330
    %v1332 = vpop.f32.mrf.mxu0
    %v1333 = vadd.f32 %v1001, %v1332
    %1334 = vmatmul.bf16.gmra.mxu0 %v974
    %v1335 = vpop.f32.mrf.mxu0
    %v1336 = vadd.f32 %v1001, %v1335
    %v1337 = vpop.f32.mrf.mxu0
    %v1338 = vadd.f32 %v1001, %v1337
    %1339 = vmatmul.bf16.gmra.mxu0 %v975
    %v1340 = vpop.f32.mrf.mxu0
    %v1341 = vadd.f32 %v1001, %v1340
    %v1342 = vpop.f32.mrf.mxu0
    %v1343 = vadd.f32 %v1001, %v1342
    %1344 = vmatmul.bf16.gmra.mxu0 %v976
    %v1345 = vpop.f32.mrf.mxu0
    %v1346 = vadd.f32 %v1001, %v1345
    %v1347 = vpop.f32.mrf.mxu0
    %v1348 = vadd.f32 %v1001, %v1347
    %1349 = vmatmul.bf16.gmra.mxu0 %v977
    %v1350 = vpop.f32.mrf.mxu0
    %v1351 = vadd.f32 %v1001, %v1350
    %v1352 = vpop.f32.mrf.mxu0
    %v1353 = vadd.f32 %v1001, %v1352
    %1354 = vmatmul.bf16.gmra.mxu0 %v978
    %v1355 = vpop.f32.mrf.mxu0
    %v1356 = vadd.f32 %v1001, %v1355
    %v1357 = vpop.f32.mrf.mxu0
    %v1358 = vadd.f32 %v1001, %v1357
    %1359 = vmatmul.bf16.gmra.mxu0 %v979
    %v1360 = vpop.f32.mrf.mxu0
    %v1361 = vadd.f32 %v1001, %v1360
    %v1362 = vpop.f32.mrf.mxu0
    %v1363 = vadd.f32 %v1001, %v1362
    %1364 = vmatmul.bf16.gmra.mxu0 %v980
    %v1365 = vpop.f32.mrf.mxu0
    %v1366 = vadd.f32 %v1001, %v1365
    %v1367 = vpop.f32.mrf.mxu0
    %v1368 = vadd.f32 %v1001, %v1367
    %1369 = vmatmul.bf16.gmra.mxu0 %v981
    %v1370 = vpop.f32.mrf.mxu0
    %v1371 = vadd.f32 %v1001, %v1370
    %v1372 = vpop.f32.mrf.mxu0
    %v1373 = vadd.f32 %v1001, %v1372
    %1374 = vmatmul.bf16.gmra.mxu0 %v982
    %v1375 = vpop.f32.mrf.mxu0
    %v1376 = vadd.f32 %v1001, %v1375
    %v1377 = vpop.f32.mrf.mxu0
    %v1378 = vadd.f32 %v1001, %v1377
    %1379 = vdwg.mxu0
    %v1380 = vmax.f32 %v1061, 0.0
    %v1381 = vmax.f32 %v1063, 0.0
    %v1382 = vmax.f32 %v1066, 0.0
    %v1383 = vmax.f32 %v1068, 0.0
    %v1384 = vmax.f32 %v1071, 0.0
    %v1385 = vmax.f32 %v1073, 0.0
    %v1386 = vmax.f32 %v1076, 0.0
    %v1387 = vmax.f32 %v1078, 0.0
    %v1388 = vmax.f32 %v1081, 0.0
    %v1389 = vmax.f32 %v1083, 0.0
    %v1390 = vmax.f32 %v1086, 0.0
    %v1391 = vmax.f32 %v1088, 0.0
    %v1392 = vmax.f32 %v1091, 0.0
    %v1393 = vmax.f32 %v1093, 0.0
    %v1394 = vmax.f32 %v1096, 0.0
    %v1395 = vmax.f32 %v1098, 0.0
    %v1396 = vmax.f32 %v1101, 0.0
    %v1397 = vmax.f32 %v1103, 0.0
    %v1398 = vmax.f32 %v1106, 0.0
    %v1399 = vmax.f32 %v1108, 0.0
    %v1400 = vmax.f32 %v1111, 0.0
    %v1401 = vmax.f32 %v1113, 0.0
    %v1402 = vmax.f32 %v1116, 0.0
    %v1403 = vmax.f32 %v1118, 0.0
    %v1404 = vmax.f32 %v1121, 0.0
    %v1405 = vmax.f32 %v1123, 0.0
    %v1406 = vmax.f32 %v1126, 0.0
    %v1407 = vmax.f32 %v1128, 0.0
    %v1408 = vmax.f32 %v1131, 0.0
    %v1409 = vmax.f32 %v1133, 0.0
    %v1410 = vmax.f32 %v1136, 0.0
    %v1411 = vmax.f32 %v1138, 0.0
    %v1412 = vmax.f32 %v1141, 0.0
    %v1413 = vmax.f32 %v1143, 0.0
    %v1414 = vmax.f32 %v1146, 0.0
    %v1415 = vmax.f32 %v1148, 0.0
    %v1416 = vmax.f32 %v1151, 0.0
    %v1417 = vmax.f32 %v1153, 0.0
    %v1418 = vmax.f32 %v1156, 0.0
    %v1419 = vmax.f32 %v1158, 0.0
    %v1420 = vmax.f32 %v1161, 0.0
    %v1421 = vmax.f32 %v1163, 0.0
    %v1422 = vmax.f32 %v1166, 0.0
    %v1423 = vmax.f32 %v1168, 0.0
    %v1424 = vmax.f32 %v1171, 0.0
    %v1425 = vmax.f32 %v1173, 0.0
    %v1426 = vmax.f32 %v1176, 0.0
    %v1427 = vmax.f32 %v1178, 0.0
    %v1428 = vmax.f32 %v1181, 0.0
    %v1429 = vmax.f32 %v1183, 0.0
    %v1430 = vmax.f32 %v1186, 0.0
    %v1431 = vmax.f32 %v1188, 0.0
    %v1432 = vmax.f32 %v1191, 0.0
    %v1433 = vmax.f32 %v1193, 0.0
    %v1434 = vmax.f32 %v1196, 0.0
    %v1435 = vmax.f32 %v1198, 0.0
    %v1436 = vmax.f32 %v1201, 0.0
    %v1437 = vmax.f32 %v1203, 0.0
    %v1438 = vmax.f32 %v1206, 0.0
    %v1439 = vmax.f32 %v1208, 0.0
    %v1440 = vmax.f32 %v1211, 0.0
    %v1441 = vmax.f32 %v1213, 0.0
    %v1442 = vmax.f32 %v1216, 0.0
    %v1443 = vmax.f32 %v1218, 0.0
    %v1444 = vmax.f32 %v1221, 0.0
    %v1445 = vmax.f32 %v1223, 0.0
    %v1446 = vmax.f32 %v1226, 0.0
    %v1447 = vmax.f32 %v1228, 0.0
    %v1448 = vmax.f32 %v1231, 0.0
    %v1449 = vmax.f32 %v1233, 0.0
    %v1450 = vmax.f32 %v1236, 0.0
    %v1451 = vmax.f32 %v1238, 0.0
    %v1452 = vmax.f32 %v1241, 0.0
    %v1453 = vmax.f32 %v1243, 0.0
    %v1454 = vmax.f32 %v1246, 0.0
    %v1455 = vmax.f32 %v1248, 0.0
    %v1456 = vmax.f32 %v1251, 0.0
    %v1457 = vmax.f32 %v1253, 0.0
    %v1458 = vmax.f32 %v1256, 0.0
    %v1459 = vmax.f32 %v1258, 0.0
    %v1460 = vmax.f32 %v1261, 0.0
    %v1461 = vmax.f32 %v1263, 0.0
    %v1462 = vmax.f32 %v1266, 0.0
    %v1463 = vmax.f32 %v1268, 0.0
    %v1464 = vmax.f32 %v1271, 0.0
    %v1465 = vmax.f32 %v1273, 0.0
    %v1466 = vmax.f32 %v1276, 0.0
    %v1467 = vmax.f32 %v1278, 0.0
    %v1468 = vmax.f32 %v1281, 0.0
    %v1469 = vmax.f32 %v1283, 0.0
    %v1470 = vmax.f32 %v1286, 0.0
    %v1471 = vmax.f32 %v1288, 0.0
    %v1472 = vmax.f32 %v1291, 0.0
    %v1473 = vmax.f32 %v1293, 0.0
    %v1474 = vmax.f32 %v1296, 0.0
    %v1475 = vmax.f32 %v1298, 0.0
    %v1476 = vmax.f32 %v1301, 0.0
    %v1477 = vmax.f32 %v1303, 0.0
    %v1478 = vmax.f32 %v1306, 0.0
    %v1479 = vmax.f32 %v1308, 0.0
    %v1480 = vmax.f32 %v1311, 0.0
    %v1481 = vmax.f32 %v1313, 0.0
    %v1482 = vmax.f32 %v1316, 0.0
    %v1483 = vmax.f32 %v1318, 0.0
    %v1484 = vmax.f32 %v1321, 0.0
    %v1485 = vmax.f32 %v1323, 0.0
    %v1486 = vmax.f32 %v1326, 0.0
    %v1487 = vmax.f32 %v1328, 0.0
    %v1488 = vmax.f32 %v1331, 0.0
    %v1489 = vmax.f32 %v1333, 0.0
    %v1490 = vmax.f32 %v1336, 0.0
    %v1491 = vmax.f32 %v1338, 0.0
    %v1492 = vmax.f32 %v1341, 0.0
    %v1493 = vmax.f32 %v1343, 0.0
    %v1494 = vmax.f32 %v1346, 0.0
    %v1495 = vmax.f32 %v1348, 0.0
    %v1496 = vmax.f32 %v1351, 0.0
    %v1497 = vmax.f32 %v1353, 0.0
    %v1498 = vmax.f32 %v1356, 0.0
    %v1499 = vmax.f32 %v1358, 0.0
    %v1500 = vmax.f32 %v1361, 0.0
    %v1501 = vmax.f32 %v1363, 0.0
    %v1502 = vmax.f32 %v1366, 0.0
    %v1503 = vmax.f32 %v1368, 0.0
    %v1504 = vmax.f32 %v1371, 0.0
    %v1505 = vmax.f32 %v1373, 0.0
    %v1506 = vmax.f32 %v1376, 0.0
    %v1507 = vmax.f32 %v1378, 0.0
    %v1508 = vmax.f32 %v1380, %v1384
    %v1509 = vmax.f32 %v1382, %v1386
    %v1510 = vmax.f32 %v1508, %v1388
    %v1511 = vmax.f32 %v1509, %v1390
    %v1512 = vmax.f32 %v1510, %v1392
    %v1513 = vmax.f32 %v1511, %v1394
    %v1514 = vmax.f32 %v1512, %v1396
    %v1515 = vmax.f32 %v1513, %v1398
    %v1516 = vmax.f32 %v1514, %v1400
    %v1517 = vmax.f32 %v1515, %v1402
    %v1518 = vmax.f32 %v1516, %v1404
    %v1519 = vmax.f32 %v1517, %v1406
    %v1520 = vmax.f32 %v1518, %v1408
    %v1521 = vmax.f32 %v1519, %v1410
    %v1522 = vmax.f32 %v1520, %v1412
    %v1523 = vmax.f32 %v1521, %v1414
    %v1524 = vmax.f32 %v1522, %v1416
    %v1525 = vmax.f32 %v1523, %v1418
    %v1526 = vmax.f32 %v1524, %v1420
    %v1527 = vmax.f32 %v1525, %v1422
    %v1528 = vmax.f32 %v1526, %v1424
    %v1529 = vmax.f32 %v1527, %v1426
    %v1530 = vmax.f32 %v1528, %v1428
    %v1531 = vmax.f32 %v1529, %v1430
    %v1532 = vmax.f32 %v1530, %v1432
    %v1533 = vmax.f32 %v1531, %v1434
    %v1534 = vmax.f32 %v1532, %v1436
    %v1535 = vmax.f32 %v1533, %v1438
    %v1536 = vmax.f32 %v1534, %v1440
    %v1537 = vmax.f32 %v1535, %v1442
    %v1538 = vmax.f32 %v1536, %v1444
    %v1539 = vmax.f32 %v1537, %v1446
    %v1540 = vmax.f32 %v1538, %v1448
    %v1541 = vmax.f32 %v1539, %v1450
    %v1542 = vmax.f32 %v1540, %v1452
    %v1543 = vmax.f32 %v1541, %v1454
    %v1544 = vmax.f32 %v1542, %v1456
    %v1545 = vmax.f32 %v1543, %v1458
    %v1546 = vmax.f32 %v1544, %v1460
    %v1547 = vmax.f32 %v1545, %v1462
    %v1548 = vmax.f32 %v1546, %v1464
    %v1549 = vmax.f32 %v1547, %v1466
    %v1550 = vmax.f32 %v1548, %v1468
    %v1551 = vmax.f32 %v1549, %v1470
    %v1552 = vmax.f32 %v1550, %v1472
    %v1553 = vmax.f32 %v1551, %v1474
    %v1554 = vmax.f32 %v1552, %v1476
    %v1555 = vmax.f32 %v1553, %v1478
    %v1556 = vmax.f32 %v1554, %v1480
    %v1557 = vmax.f32 %v1555, %v1482
    %v1558 = vmax.f32 %v1556, %v1484
    %v1559 = vmax.f32 %v1557, %v1486
    %v1560 = vmax.f32 %v1558, %v1488
    %v1561 = vmax.f32 %v1559, %v1490
    %v1562 = vmax.f32 %v1560, %v1492
    %v1563 = vmax.f32 %v1561, %v1494
    %v1564 = vmax.f32 %v1562, %v1496
    %v1565 = vmax.f32 %v1563, %v1498
    %v1566 = vmax.f32 %v1564, %v1500
    %v1567 = vmax.f32 %v1565, %v1502
    %v1568 = vmax.f32 %v1566, %v1504
    %v1569 = vmax.f32 %v1567, %v1506
    %v1570 = vmax.f32 %v1568, %v1569
    %v1571 = vmax.f32 %v1381, %v1385
    %v1572 = vmax.f32 %v1383, %v1387
    %v1573 = vmax.f32 %v1571, %v1389
    %v1574 = vmax.f32 %v1572, %v1391
    %v1575 = vmax.f32 %v1573, %v1393
    %v1576 = vmax.f32 %v1574, %v1395
    %v1577 = vmax.f32 %v1575, %v1397
    %v1578 = vmax.f32 %v1576, %v1399
    %v1579 = vmax.f32 %v1577, %v1401
    %v1580 = vmax.f32 %v1578, %v1403
    %v1581 = vmax.f32 %v1579, %v1405
    %v1582 = vmax.f32 %v1580, %v1407
    %v1583 = vmax.f32 %v1581, %v1409
    %v1584 = vmax.f32 %v1582, %v1411
    %v1585 = vmax.f32 %v1583, %v1413
    %v1586 = vmax.f32 %v1584, %v1415
    %v1587 = vmax.f32 %v1585, %v1417
    %v1588 = vmax.f32 %v1586, %v1419
    %v1589 = vmax.f32 %v1587, %v1421
    %v1590 = vmax.f32 %v1588, %v1423
    %v1591 = vmax.f32 %v1589, %v1425
    %v1592 = vmax.f32 %v1590, %v1427
    %v1593 = vmax.f32 %v1591, %v1429
    %v1594 = vmax.f32 %v1592, %v1431
    %v1595 = vmax.f32 %v1593, %v1433
    %v1596 = vmax.f32 %v1594, %v1435
    %v1597 = vmax.f32 %v1595, %v1437
    %v1598 = vmax.f32 %v1596, %v1439
    %v1599 = vmax.f32 %v1597, %v1441
    %v1600 = vmax.f32 %v1598, %v1443
    %v1601 = vmax.f32 %v1599, %v1445
    %v1602 = vmax.f32 %v1600, %v1447
    %v1603 = vmax.f32 %v1601, %v1449
    %v1604 = vmax.f32 %v1602, %v1451
    %v1605 = vmax.f32 %v1603, %v1453
    %v1606 = vmax.f32 %v1604, %v1455
    %v1607 = vmax.f32 %v1605, %v1457
    %v1608 = vmax.f32 %v1606, %v1459
    %v1609 = vmax.f32 %v1607, %v1461
    %v1610 = vmax.f32 %v1608, %v1463
    %v1611 = vmax.f32 %v1609, %v1465
    %v1612 = vmax.f32 %v1610, %v1467
    %v1613 = vmax.f32 %v1611, %v1469
    %v1614 = vmax.f32 %v1612, %v1471
    %v1615 = vmax.f32 %v1613, %v1473
    %v1616 = vmax.f32 %v1614, %v1475
    %v1617 = vmax.f32 %v1615, %v1477
    %v1618 = vmax.f32 %v1616, %v1479
    %v1619 = vmax.f32 %v1617, %v1481
    %v1620 = vmax.f32 %v1618, %v1483
    %v1621 = vmax.f32 %v1619, %v1485
    %v1622 = vmax.f32 %v1620, %v1487
    %v1623 = vmax.f32 %v1621, %v1489
    %v1624 = vmax.f32 %v1622, %v1491
    %v1625 = vmax.f32 %v1623, %v1493
    %v1626 = vmax.f32 %v1624, %v1495
    %v1627 = vmax.f32 %v1625, %v1497
    %v1628 = vmax.f32 %v1626, %v1499
    %v1629 = vmax.f32 %v1627, %v1501
    %v1630 = vmax.f32 %v1628, %v1503
    %v1631 = vmax.f32 %v1629, %v1505
    %v1632 = vmax.f32 %v1630, %v1507
    %v1633 = vmax.f32 %v1631, %v1632
    %p1634 = scmp.eq.s32.totalorder 0, 0
    // Predicated region
    $region22: #{tpu_custom_call.1} parent=1 // pred_check
      %p1635 = pneg %p1634
    $region23: #{tpu_custom_call.1} parent=1 // pred_check_branch
      %1637 = sbr.rel (%p1635) target = $region25
    $region24: #{tpu_custom_call.1} parent=1 // pred_region
      %1638 = vst [vmem:[#allocation2] sm:$0xff] %v1570
      %1639 = vst [vmem:[#allocation2 + $0x8] sm:$0xff] %v1633
    $region25: #{tpu_custom_call.1} parent=1 // pred_fallthru
      _
    %p1640 = scmp.gt.s32.totalorder 0, 0
    // Predicated region
    $region26: #{tpu_custom_call.1} parent=1 // pred_check
      %p1641 = pneg %p1640
    $region27: #{tpu_custom_call.1} parent=1 // pred_check_branch
      %1643 = sbr.rel (%p1641) target = $region29
    $region28: #{tpu_custom_call.1} parent=1 // pred_region
      %v1644 = vld [vmem:[#allocation2] sm:$0xff]
      %v1645 = vld [vmem:[#allocation2 + $0x8] sm:$0xff]
      %v1646 = vmax.f32 %v1644, %v1570
      %v1647 = vmax.f32 %v1645, %v1633
      %1648 = vst [vmem:[#allocation2] sm:$0xff] %v1646
      %1649 = vst [vmem:[#allocation2 + $0x8] sm:$0xff] %v1647
    $region29: #{tpu_custom_call.1} parent=1 // pred_fallthru
      _
    // Predicated region
    $region30: #{tpu_custom_call.1} parent=1 // pred_check
      %p1650 = pneg %p1634
    $region31: #{tpu_custom_call.1} parent=1 // pred_check_branch
      %1652 = sbr.rel (%p1650) target = $region33
    $region32: #{tpu_custom_call.1} parent=1 // pred_region
      %v1653 = vld [vmem:[#allocation2] sm:$0xff]
      %v1654 = vld [vmem:[#allocation2 + $0x8] sm:$0xff]
      %v1655 = vpack.c.bf16 %v1654, %v1653
      %v1656 = vld [vmem:[%s3] sm:$0xf]
      %v1657 = vld [vmem:[%s3 + $0x4] sm:$0xf]
      %v1658 = vld [vmem:[%s3 + $0x8] sm:$0xf]
      %v1659 = vld [vmem:[%s3 + $0xc] sm:$0xf]
      %v1660 = vld [vmem:[%s3 + $0x10] sm:$0xf]
      %v1661 = vld [vmem:[%s3 + $0x14] sm:$0xf]
      %v1662 = vld [vmem:[%s3 + $0x18] sm:$0xf]
      %v1663 = vld [vmem:[%s3 + $0x1c] sm:$0xf]
      %v1664 = vld [vmem:[%s3 + $0x20] sm:$0xf]
      %v1665 = vld [vmem:[%s3 + $0x24] sm:$0xf]
      %v1666 = vld [vmem:[%s3 + $0x28] sm:$0xf]
      %v1667 = vld [vmem:[%s3 + $0x2c] sm:$0xf]
      %v1668 = vld [vmem:[%s3 + $0x30] sm:$0xf]
      %v1669 = vld [vmem:[%s3 + $0x34] sm:$0xf]
      %v1670 = vld [vmem:[%s3 + $0x38] sm:$0xf]
      %v1671 = vld [vmem:[%s3 + $0x3c] sm:$0xf]
      %v1672 = vld [vmem:[%s4] sm:$0x1]
      %v1674 = vperm.slane %v1672, 0
      %v1692 = vunpack.c.l.b16 %v1656
      %v1693 = vunpack.c.l.b16 %v1657
      %v1694 = vunpack.c.l.b16 %v1658
      %v1695 = vunpack.c.l.b16 %v1659
      %v1696 = vunpack.c.l.b16 %v1660
      %v1697 = vunpack.c.l.b16 %v1661
      %v1698 = vunpack.c.l.b16 %v1662
      %v1699 = vunpack.c.l.b16 %v1663
      %v1700 = vunpack.c.l.b16 %v1664
      %v1701 = vunpack.c.l.b16 %v1665
      %v1702 = vunpack.c.l.b16 %v1666
      %v1703 = vunpack.c.l.b16 %v1667
      %v1704 = vunpack.c.l.b16 %v1668
      %v1705 = vunpack.c.l.b16 %v1669
      %v1706 = vunpack.c.l.b16 %v1670
      %v1707 = vunpack.c.l.b16 %v1671
      %v1708 = vpack.c.b16 %v1693, %v1692
      %v1709 = vpack.c.b16 %v1695, %v1694
      %v1710 = vpack.c.b16 %v1697, %v1696
      %v1711 = vpack.c.b16 %v1699, %v1698
      %v1712 = vpack.c.b16 %v1701, %v1700
      %v1713 = vpack.c.b16 %v1703, %v1702
      %v1714 = vpack.c.b16 %v1705, %v1704
      %v1715 = vpack.c.b16 %v1707, %v1706
      %1724 = vmatpush.bf16.msra.mxu0 %v1715
      %1725 = vmatpush.bf16.msra.mxu0 %v1714
      %1726 = vmatpush.bf16.msra.mxu0 %v1713
      %1727 = vmatpush.bf16.msra.mxu0 %v1712
      %1728 = vmatpush.bf16.msra.mxu0 %v1711
      %1729 = vmatpush.bf16.msra.mxu0 %v1710
      %1730 = vmatpush.bf16.msra.mxu0 %v1709
      %1731 = vmatpush.bf16.msra.mxu0 %v1708
      %1732 = vmatmul.bf16.gmra.mxu0 %v1655
      %v1733 = vpop.f32.mrf.mxu0
      %v1734 = vadd.f32 %v1674, %v1733
      %v1735 = vpop.f32.mrf.mxu0
      %v1736 = vadd.f32 %v1674, %v1735
      %1737 = vdwg.mxu0
      %1738 = vst [vmem:[#allocation3] sm:$0xff] %v1734
      %1739 = vst [vmem:[#allocation3 + $0x8] sm:$0xff] %v1736
    $region33: #{tpu_custom_call.1} parent=1 // pred_fallthru
      _
    // Predicated region
    $region34: #{tpu_custom_call.1} parent=1 // pred_check
      _
    $region35: #{tpu_custom_call.1} parent=1 // pred_check_branch
      %1741 = sbr.rel (0) target = $region37
    $region36: #{tpu_custom_call.1} parent=1 // pred_region
      %1743 = vsyncadd [#allocation4], 0
      %s1744 = sshll.u32 [#allocation3], 4
      %s1745 = int_to_ptr.vmem [resolvable:$true] %s1744
      %s1746 = sshll.u32 %s5, 4
      %s1747 = int_to_ptr.hbm [resolvable:$true] %s1746
      %1752 = dma.vmem_to_hbm [thread:$0]  %s1745, 256, %s1747, [#allocation4], 128, 128, 8
    $region37: #{tpu_custom_call.1} parent=1 // pred_fallthru
      _
    // Predicated region
    $region38: #{tpu_custom_call.1} parent=1 // pred_check
      _
    $region39: #{tpu_custom_call.1} parent=1 // pred_check_branch
      %1754 = sbr.rel (0) target = $region41
    $region40: #{tpu_custom_call.1} parent=1 // pred_region
      %1756 = dma.done [#allocation4], 256
    $region41: #{tpu_custom_call.1} parent=1 // pred_fallthru
      _
    %1757 = vsyncpa [#allocation4], 1

// kernel: tpu_custom_call.1
$region0: #{tpu_custom_call.1}
  #allocation0 [shape = 'u32[]', space=smem, size = 0x4, offset = 0x4, fixed_abs, tag = 'smem constant byte address 0x4 - core index']
  #allocation1 [shape = 'u32[72,128]{1,0:T(1,128)}', space=vmem, size = 0x9000, scoped, tag = 'internal scratch']
  #allocation2 [shape = 'f32[16,128]{1,0:T(8,128)}', space=vmem, size = 0x2000, scoped, tag = 'scratch operand']
  %s0 = inlined_call_operand.vmem [shape: s32[1,1,1024,1], index: 0, kind: input, shape index: {}]
  %s1 = inlined_call_operand.vmem [shape: bf16[128,128], index: 1, kind: input, shape index: {}]
  %s2 = inlined_call_operand.vmem [shape: f32[1,128], index: 2, kind: input, shape index: {}]
  %s3 = inlined_call_operand.vmem [shape: bf16[128,128], index: 3, kind: input, shape index: {}]
  %s4 = inlined_call_operand.vmem [shape: f32[1,128], index: 4, kind: input, shape index: {}]
  %s5 = inlined_call_operand.hbm [shape: f32[16,128], index: 5, kind: output, shape index: {}]
  %s6 = sld [smem:[#allocation0]]
  $region42: #{tpu_custom_call.1} parent=0
    _
  %s8 = ssub.s32 1, %s6
  %s9 = scalar_select 0, %s8, %s6
  $region1: #{tpu_custom_call.1} parent=0
    #allocation3 [shape = 'u8[8192]{0}', space=vmem, size = 0x2000, scoped, tag = 'output window, operand 0, single buffered']
    #allocation4 [shape = 's32[1]{0}', space=sflag, size = 0x4, scoped, tag = 'scoped memory for tpu_custom_call.1']
    %10 = vsyncpa [#allocation4], 0
    // Predicated region
    $region2: #{tpu_custom_call.1} parent=1 // pred_check
      _
    $region3: #{tpu_custom_call.1} parent=1 // pred_check_branch
      %12 = sbr.rel (0) target = $region5
    $region4: #{tpu_custom_call.1} parent=1 // pred_region
      _
    $region5: #{tpu_custom_call.1} parent=1 // pred_fallthru
      _
    // Predicated region
    $region6: #{tpu_custom_call.1} parent=1 // pred_check
      _
    $region7: #{tpu_custom_call.1} parent=1 // pred_check_branch
      %14 = sbr.rel (0) target = $region9
    $region8: #{tpu_custom_call.1} parent=1 // pred_region
      _
    $region9: #{tpu_custom_call.1} parent=1 // pred_fallthru
      _
    // Predicated region
    $region10: #{tpu_custom_call.1} parent=1 // pred_check
      _
    $region11: #{tpu_custom_call.1} parent=1 // pred_check_branch
      %16 = sbr.rel (0) target = $region13
    $region12: #{tpu_custom_call.1} parent=1 // pred_region
      _
    $region13: #{tpu_custom_call.1} parent=1 // pred_fallthru
      _
    // Predicated region
    $region14: #{tpu_custom_call.1} parent=1 // pred_check
      _
    $region15: #{tpu_custom_call.1} parent=1 // pred_check_branch
      %18 = sbr.rel (0) target = $region17
    $region16: #{tpu_custom_call.1} parent=1 // pred_region
      _
    $region17: #{tpu_custom_call.1} parent=1 // pred_fallthru
      _
    // Predicated region
    $region18: #{tpu_custom_call.1} parent=1 // pred_check
      _
    $region19: #{tpu_custom_call.1} parent=1 // pred_check_branch
      %20 = sbr.rel (0) target = $region21
    $region20: #{tpu_custom_call.1} parent=1 // pred_region
      _
    $region21: #{tpu_custom_call.1} parent=1 // pred_fallthru
      _
    %v21 = vld [vmem:[%s0] sm:$0xff]
    %v22 = vld [vmem:[%s0 + $0x8] sm:$0xff]
    %v23 = vld [vmem:[%s0 + $0x10] sm:$0xff]
    %v24 = vld [vmem:[%s0 + $0x18] sm:$0xff]
    %v25 = vld [vmem:[%s0 + $0x20] sm:$0xff]
    %v26 = vld [vmem:[%s0 + $0x28] sm:$0xff]
    %v27 = vld [vmem:[%s0 + $0x30] sm:$0xff]
    %v28 = vld [vmem:[%s0 + $0x38] sm:$0xff]
    %v29 = vld [vmem:[%s0 + $0x40] sm:$0xff]
    %v30 = vld [vmem:[%s0 + $0x48] sm:$0xff]
    %v31 = vld [vmem:[%s0 + $0x50] sm:$0xff]
    %v32 = vld [vmem:[%s0 + $0x58] sm:$0xff]
    %v33 = vld [vmem:[%s0 + $0x60] sm:$0xff]
    %v34 = vld [vmem:[%s0 + $0x68] sm:$0xff]
    %v35 = vld [vmem:[%s0 + $0x70] sm:$0xff]
    %v36 = vld [vmem:[%s0 + $0x78] sm:$0xff]
    %v37 = vld [vmem:[%s0 + $0x80] sm:$0xff]
    %v38 = vld [vmem:[%s0 + $0x88] sm:$0xff]
    %v39 = vld [vmem:[%s0 + $0x90] sm:$0xff]
    %v40 = vld [vmem:[%s0 + $0x98] sm:$0xff]
    %v41 = vld [vmem:[%s0 + $0xa0] sm:$0xff]
    %v42 = vld [vmem:[%s0 + $0xa8] sm:$0xff]
    %v43 = vld [vmem:[%s0 + $0xb0] sm:$0xff]
    %v44 = vld [vmem:[%s0 + $0xb8] sm:$0xff]
    %v45 = vld [vmem:[%s0 + $0xc0] sm:$0xff]
    %v46 = vld [vmem:[%s0 + $0xc8] sm:$0xff]
    %v47 = vld [vmem:[%s0 + $0xd0] sm:$0xff]
    %v48 = vld [vmem:[%s0 + $0xd8] sm:$0xff]
    %v49 = vld [vmem:[%s0 + $0xe0] sm:$0xff]
    %v50 = vld [vmem:[%s0 + $0xe8] sm:$0xff]
    %v51 = vld [vmem:[%s0 + $0xf0] sm:$0xff]
    %v52 = vld [vmem:[%s0 + $0xf8] sm:$0xff]
    %v53 = vld [vmem:[%s0 + $0x100] sm:$0xff]
    %v54 = vld [vmem:[%s0 + $0x108] sm:$0xff]
    %v55 = vld [vmem:[%s0 + $0x110] sm:$0xff]
    %v56 = vld [vmem:[%s0 + $0x118] sm:$0xff]
    %v57 = vld [vmem:[%s0 + $0x120] sm:$0xff]
    %v58 = vld [vmem:[%s0 + $0x128] sm:$0xff]
    %v59 = vld [vmem:[%s0 + $0x130] sm:$0xff]
    %v60 = vld [vmem:[%s0 + $0x138] sm:$0xff]
    %v61 = vld [vmem:[%s0 + $0x140] sm:$0xff]
    %v62 = vld [vmem:[%s0 + $0x148] sm:$0xff]
    %v63 = vld [vmem:[%s0 + $0x150] sm:$0xff]
    %v64 = vld [vmem:[%s0 + $0x158] sm:$0xff]
    %v65 = vld [vmem:[%s0 + $0x160] sm:$0xff]
    %v66 = vld [vmem:[%s0 + $0x168] sm:$0xff]
    %v67 = vld [vmem:[%s0 + $0x170] sm:$0xff]
    %v68 = vld [vmem:[%s0 + $0x178] sm:$0xff]
    %v69 = vld [vmem:[%s0 + $0x180] sm:$0xff]
    %v70 = vld [vmem:[%s0 + $0x188] sm:$0xff]
    %v71 = vld [vmem:[%s0 + $0x190] sm:$0xff]
    %v72 = vld [vmem:[%s0 + $0x198] sm:$0xff]
    %v73 = vld [vmem:[%s0 + $0x1a0] sm:$0xff]
    %v74 = vld [vmem:[%s0 + $0x1a8] sm:$0xff]
    %v75 = vld [vmem:[%s0 + $0x1b0] sm:$0xff]
    %v76 = vld [vmem:[%s0 + $0x1b8] sm:$0xff]
    %v77 = vld [vmem:[%s0 + $0x1c0] sm:$0xff]
    %v78 = vld [vmem:[%s0 + $0x1c8] sm:$0xff]
    %v79 = vld [vmem:[%s0 + $0x1d0] sm:$0xff]
    %v80 = vld [vmem:[%s0 + $0x1d8] sm:$0xff]
    %v81 = vld [vmem:[%s0 + $0x1e0] sm:$0xff]
    %v82 = vld [vmem:[%s0 + $0x1e8] sm:$0xff]
    %v83 = vld [vmem:[%s0 + $0x1f0] sm:$0xff]
    %v84 = vld [vmem:[%s0 + $0x1f8] sm:$0xff]
    %v85 = vld [vmem:[%s0 + $0x200] sm:$0xff]
    %v86 = vld [vmem:[%s0 + $0x208] sm:$0xff]
    %v87 = vld [vmem:[%s0 + $0x210] sm:$0xff]
    %v88 = vld [vmem:[%s0 + $0x218] sm:$0xff]
    %v89 = vld [vmem:[%s0 + $0x220] sm:$0xff]
    %v90 = vld [vmem:[%s0 + $0x228] sm:$0xff]
    %v91 = vld [vmem:[%s0 + $0x230] sm:$0xff]
    %v92 = vld [vmem:[%s0 + $0x238] sm:$0xff]
    %v93 = vld [vmem:[%s0 + $0x240] sm:$0xff]
    %v94 = vld [vmem:[%s0 + $0x248] sm:$0xff]
    %v95 = vld [vmem:[%s0 + $0x250] sm:$0xff]
    %v96 = vld [vmem:[%s0 + $0x258] sm:$0xff]
    %v97 = vld [vmem:[%s0 + $0x260] sm:$0xff]
    %v98 = vld [vmem:[%s0 + $0x268] sm:$0xff]
    %v99 = vld [vmem:[%s0 + $0x270] sm:$0xff]
    %v100 = vld [vmem:[%s0 + $0x278] sm:$0xff]
    %v101 = vld [vmem:[%s0 + $0x280] sm:$0xff]
    %v102 = vld [vmem:[%s0 + $0x288] sm:$0xff]
    %v103 = vld [vmem:[%s0 + $0x290] sm:$0xff]
    %v104 = vld [vmem:[%s0 + $0x298] sm:$0xff]
    %v105 = vld [vmem:[%s0 + $0x2a0] sm:$0xff]
    %v106 = vld [vmem:[%s0 + $0x2a8] sm:$0xff]
    %v107 = vld [vmem:[%s0 + $0x2b0] sm:$0xff]
    %v108 = vld [vmem:[%s0 + $0x2b8] sm:$0xff]
    %v109 = vld [vmem:[%s0 + $0x2c0] sm:$0xff]
    %v110 = vld [vmem:[%s0 + $0x2c8] sm:$0xff]
    %v111 = vld [vmem:[%s0 + $0x2d0] sm:$0xff]
    %v112 = vld [vmem:[%s0 + $0x2d8] sm:$0xff]
    %v113 = vld [vmem:[%s0 + $0x2e0] sm:$0xff]
    %v114 = vld [vmem:[%s0 + $0x2e8] sm:$0xff]
    %v115 = vld [vmem:[%s0 + $0x2f0] sm:$0xff]
    %v116 = vld [vmem:[%s0 + $0x2f8] sm:$0xff]
    %v117 = vld [vmem:[%s0 + $0x300] sm:$0xff]
    %v118 = vld [vmem:[%s0 + $0x308] sm:$0xff]
    %v119 = vld [vmem:[%s0 + $0x310] sm:$0xff]
    %v120 = vld [vmem:[%s0 + $0x318] sm:$0xff]
    %v121 = vld [vmem:[%s0 + $0x320] sm:$0xff]
    %v122 = vld [vmem:[%s0 + $0x328] sm:$0xff]
    %v123 = vld [vmem:[%s0 + $0x330] sm:$0xff]
    %v124 = vld [vmem:[%s0 + $0x338] sm:$0xff]
    %v125 = vld [vmem:[%s0 + $0x340] sm:$0xff]
    %v126 = vld [vmem:[%s0 + $0x348] sm:$0xff]
    %v127 = vld [vmem:[%s0 + $0x350] sm:$0xff]
    %v128 = vld [vmem:[%s0 + $0x358] sm:$0xff]
    %v129 = vld [vmem:[%s0 + $0x360] sm:$0xff]
    %v130 = vld [vmem:[%s0 + $0x368] sm:$0xff]
    %v131 = vld [vmem:[%s0 + $0x370] sm:$0xff]
    %v132 = vld [vmem:[%s0 + $0x378] sm:$0xff]
    %v133 = vld [vmem:[%s0 + $0x380] sm:$0xff]
    %v134 = vld [vmem:[%s0 + $0x388] sm:$0xff]
    %v135 = vld [vmem:[%s0 + $0x390] sm:$0xff]
    %v136 = vld [vmem:[%s0 + $0x398] sm:$0xff]
    %v137 = vld [vmem:[%s0 + $0x3a0] sm:$0xff]
    %v138 = vld [vmem:[%s0 + $0x3a8] sm:$0xff]
    %v139 = vld [vmem:[%s0 + $0x3b0] sm:$0xff]
    %v140 = vld [vmem:[%s0 + $0x3b8] sm:$0xff]
    %v141 = vld [vmem:[%s0 + $0x3c0] sm:$0xff]
    %v142 = vld [vmem:[%s0 + $0x3c8] sm:$0xff]
    %v143 = vld [vmem:[%s0 + $0x3d0] sm:$0xff]
    %v144 = vld [vmem:[%s0 + $0x3d8] sm:$0xff]
    %v145 = vld [vmem:[%s0 + $0x3e0] sm:$0xff]
    %v146 = vld [vmem:[%s0 + $0x3e8] sm:$0xff]
    %v147 = vld [vmem:[%s0 + $0x3f0] sm:$0xff]
    %v148 = vld [vmem:[%s0 + $0x3f8] sm:$0xff]
    %v149 = vlaneseq
    %v150 = vand.u32 %v149, 127
    %151 = vset.pattern.permute.xlu0 0
    %152 = vperm.xlu0 %151, %v21
    %v153 = vpop.permute.xlu0 %152
    %154 = vset.pattern.permute.xlu0 0
    %155 = vperm.xlu0 %154, %v22
    %v156 = vpop.permute.xlu0 %155
    %157 = vset.pattern.permute.xlu0 0
    %158 = vperm.xlu0 %157, %v23
    %v159 = vpop.permute.xlu0 %158
    %160 = vset.pattern.permute.xlu0 0
    %161 = vperm.xlu0 %160, %v24
    %v162 = vpop.permute.xlu0 %161
    %163 = vset.pattern.permute.xlu0 0
    %164 = vperm.xlu0 %163, %v25
    %v165 = vpop.permute.xlu0 %164
    %166 = vset.pattern.permute.xlu0 0
    %167 = vperm.xlu0 %166, %v26
    %v168 = vpop.permute.xlu0 %167
    %169 = vset.pattern.permute.xlu0 0
    %170 = vperm.xlu0 %169, %v27
    %v171 = vpop.permute.xlu0 %170
    %172 = vset.pattern.permute.xlu0 0
    %173 = vperm.xlu0 %172, %v28
    %v174 = vpop.permute.xlu0 %173
    %175 = vset.pattern.permute.xlu0 0
    %176 = vperm.xlu0 %175, %v29
    %v177 = vpop.permute.xlu0 %176
    %178 = vset.pattern.permute.xlu0 0
    %179 = vperm.xlu0 %178, %v30
    %v180 = vpop.permute.xlu0 %179
    %181 = vset.pattern.permute.xlu0 0
    %182 = vperm.xlu0 %181, %v31
    %v183 = vpop.permute.xlu0 %182
    %184 = vset.pattern.permute.xlu0 0
    %185 = vperm.xlu0 %184, %v32
    %v186 = vpop.permute.xlu0 %185
    %187 = vset.pattern.permute.xlu0 0
    %188 = vperm.xlu0 %187, %v33
    %v189 = vpop.permute.xlu0 %188
    %190 = vset.pattern.permute.xlu0 0
    %191 = vperm.xlu0 %190, %v34
    %v192 = vpop.permute.xlu0 %191
    %193 = vset.pattern.permute.xlu0 0
    %194 = vperm.xlu0 %193, %v35
    %v195 = vpop.permute.xlu0 %194
    %196 = vset.pattern.permute.xlu0 0
    %197 = vperm.xlu0 %196, %v36
    %v198 = vpop.permute.xlu0 %197
    %199 = vset.pattern.permute.xlu0 0
    %200 = vperm.xlu0 %199, %v37
    %v201 = vpop.permute.xlu0 %200
    %202 = vset.pattern.permute.xlu0 0
    %203 = vperm.xlu0 %202, %v38
    %v204 = vpop.permute.xlu0 %203
    %205 = vset.pattern.permute.xlu0 0
    %206 = vperm.xlu0 %205, %v39
    %v207 = vpop.permute.xlu0 %206
    %208 = vset.pattern.permute.xlu0 0
    %209 = vperm.xlu0 %208, %v40
    %v210 = vpop.permute.xlu0 %209
    %211 = vset.pattern.permute.xlu0 0
    %212 = vperm.xlu0 %211, %v41
    %v213 = vpop.permute.xlu0 %212
    %214 = vset.pattern.permute.xlu0 0
    %215 = vperm.xlu0 %214, %v42
    %v216 = vpop.permute.xlu0 %215
    %217 = vset.pattern.permute.xlu0 0
    %218 = vperm.xlu0 %217, %v43
    %v219 = vpop.permute.xlu0 %218
    %220 = vset.pattern.permute.xlu0 0
    %221 = vperm.xlu0 %220, %v44
    %v222 = vpop.permute.xlu0 %221
    %223 = vset.pattern.permute.xlu0 0
    %224 = vperm.xlu0 %223, %v45
    %v225 = vpop.permute.xlu0 %224
    %226 = vset.pattern.permute.xlu0 0
    %227 = vperm.xlu0 %226, %v46
    %v228 = vpop.permute.xlu0 %227
    %229 = vset.pattern.permute.xlu0 0
    %230 = vperm.xlu0 %229, %v47
    %v231 = vpop.permute.xlu0 %230
    %232 = vset.pattern.permute.xlu0 0
    %233 = vperm.xlu0 %232, %v48
    %v234 = vpop.permute.xlu0 %233
    %235 = vset.pattern.permute.xlu0 0
    %236 = vperm.xlu0 %235, %v49
    %v237 = vpop.permute.xlu0 %236
    %238 = vset.pattern.permute.xlu0 0
    %239 = vperm.xlu0 %238, %v50
    %v240 = vpop.permute.xlu0 %239
    %241 = vset.pattern.permute.xlu0 0
    %242 = vperm.xlu0 %241, %v51
    %v243 = vpop.permute.xlu0 %242
    %244 = vset.pattern.permute.xlu0 0
    %245 = vperm.xlu0 %244, %v52
    %v246 = vpop.permute.xlu0 %245
    %247 = vset.pattern.permute.xlu0 0
    %248 = vperm.xlu0 %247, %v53
    %v249 = vpop.permute.xlu0 %248
    %250 = vset.pattern.permute.xlu0 0
    %251 = vperm.xlu0 %250, %v54
    %v252 = vpop.permute.xlu0 %251
    %253 = vset.pattern.permute.xlu0 0
    %254 = vperm.xlu0 %253, %v55
    %v255 = vpop.permute.xlu0 %254
    %256 = vset.pattern.permute.xlu0 0
    %257 = vperm.xlu0 %256, %v56
    %v258 = vpop.permute.xlu0 %257
    %259 = vset.pattern.permute.xlu0 0
    %260 = vperm.xlu0 %259, %v57
    %v261 = vpop.permute.xlu0 %260
    %262 = vset.pattern.permute.xlu0 0
    %263 = vperm.xlu0 %262, %v58
    %v264 = vpop.permute.xlu0 %263
    %265 = vset.pattern.permute.xlu0 0
    %266 = vperm.xlu0 %265, %v59
    %v267 = vpop.permute.xlu0 %266
    %268 = vset.pattern.permute.xlu0 0
    %269 = vperm.xlu0 %268, %v60
    %v270 = vpop.permute.xlu0 %269
    %271 = vset.pattern.permute.xlu0 0
    %272 = vperm.xlu0 %271, %v61
    %v273 = vpop.permute.xlu0 %272
    %274 = vset.pattern.permute.xlu0 0
    %275 = vperm.xlu0 %274, %v62
    %v276 = vpop.permute.xlu0 %275
    %277 = vset.pattern.permute.xlu0 0
    %278 = vperm.xlu0 %277, %v63
    %v279 = vpop.permute.xlu0 %278
    %280 = vset.pattern.permute.xlu0 0
    %281 = vperm.xlu0 %280, %v64
    %v282 = vpop.permute.xlu0 %281
    %283 = vset.pattern.permute.xlu0 0
    %284 = vperm.xlu0 %283, %v65
    %v285 = vpop.permute.xlu0 %284
    %286 = vset.pattern.permute.xlu0 0
    %287 = vperm.xlu0 %286, %v66
    %v288 = vpop.permute.xlu0 %287
    %289 = vset.pattern.permute.xlu0 0
    %290 = vperm.xlu0 %289, %v67
    %v291 = vpop.permute.xlu0 %290
    %292 = vset.pattern.permute.xlu0 0
    %293 = vperm.xlu0 %292, %v68
    %v294 = vpop.permute.xlu0 %293
    %295 = vset.pattern.permute.xlu0 0
    %296 = vperm.xlu0 %295, %v69
    %v297 = vpop.permute.xlu0 %296
    %298 = vset.pattern.permute.xlu0 0
    %299 = vperm.xlu0 %298, %v70
    %v300 = vpop.permute.xlu0 %299
    %301 = vset.pattern.permute.xlu0 0
    %302 = vperm.xlu0 %301, %v71
    %v303 = vpop.permute.xlu0 %302
    %304 = vset.pattern.permute.xlu0 0
    %305 = vperm.xlu0 %304, %v72
    %v306 = vpop.permute.xlu0 %305
    %307 = vset.pattern.permute.xlu0 0
    %308 = vperm.xlu0 %307, %v73
    %v309 = vpop.permute.xlu0 %308
    %310 = vset.pattern.permute.xlu0 0
    %311 = vperm.xlu0 %310, %v74
    %v312 = vpop.permute.xlu0 %311
    %313 = vset.pattern.permute.xlu0 0
    %314 = vperm.xlu0 %313, %v75
    %v315 = vpop.permute.xlu0 %314
    %316 = vset.pattern.permute.xlu0 0
    %317 = vperm.xlu0 %316, %v76
    %v318 = vpop.permute.xlu0 %317
    %319 = vset.pattern.permute.xlu0 0
    %320 = vperm.xlu0 %319, %v77
    %v321 = vpop.permute.xlu0 %320
    %322 = vset.pattern.permute.xlu0 0
    %323 = vperm.xlu0 %322, %v78
    %v324 = vpop.permute.xlu0 %323
    %325 = vset.pattern.permute.xlu0 0
    %326 = vperm.xlu0 %325, %v79
    %v327 = vpop.permute.xlu0 %326
    %328 = vset.pattern.permute.xlu0 0
    %329 = vperm.xlu0 %328, %v80
    %v330 = vpop.permute.xlu0 %329
    %331 = vset.pattern.permute.xlu0 0
    %332 = vperm.xlu0 %331, %v81
    %v333 = vpop.permute.xlu0 %332
    %334 = vset.pattern.permute.xlu0 0
    %335 = vperm.xlu0 %334, %v82
    %v336 = vpop.permute.xlu0 %335
    %337 = vset.pattern.permute.xlu0 0
    %338 = vperm.xlu0 %337, %v83
    %v339 = vpop.permute.xlu0 %338
    %340 = vset.pattern.permute.xlu0 0
    %341 = vperm.xlu0 %340, %v84
    %v342 = vpop.permute.xlu0 %341
    %343 = vset.pattern.permute.xlu0 0
    %344 = vperm.xlu0 %343, %v85
    %v345 = vpop.permute.xlu0 %344
    %346 = vset.pattern.permute.xlu0 0
    %347 = vperm.xlu0 %346, %v86
    %v348 = vpop.permute.xlu0 %347
    %349 = vset.pattern.permute.xlu0 0
    %350 = vperm.xlu0 %349, %v87
    %v351 = vpop.permute.xlu0 %350
    %352 = vset.pattern.permute.xlu0 0
    %353 = vperm.xlu0 %352, %v88
    %v354 = vpop.permute.xlu0 %353
    %355 = vset.pattern.permute.xlu0 0
    %356 = vperm.xlu0 %355, %v89
    %v357 = vpop.permute.xlu0 %356
    %358 = vset.pattern.permute.xlu0 0
    %359 = vperm.xlu0 %358, %v90
    %v360 = vpop.permute.xlu0 %359
    %361 = vset.pattern.permute.xlu0 0
    %362 = vperm.xlu0 %361, %v91
    %v363 = vpop.permute.xlu0 %362
    %364 = vset.pattern.permute.xlu0 0
    %365 = vperm.xlu0 %364, %v92
    %v366 = vpop.permute.xlu0 %365
    %367 = vset.pattern.permute.xlu0 0
    %368 = vperm.xlu0 %367, %v93
    %v369 = vpop.permute.xlu0 %368
    %370 = vset.pattern.permute.xlu0 0
    %371 = vperm.xlu0 %370, %v94
    %v372 = vpop.permute.xlu0 %371
    %373 = vset.pattern.permute.xlu0 0
    %374 = vperm.xlu0 %373, %v95
    %v375 = vpop.permute.xlu0 %374
    %376 = vset.pattern.permute.xlu0 0
    %377 = vperm.xlu0 %376, %v96
    %v378 = vpop.permute.xlu0 %377
    %379 = vset.pattern.permute.xlu0 0
    %380 = vperm.xlu0 %379, %v97
    %v381 = vpop.permute.xlu0 %380
    %382 = vset.pattern.permute.xlu0 0
    %383 = vperm.xlu0 %382, %v98
    %v384 = vpop.permute.xlu0 %383
    %385 = vset.pattern.permute.xlu0 0
    %386 = vperm.xlu0 %385, %v99
    %v387 = vpop.permute.xlu0 %386
    %388 = vset.pattern.permute.xlu0 0
    %389 = vperm.xlu0 %388, %v100
    %v390 = vpop.permute.xlu0 %389
    %391 = vset.pattern.permute.xlu0 0
    %392 = vperm.xlu0 %391, %v101
    %v393 = vpop.permute.xlu0 %392
    %394 = vset.pattern.permute.xlu0 0
    %395 = vperm.xlu0 %394, %v102
    %v396 = vpop.permute.xlu0 %395
    %397 = vset.pattern.permute.xlu0 0
    %398 = vperm.xlu0 %397, %v103
    %v399 = vpop.permute.xlu0 %398
    %400 = vset.pattern.permute.xlu0 0
    %401 = vperm.xlu0 %400, %v104
    %v402 = vpop.permute.xlu0 %401
    %403 = vset.pattern.permute.xlu0 0
    %404 = vperm.xlu0 %403, %v105
    %v405 = vpop.permute.xlu0 %404
    %406 = vset.pattern.permute.xlu0 0
    %407 = vperm.xlu0 %406, %v106
    %v408 = vpop.permute.xlu0 %407
    %409 = vset.pattern.permute.xlu0 0
    %410 = vperm.xlu0 %409, %v107
    %v411 = vpop.permute.xlu0 %410
    %412 = vset.pattern.permute.xlu0 0
    %413 = vperm.xlu0 %412, %v108
    %v414 = vpop.permute.xlu0 %413
    %415 = vset.pattern.permute.xlu0 0
    %416 = vperm.xlu0 %415, %v109
    %v417 = vpop.permute.xlu0 %416
    %418 = vset.pattern.permute.xlu0 0
    %419 = vperm.xlu0 %418, %v110
    %v420 = vpop.permute.xlu0 %419
    %421 = vset.pattern.permute.xlu0 0
    %422 = vperm.xlu0 %421, %v111
    %v423 = vpop.permute.xlu0 %422
    %424 = vset.pattern.permute.xlu0 0
    %425 = vperm.xlu0 %424, %v112
    %v426 = vpop.permute.xlu0 %425
    %427 = vset.pattern.permute.xlu0 0
    %428 = vperm.xlu0 %427, %v113
    %v429 = vpop.permute.xlu0 %428
    %430 = vset.pattern.permute.xlu0 0
    %431 = vperm.xlu0 %430, %v114
    %v432 = vpop.permute.xlu0 %431
    %433 = vset.pattern.permute.xlu0 0
    %434 = vperm.xlu0 %433, %v115
    %v435 = vpop.permute.xlu0 %434
    %436 = vset.pattern.permute.xlu0 0
    %437 = vperm.xlu0 %436, %v116
    %v438 = vpop.permute.xlu0 %437
    %439 = vset.pattern.permute.xlu0 0
    %440 = vperm.xlu0 %439, %v117
    %v441 = vpop.permute.xlu0 %440
    %442 = vset.pattern.permute.xlu0 0
    %443 = vperm.xlu0 %442, %v118
    %v444 = vpop.permute.xlu0 %443
    %445 = vset.pattern.permute.xlu0 0
    %446 = vperm.xlu0 %445, %v119
    %v447 = vpop.permute.xlu0 %446
    %448 = vset.pattern.permute.xlu0 0
    %449 = vperm.xlu0 %448, %v120
    %v450 = vpop.permute.xlu0 %449
    %451 = vset.pattern.permute.xlu0 0
    %452 = vperm.xlu0 %451, %v121
    %v453 = vpop.permute.xlu0 %452
    %454 = vset.pattern.permute.xlu0 0
    %455 = vperm.xlu0 %454, %v122
    %v456 = vpop.permute.xlu0 %455
    %457 = vset.pattern.permute.xlu0 0
    %458 = vperm.xlu0 %457, %v123
    %v459 = vpop.permute.xlu0 %458
    %460 = vset.pattern.permute.xlu0 0
    %461 = vperm.xlu0 %460, %v124
    %v462 = vpop.permute.xlu0 %461
    %463 = vset.pattern.permute.xlu0 0
    %464 = vperm.xlu0 %463, %v125
    %v465 = vpop.permute.xlu0 %464
    %466 = vset.pattern.permute.xlu0 0
    %467 = vperm.xlu0 %466, %v126
    %v468 = vpop.permute.xlu0 %467
    %469 = vset.pattern.permute.xlu0 0
    %470 = vperm.xlu0 %469, %v127
    %v471 = vpop.permute.xlu0 %470
    %472 = vset.pattern.permute.xlu0 0
    %473 = vperm.xlu0 %472, %v128
    %v474 = vpop.permute.xlu0 %473
    %475 = vset.pattern.permute.xlu0 0
    %476 = vperm.xlu0 %475, %v129
    %v477 = vpop.permute.xlu0 %476
    %478 = vset.pattern.permute.xlu0 0
    %479 = vperm.xlu0 %478, %v130
    %v480 = vpop.permute.xlu0 %479
    %481 = vset.pattern.permute.xlu0 0
    %482 = vperm.xlu0 %481, %v131
    %v483 = vpop.permute.xlu0 %482
    %484 = vset.pattern.permute.xlu0 0
    %485 = vperm.xlu0 %484, %v132
    %v486 = vpop.permute.xlu0 %485
    %487 = vset.pattern.permute.xlu0 0
    %488 = vperm.xlu0 %487, %v133
    %v489 = vpop.permute.xlu0 %488
    %490 = vset.pattern.permute.xlu0 0
    %491 = vperm.xlu0 %490, %v134
    %v492 = vpop.permute.xlu0 %491
    %493 = vset.pattern.permute.xlu0 0
    %494 = vperm.xlu0 %493, %v135
    %v495 = vpop.permute.xlu0 %494
    %496 = vset.pattern.permute.xlu0 0
    %497 = vperm.xlu0 %496, %v136
    %v498 = vpop.permute.xlu0 %497
    %499 = vset.pattern.permute.xlu0 0
    %500 = vperm.xlu0 %499, %v137
    %v501 = vpop.permute.xlu0 %500
    %502 = vset.pattern.permute.xlu0 0
    %503 = vperm.xlu0 %502, %v138
    %v504 = vpop.permute.xlu0 %503
    %505 = vset.pattern.permute.xlu0 0
    %506 = vperm.xlu0 %505, %v139
    %v507 = vpop.permute.xlu0 %506
    %508 = vset.pattern.permute.xlu0 0
    %509 = vperm.xlu0 %508, %v140
    %v510 = vpop.permute.xlu0 %509
    %511 = vset.pattern.permute.xlu0 0
    %512 = vperm.xlu0 %511, %v141
    %v513 = vpop.permute.xlu0 %512
    %514 = vset.pattern.permute.xlu0 0
    %515 = vperm.xlu0 %514, %v142
    %v516 = vpop.permute.xlu0 %515
    %517 = vset.pattern.permute.xlu0 0
    %518 = vperm.xlu0 %517, %v143
    %v519 = vpop.permute.xlu0 %518
    %520 = vset.pattern.permute.xlu0 0
    %521 = vperm.xlu0 %520, %v144
    %v522 = vpop.permute.xlu0 %521
    %523 = vset.pattern.permute.xlu0 0
    %524 = vperm.xlu0 %523, %v145
    %v525 = vpop.permute.xlu0 %524
    %526 = vset.pattern.permute.xlu0 0
    %527 = vperm.xlu0 %526, %v146
    %v528 = vpop.permute.xlu0 %527
    %529 = vset.pattern.permute.xlu0 0
    %530 = vperm.xlu0 %529, %v147
    %v531 = vpop.permute.xlu0 %530
    %532 = vset.pattern.permute.xlu0 0
    %533 = vperm.xlu0 %532, %v148
    %v534 = vpop.permute.xlu0 %533
    %vm535 = vcmp.eq.s32.totalorder %v150, %v153
    %vm536 = vcmp.eq.s32.totalorder %v150, %v156
    %vm537 = vcmp.eq.s32.totalorder %v150, %v159
    %vm538 = vcmp.eq.s32.totalorder %v150, %v162
    %vm539 = vcmp.eq.s32.totalorder %v150, %v165
    %vm540 = vcmp.eq.s32.totalorder %v150, %v168
    %vm541 = vcmp.eq.s32.totalorder %v150, %v171
    %vm542 = vcmp.eq.s32.totalorder %v150, %v174
    %vm543 = vcmp.eq.s32.totalorder %v150, %v177
    %vm544 = vcmp.eq.s32.totalorder %v150, %v180
    %vm545 = vcmp.eq.s32.totalorder %v150, %v183
    %vm546 = vcmp.eq.s32.totalorder %v150, %v186
    %vm547 = vcmp.eq.s32.totalorder %v150, %v189
    %vm548 = vcmp.eq.s32.totalorder %v150, %v192
    %vm549 = vcmp.eq.s32.totalorder %v150, %v195
    %vm550 = vcmp.eq.s32.totalorder %v150, %v198
    %vm551 = vcmp.eq.s32.totalorder %v150, %v201
    %vm552 = vcmp.eq.s32.totalorder %v150, %v204
    %vm553 = vcmp.eq.s32.totalorder %v150, %v207
    %vm554 = vcmp.eq.s32.totalorder %v150, %v210
    %vm555 = vcmp.eq.s32.totalorder %v150, %v213
    %vm556 = vcmp.eq.s32.totalorder %v150, %v216
    %vm557 = vcmp.eq.s32.totalorder %v150, %v219
    %vm558 = vcmp.eq.s32.totalorder %v150, %v222
    %vm559 = vcmp.eq.s32.totalorder %v150, %v225
    %vm560 = vcmp.eq.s32.totalorder %v150, %v228
    %vm561 = vcmp.eq.s32.totalorder %v150, %v231
    %vm562 = vcmp.eq.s32.totalorder %v150, %v234
    %vm563 = vcmp.eq.s32.totalorder %v150, %v237
    %vm564 = vcmp.eq.s32.totalorder %v150, %v240
    %vm565 = vcmp.eq.s32.totalorder %v150, %v243
    %vm566 = vcmp.eq.s32.totalorder %v150, %v246
    %vm567 = vcmp.eq.s32.totalorder %v150, %v249
    %vm568 = vcmp.eq.s32.totalorder %v150, %v252
    %vm569 = vcmp.eq.s32.totalorder %v150, %v255
    %vm570 = vcmp.eq.s32.totalorder %v150, %v258
    %vm571 = vcmp.eq.s32.totalorder %v150, %v261
    %vm572 = vcmp.eq.s32.totalorder %v150, %v264
    %vm573 = vcmp.eq.s32.totalorder %v150, %v267
    %vm574 = vcmp.eq.s32.totalorder %v150, %v270
    %vm575 = vcmp.eq.s32.totalorder %v150, %v273
    %vm576 = vcmp.eq.s32.totalorder %v150, %v276
    %vm577 = vcmp.eq.s32.totalorder %v150, %v279
    %vm578 = vcmp.eq.s32.totalorder %v150, %v282
    %vm579 = vcmp.eq.s32.totalorder %v150, %v285
    %vm580 = vcmp.eq.s32.totalorder %v150, %v288
    %vm581 = vcmp.eq.s32.totalorder %v150, %v291
    %vm582 = vcmp.eq.s32.totalorder %v150, %v294
    %vm583 = vcmp.eq.s32.totalorder %v150, %v297
    %vm584 = vcmp.eq.s32.totalorder %v150, %v300
    %vm585 = vcmp.eq.s32.totalorder %v150, %v303
    %vm586 = vcmp.eq.s32.totalorder %v150, %v306
    %vm587 = vcmp.eq.s32.totalorder %v150, %v309
    %vm588 = vcmp.eq.s32.totalorder %v150, %v312
    %vm589 = vcmp.eq.s32.totalorder %v150, %v315
    %vm590 = vcmp.eq.s32.totalorder %v150, %v318
    %vm591 = vcmp.eq.s32.totalorder %v150, %v321
    %vm592 = vcmp.eq.s32.totalorder %v150, %v324
    %vm593 = vcmp.eq.s32.totalorder %v150, %v327
    %vm594 = vcmp.eq.s32.totalorder %v150, %v330
    %vm595 = vcmp.eq.s32.totalorder %v150, %v333
    %vm596 = vcmp.eq.s32.totalorder %v150, %v336
    %vm597 = vcmp.eq.s32.totalorder %v150, %v339
    %vm598 = vcmp.eq.s32.totalorder %v150, %v342
    %vm599 = vcmp.eq.s32.totalorder %v150, %v345
    %vm600 = vcmp.eq.s32.totalorder %v150, %v348
    %vm601 = vcmp.eq.s32.totalorder %v150, %v351
    %vm602 = vcmp.eq.s32.totalorder %v150, %v354
    %vm603 = vcmp.eq.s32.totalorder %v150, %v357
    %vm604 = vcmp.eq.s32.totalorder %v150, %v360
    %vm605 = vcmp.eq.s32.totalorder %v150, %v363
    %vm606 = vcmp.eq.s32.totalorder %v150, %v366
    %vm607 = vcmp.eq.s32.totalorder %v150, %v369
    %vm608 = vcmp.eq.s32.totalorder %v150, %v372
    %vm609 = vcmp.eq.s32.totalorder %v150, %v375
    %vm610 = vcmp.eq.s32.totalorder %v150, %v378
    %vm611 = vcmp.eq.s32.totalorder %v150, %v381
    %vm612 = vcmp.eq.s32.totalorder %v150, %v384
    %vm613 = vcmp.eq.s32.totalorder %v150, %v387
    %vm614 = vcmp.eq.s32.totalorder %v150, %v390
    %vm615 = vcmp.eq.s32.totalorder %v150, %v393
    %vm616 = vcmp.eq.s32.totalorder %v150, %v396
    %vm617 = vcmp.eq.s32.totalorder %v150, %v399
    %vm618 = vcmp.eq.s32.totalorder %v150, %v402
    %vm619 = vcmp.eq.s32.totalorder %v150, %v405
    %vm620 = vcmp.eq.s32.totalorder %v150, %v408
    %vm621 = vcmp.eq.s32.totalorder %v150, %v411
    %vm622 = vcmp.eq.s32.totalorder %v150, %v414
    %vm623 = vcmp.eq.s32.totalorder %v150, %v417
    %vm624 = vcmp.eq.s32.totalorder %v150, %v420
    %vm625 = vcmp.eq.s32.totalorder %v150, %v423
    %vm626 = vcmp.eq.s32.totalorder %v150, %v426
    %vm627 = vcmp.eq.s32.totalorder %v150, %v429
    %vm628 = vcmp.eq.s32.totalorder %v150, %v432
    %vm629 = vcmp.eq.s32.totalorder %v150, %v435
    %vm630 = vcmp.eq.s32.totalorder %v150, %v438
    %vm631 = vcmp.eq.s32.totalorder %v150, %v441
    %vm632 = vcmp.eq.s32.totalorder %v150, %v444
    %vm633 = vcmp.eq.s32.totalorder %v150, %v447
    %vm634 = vcmp.eq.s32.totalorder %v150, %v450
    %vm635 = vcmp.eq.s32.totalorder %v150, %v453
    %vm636 = vcmp.eq.s32.totalorder %v150, %v456
    %vm637 = vcmp.eq.s32.totalorder %v150, %v459
    %vm638 = vcmp.eq.s32.totalorder %v150, %v462
    %vm639 = vcmp.eq.s32.totalorder %v150, %v465
    %vm640 = vcmp.eq.s32.totalorder %v150, %v468
    %vm641 = vcmp.eq.s32.totalorder %v150, %v471
    %vm642 = vcmp.eq.s32.totalorder %v150, %v474
    %vm643 = vcmp.eq.s32.totalorder %v150, %v477
    %vm644 = vcmp.eq.s32.totalorder %v150, %v480
    %vm645 = vcmp.eq.s32.totalorder %v150, %v483
    %vm646 = vcmp.eq.s32.totalorder %v150, %v486
    %vm647 = vcmp.eq.s32.totalorder %v150, %v489
    %vm648 = vcmp.eq.s32.totalorder %v150, %v492
    %vm649 = vcmp.eq.s32.totalorder %v150, %v495
    %vm650 = vcmp.eq.s32.totalorder %v150, %v498
    %vm651 = vcmp.eq.s32.totalorder %v150, %v501
    %vm652 = vcmp.eq.s32.totalorder %v150, %v504
    %vm653 = vcmp.eq.s32.totalorder %v150, %v507
    %vm654 = vcmp.eq.s32.totalorder %v150, %v510
    %vm655 = vcmp.eq.s32.totalorder %v150, %v513
    %vm656 = vcmp.eq.s32.totalorder %v150, %v516
    %vm657 = vcmp.eq.s32.totalorder %v150, %v519
    %vm658 = vcmp.eq.s32.totalorder %v150, %v522
    %vm659 = vcmp.eq.s32.totalorder %v150, %v525
    %vm660 = vcmp.eq.s32.totalorder %v150, %v528
    %vm661 = vcmp.eq.s32.totalorder %v150, %v531
    %vm662 = vcmp.eq.s32.totalorder %v150, %v534
    %v663 = vsel %vm535, 1, 0
    %v664 = vsel %vm536, 1, 0
    %v665 = vsel %vm537, 1, 0
    %v666 = vsel %vm538, 1, 0
    %v667 = vsel %vm539, 1, 0
    %v668 = vsel %vm540, 1, 0
    %v669 = vsel %vm541, 1, 0
    %v670 = vsel %vm542, 1, 0
    %v671 = vsel %vm543, 1, 0
    %v672 = vsel %vm544, 1, 0
    %v673 = vsel %vm545, 1, 0
    %v674 = vsel %vm546, 1, 0
    %v675 = vsel %vm547, 1, 0
    %v676 = vsel %vm548, 1, 0
    %v677 = vsel %vm549, 1, 0
    %v678 = vsel %vm550, 1, 0
    %v679 = vsel %vm551, 1, 0
    %v680 = vsel %vm552, 1, 0
    %v681 = vsel %vm553, 1, 0
    %v682 = vsel %vm554, 1, 0
    %v683 = vsel %vm555, 1, 0
    %v684 = vsel %vm556, 1, 0
    %v685 = vsel %vm557, 1, 0
    %v686 = vsel %vm558, 1, 0
    %v687 = vsel %vm559, 1, 0
    %v688 = vsel %vm560, 1, 0
    %v689 = vsel %vm561, 1, 0
    %v690 = vsel %vm562, 1, 0
    %v691 = vsel %vm563, 1, 0
    %v692 = vsel %vm564, 1, 0
    %v693 = vsel %vm565, 1, 0
    %v694 = vsel %vm566, 1, 0
    %v695 = vsel %vm567, 1, 0
    %v696 = vsel %vm568, 1, 0
    %v697 = vsel %vm569, 1, 0
    %v698 = vsel %vm570, 1, 0
    %v699 = vsel %vm571, 1, 0
    %v700 = vsel %vm572, 1, 0
    %v701 = vsel %vm573, 1, 0
    %v702 = vsel %vm574, 1, 0
    %v703 = vsel %vm575, 1, 0
    %v704 = vsel %vm576, 1, 0
    %v705 = vsel %vm577, 1, 0
    %v706 = vsel %vm578, 1, 0
    %v707 = vsel %vm579, 1, 0
    %v708 = vsel %vm580, 1, 0
    %v709 = vsel %vm581, 1, 0
    %v710 = vsel %vm582, 1, 0
    %v711 = vsel %vm583, 1, 0
    %v712 = vsel %vm584, 1, 0
    %v713 = vsel %vm585, 1, 0
    %v714 = vsel %vm586, 1, 0
    %v715 = vsel %vm587, 1, 0
    %v716 = vsel %vm588, 1, 0
    %v717 = vsel %vm589, 1, 0
    %v718 = vsel %vm590, 1, 0
    %v719 = vsel %vm591, 1, 0
    %v720 = vsel %vm592, 1, 0
    %v721 = vsel %vm593, 1, 0
    %v722 = vsel %vm594, 1, 0
    %v723 = vsel %vm595, 1, 0
    %v724 = vsel %vm596, 1, 0
    %v725 = vsel %vm597, 1, 0
    %v726 = vsel %vm598, 1, 0
    %v727 = vsel %vm599, 1, 0
    %v728 = vsel %vm600, 1, 0
    %v729 = vsel %vm601, 1, 0
    %v730 = vsel %vm602, 1, 0
    %v731 = vsel %vm603, 1, 0
    %v732 = vsel %vm604, 1, 0
    %v733 = vsel %vm605, 1, 0
    %v734 = vsel %vm606, 1, 0
    %v735 = vsel %vm607, 1, 0
    %v736 = vsel %vm608, 1, 0
    %v737 = vsel %vm609, 1, 0
    %v738 = vsel %vm610, 1, 0
    %v739 = vsel %vm611, 1, 0
    %v740 = vsel %vm612, 1, 0
    %v741 = vsel %vm613, 1, 0
    %v742 = vsel %vm614, 1, 0
    %v743 = vsel %vm615, 1, 0
    %v744 = vsel %vm616, 1, 0
    %v745 = vsel %vm617, 1, 0
    %v746 = vsel %vm618, 1, 0
    %v747 = vsel %vm619, 1, 0
    %v748 = vsel %vm620, 1, 0
    %v749 = vsel %vm621, 1, 0
    %v750 = vsel %vm622, 1, 0
    %v751 = vsel %vm623, 1, 0
    %v752 = vsel %vm624, 1, 0
    %v753 = vsel %vm625, 1, 0
    %v754 = vsel %vm626, 1, 0
    %v755 = vsel %vm627, 1, 0
    %v756 = vsel %vm628, 1, 0
    %v757 = vsel %vm629, 1, 0
    %v758 = vsel %vm630, 1, 0
    %v759 = vsel %vm631, 1, 0
    %v760 = vsel %vm632, 1, 0
    %v761 = vsel %vm633, 1, 0
    %v762 = vsel %vm634, 1, 0
    %v763 = vsel %vm635, 1, 0
    %v764 = vsel %vm636, 1, 0
    %v765 = vsel %vm637, 1, 0
    %v766 = vsel %vm638, 1, 0
    %v767 = vsel %vm639, 1, 0
    %v768 = vsel %vm640, 1, 0
    %v769 = vsel %vm641, 1, 0
    %v770 = vsel %vm642, 1, 0
    %v771 = vsel %vm643, 1, 0
    %v772 = vsel %vm644, 1, 0
    %v773 = vsel %vm645, 1, 0
    %v774 = vsel %vm646, 1, 0
    %v775 = vsel %vm647, 1, 0
    %v776 = vsel %vm648, 1, 0
    %v777 = vsel %vm649, 1, 0
    %v778 = vsel %vm650, 1, 0
    %v779 = vsel %vm651, 1, 0
    %v780 = vsel %vm652, 1, 0
    %v781 = vsel %vm653, 1, 0
    %v782 = vsel %vm654, 1, 0
    %v783 = vsel %vm655, 1, 0
    %v784 = vsel %vm656, 1, 0
    %v785 = vsel %vm657, 1, 0
    %v786 = vsel %vm658, 1, 0
    %v787 = vsel %vm659, 1, 0
    %v788 = vsel %vm660, 1, 0
    %v789 = vsel %vm661, 1, 0
    %v790 = vsel %vm662, 1, 0
    %v791 = vcvt.s32.f32 %v663
    %v792 = vcvt.s32.f32 %v664
    %v793 = vcvt.s32.f32 %v665
    %v794 = vcvt.s32.f32 %v666
    %v795 = vcvt.s32.f32 %v667
    %v796 = vcvt.s32.f32 %v668
    %v797 = vcvt.s32.f32 %v669
    %v798 = vcvt.s32.f32 %v670
    %v799 = vcvt.s32.f32 %v671
    %v800 = vcvt.s32.f32 %v672
    %v801 = vcvt.s32.f32 %v673
    %v802 = vcvt.s32.f32 %v674
    %v803 = vcvt.s32.f32 %v675
    %v804 = vcvt.s32.f32 %v676
    %v805 = vcvt.s32.f32 %v677
    %v806 = vcvt.s32.f32 %v678
    %v807 = vcvt.s32.f32 %v679
    %v808 = vcvt.s32.f32 %v680
    %v809 = vcvt.s32.f32 %v681
    %v810 = vcvt.s32.f32 %v682
    %v811 = vcvt.s32.f32 %v683
    %v812 = vcvt.s32.f32 %v684
    %v813 = vcvt.s32.f32 %v685
    %v814 = vcvt.s32.f32 %v686
    %v815 = vcvt.s32.f32 %v687
    %v816 = vcvt.s32.f32 %v688
    %v817 = vcvt.s32.f32 %v689
    %v818 = vcvt.s32.f32 %v690
    %v819 = vcvt.s32.f32 %v691
    %v820 = vcvt.s32.f32 %v692
    %v821 = vcvt.s32.f32 %v693
    %v822 = vcvt.s32.f32 %v694
    %v823 = vcvt.s32.f32 %v695
    %v824 = vcvt.s32.f32 %v696
    %v825 = vcvt.s32.f32 %v697
    %v826 = vcvt.s32.f32 %v698
    %v827 = vcvt.s32.f32 %v699
    %v828 = vcvt.s32.f32 %v700
    %v829 = vcvt.s32.f32 %v701
    %v830 = vcvt.s32.f32 %v702
    %v831 = vcvt.s32.f32 %v703
    %v832 = vcvt.s32.f32 %v704
    %v833 = vcvt.s32.f32 %v705
    %v834 = vcvt.s32.f32 %v706
    %v835 = vcvt.s32.f32 %v707
    %v836 = vcvt.s32.f32 %v708
    %v837 = vcvt.s32.f32 %v709
    %v838 = vcvt.s32.f32 %v710
    %v839 = vcvt.s32.f32 %v711
    %v840 = vcvt.s32.f32 %v712
    %v841 = vcvt.s32.f32 %v713
    %v842 = vcvt.s32.f32 %v714
    %v843 = vcvt.s32.f32 %v715
    %v844 = vcvt.s32.f32 %v716
    %v845 = vcvt.s32.f32 %v717
    %v846 = vcvt.s32.f32 %v718
    %v847 = vcvt.s32.f32 %v719
    %v848 = vcvt.s32.f32 %v720
    %v849 = vcvt.s32.f32 %v721
    %v850 = vcvt.s32.f32 %v722
    %v851 = vcvt.s32.f32 %v723
    %v852 = vcvt.s32.f32 %v724
    %v853 = vcvt.s32.f32 %v725
    %v854 = vcvt.s32.f32 %v726
    %v855 = vcvt.s32.f32 %v727
    %v856 = vcvt.s32.f32 %v728
    %v857 = vcvt.s32.f32 %v729
    %v858 = vcvt.s32.f32 %v730
    %v859 = vcvt.s32.f32 %v731
    %v860 = vcvt.s32.f32 %v732
    %v861 = vcvt.s32.f32 %v733
    %v862 = vcvt.s32.f32 %v734
    %v863 = vcvt.s32.f32 %v735
    %v864 = vcvt.s32.f32 %v736
    %v865 = vcvt.s32.f32 %v737
    %v866 = vcvt.s32.f32 %v738
    %v867 = vcvt.s32.f32 %v739
    %v868 = vcvt.s32.f32 %v740
    %v869 = vcvt.s32.f32 %v741
    %v870 = vcvt.s32.f32 %v742
    %v871 = vcvt.s32.f32 %v743
    %v872 = vcvt.s32.f32 %v744
    %v873 = vcvt.s32.f32 %v745
    %v874 = vcvt.s32.f32 %v746
    %v875 = vcvt.s32.f32 %v747
    %v876 = vcvt.s32.f32 %v748
    %v877 = vcvt.s32.f32 %v749
    %v878 = vcvt.s32.f32 %v750
    %v879 = vcvt.s32.f32 %v751
    %v880 = vcvt.s32.f32 %v752
    %v881 = vcvt.s32.f32 %v753
    %v882 = vcvt.s32.f32 %v754
    %v883 = vcvt.s32.f32 %v755
    %v884 = vcvt.s32.f32 %v756
    %v885 = vcvt.s32.f32 %v757
    %v886 = vcvt.s32.f32 %v758
    %v887 = vcvt.s32.f32 %v759
    %v888 = vcvt.s32.f32 %v760
    %v889 = vcvt.s32.f32 %v761
    %v890 = vcvt.s32.f32 %v762
    %v891 = vcvt.s32.f32 %v763
    %v892 = vcvt.s32.f32 %v764
    %v893 = vcvt.s32.f32 %v765
    %v894 = vcvt.s32.f32 %v766
    %v895 = vcvt.s32.f32 %v767
    %v896 = vcvt.s32.f32 %v768
    %v897 = vcvt.s32.f32 %v769
    %v898 = vcvt.s32.f32 %v770
    %v899 = vcvt.s32.f32 %v771
    %v900 = vcvt.s32.f32 %v772
    %v901 = vcvt.s32.f32 %v773
    %v902 = vcvt.s32.f32 %v774
    %v903 = vcvt.s32.f32 %v775
    %v904 = vcvt.s32.f32 %v776
    %v905 = vcvt.s32.f32 %v777
    %v906 = vcvt.s32.f32 %v778
    %v907 = vcvt.s32.f32 %v779
    %v908 = vcvt.s32.f32 %v780
    %v909 = vcvt.s32.f32 %v781
    %v910 = vcvt.s32.f32 %v782
    %v911 = vcvt.s32.f32 %v783
    %v912 = vcvt.s32.f32 %v784
    %v913 = vcvt.s32.f32 %v785
    %v914 = vcvt.s32.f32 %v786
    %v915 = vcvt.s32.f32 %v787
    %v916 = vcvt.s32.f32 %v788
    %v917 = vcvt.s32.f32 %v789
    %v918 = vcvt.s32.f32 %v790
    %v919 = vpack.c.bf16 %v792, %v791
    %v920 = vpack.c.bf16 %v794, %v793
    %v921 = vpack.c.bf16 %v796, %v795
    %v922 = vpack.c.bf16 %v798, %v797
    %v923 = vpack.c.bf16 %v800, %v799
    %v924 = vpack.c.bf16 %v802, %v801
    %v925 = vpack.c.bf16 %v804, %v803
    %v926 = vpack.c.bf16 %v806, %v805
    %v927 = vpack.c.bf16 %v808, %v807
    %v928 = vpack.c.bf16 %v810, %v809
    %v929 = vpack.c.bf16 %v812, %v811
    %v930 = vpack.c.bf16 %v814, %v813
    %v931 = vpack.c.bf16 %v816, %v815
    %v932 = vpack.c.bf16 %v818, %v817
    %v933 = vpack.c.bf16 %v820, %v819
    %v934 = vpack.c.bf16 %v822, %v821
    %v935 = vpack.c.bf16 %v824, %v823
    %v936 = vpack.c.bf16 %v826, %v825
    %v937 = vpack.c.bf16 %v828, %v827
    %v938 = vpack.c.bf16 %v830, %v829
    %v939 = vpack.c.bf16 %v832, %v831
    %v940 = vpack.c.bf16 %v834, %v833
    %v941 = vpack.c.bf16 %v836, %v835
    %v942 = vpack.c.bf16 %v838, %v837
    %v943 = vpack.c.bf16 %v840, %v839
    %v944 = vpack.c.bf16 %v842, %v841
    %v945 = vpack.c.bf16 %v844, %v843
    %v946 = vpack.c.bf16 %v846, %v845
    %v947 = vpack.c.bf16 %v848, %v847
    %v948 = vpack.c.bf16 %v850, %v849
    %v949 = vpack.c.bf16 %v852, %v851
    %v950 = vpack.c.bf16 %v854, %v853
    %v951 = vpack.c.bf16 %v856, %v855
    %v952 = vpack.c.bf16 %v858, %v857
    %v953 = vpack.c.bf16 %v860, %v859
    %v954 = vpack.c.bf16 %v862, %v861
    %v955 = vpack.c.bf16 %v864, %v863
    %v956 = vpack.c.bf16 %v866, %v865
    %v957 = vpack.c.bf16 %v868, %v867
    %v958 = vpack.c.bf16 %v870, %v869
    %v959 = vpack.c.bf16 %v872, %v871
    %v960 = vpack.c.bf16 %v874, %v873
    %v961 = vpack.c.bf16 %v876, %v875
    %v962 = vpack.c.bf16 %v878, %v877
    %v963 = vpack.c.bf16 %v880, %v879
    %v964 = vpack.c.bf16 %v882, %v881
    %v965 = vpack.c.bf16 %v884, %v883
    %v966 = vpack.c.bf16 %v886, %v885
    %v967 = vpack.c.bf16 %v888, %v887
    %v968 = vpack.c.bf16 %v890, %v889
    %v969 = vpack.c.bf16 %v892, %v891
    %v970 = vpack.c.bf16 %v894, %v893
    %v971 = vpack.c.bf16 %v896, %v895
    %v972 = vpack.c.bf16 %v898, %v897
    %v973 = vpack.c.bf16 %v900, %v899
    %v974 = vpack.c.bf16 %v902, %v901
    %v975 = vpack.c.bf16 %v904, %v903
    %v976 = vpack.c.bf16 %v906, %v905
    %v977 = vpack.c.bf16 %v908, %v907
    %v978 = vpack.c.bf16 %v910, %v909
    %v979 = vpack.c.bf16 %v912, %v911
    %v980 = vpack.c.bf16 %v914, %v913
    %v981 = vpack.c.bf16 %v916, %v915
    %v982 = vpack.c.bf16 %v918, %v917
    %v983 = vld [vmem:[%s1] sm:$0xf]
    %v984 = vld [vmem:[%s1 + $0x4] sm:$0xf]
    %v985 = vld [vmem:[%s1 + $0x8] sm:$0xf]
    %v986 = vld [vmem:[%s1 + $0xc] sm:$0xf]
    %v987 = vld [vmem:[%s1 + $0x10] sm:$0xf]
    %v988 = vld [vmem:[%s1 + $0x14] sm:$0xf]
    %v989 = vld [vmem:[%s1 + $0x18] sm:$0xf]
    %v990 = vld [vmem:[%s1 + $0x1c] sm:$0xf]
    %v991 = vld [vmem:[%s1 + $0x20] sm:$0xf]
    %v992 = vld [vmem:[%s1 + $0x24] sm:$0xf]
    %v993 = vld [vmem:[%s1 + $0x28] sm:$0xf]
    %v994 = vld [vmem:[%s1 + $0x2c] sm:$0xf]
    %v995 = vld [vmem:[%s1 + $0x30] sm:$0xf]
    %v996 = vld [vmem:[%s1 + $0x34] sm:$0xf]
    %v997 = vld [vmem:[%s1 + $0x38] sm:$0xf]
    %v998 = vld [vmem:[%s1 + $0x3c] sm:$0xf]
    %v999 = vld [vmem:[%s2] sm:$0x1]
    %v1001 = vperm.slane %v999, 0
    %v1019 = vunpack.c.l.b16 %v983
    %v1020 = vunpack.c.l.b16 %v984
    %v1021 = vunpack.c.l.b16 %v985
    %v1022 = vunpack.c.l.b16 %v986
    %v1023 = vunpack.c.l.b16 %v987
    %v1024 = vunpack.c.l.b16 %v988
    %v1025 = vunpack.c.l.b16 %v989
    %v1026 = vunpack.c.l.b16 %v990
    %v1027 = vunpack.c.l.b16 %v991
    %v1028 = vunpack.c.l.b16 %v992
    %v1029 = vunpack.c.l.b16 %v993
    %v1030 = vunpack.c.l.b16 %v994
    %v1031 = vunpack.c.l.b16 %v995
    %v1032 = vunpack.c.l.b16 %v996
    %v1033 = vunpack.c.l.b16 %v997
    %v1034 = vunpack.c.l.b16 %v998
    %v1035 = vpack.c.b16 %v1020, %v1019
    %v1036 = vpack.c.b16 %v1022, %v1021
    %v1037 = vpack.c.b16 %v1024, %v1023
    %v1038 = vpack.c.b16 %v1026, %v1025
    %v1039 = vpack.c.b16 %v1028, %v1027
    %v1040 = vpack.c.b16 %v1030, %v1029
    %v1041 = vpack.c.b16 %v1032, %v1031
    %v1042 = vpack.c.b16 %v1034, %v1033
    %1051 = vmatpush.bf16.msra.mxu0 %v1042
    %1052 = vmatpush.bf16.msra.mxu0 %v1041
    %1053 = vmatpush.bf16.msra.mxu0 %v1040
    %1054 = vmatpush.bf16.msra.mxu0 %v1039
    %1055 = vmatpush.bf16.msra.mxu0 %v1038
    %1056 = vmatpush.bf16.msra.mxu0 %v1037
    %1057 = vmatpush.bf16.msra.mxu0 %v1036
    %1058 = vmatpush.bf16.msra.mxu0 %v1035
    %1059 = vmatmul.bf16.gmra.mxu0 %v919
    %v1060 = vpop.f32.mrf.mxu0
    %v1061 = vadd.f32 %v1001, %v1060
    %v1062 = vpop.f32.mrf.mxu0
    %v1063 = vadd.f32 %v1001, %v1062
    %1064 = vmatmul.bf16.gmra.mxu0 %v920
    %v1065 = vpop.f32.mrf.mxu0
    %v1066 = vadd.f32 %v1001, %v1065
    %v1067 = vpop.f32.mrf.mxu0
    %v1068 = vadd.f32 %v1001, %v1067
    %1069 = vmatmul.bf16.gmra.mxu0 %v921
    %v1070 = vpop.f32.mrf.mxu0
    %v1071 = vadd.f32 %v1001, %v1070
    %v1072 = vpop.f32.mrf.mxu0
    %v1073 = vadd.f32 %v1001, %v1072
    %1074 = vmatmul.bf16.gmra.mxu0 %v922
    %v1075 = vpop.f32.mrf.mxu0
    %v1076 = vadd.f32 %v1001, %v1075
    %v1077 = vpop.f32.mrf.mxu0
    %v1078 = vadd.f32 %v1001, %v1077
    %1079 = vmatmul.bf16.gmra.mxu0 %v923
    %v1080 = vpop.f32.mrf.mxu0
    %v1081 = vadd.f32 %v1001, %v1080
    %v1082 = vpop.f32.mrf.mxu0
    %v1083 = vadd.f32 %v1001, %v1082
    %1084 = vmatmul.bf16.gmra.mxu0 %v924
    %v1085 = vpop.f32.mrf.mxu0
    %v1086 = vadd.f32 %v1001, %v1085
    %v1087 = vpop.f32.mrf.mxu0
    %v1088 = vadd.f32 %v1001, %v1087
    %1089 = vmatmul.bf16.gmra.mxu0 %v925
    %v1090 = vpop.f32.mrf.mxu0
    %v1091 = vadd.f32 %v1001, %v1090
    %v1092 = vpop.f32.mrf.mxu0
    %v1093 = vadd.f32 %v1001, %v1092
    %1094 = vmatmul.bf16.gmra.mxu0 %v926
    %v1095 = vpop.f32.mrf.mxu0
    %v1096 = vadd.f32 %v1001, %v1095
    %v1097 = vpop.f32.mrf.mxu0
    %v1098 = vadd.f32 %v1001, %v1097
    %1099 = vmatmul.bf16.gmra.mxu0 %v927
    %v1100 = vpop.f32.mrf.mxu0
    %v1101 = vadd.f32 %v1001, %v1100
    %v1102 = vpop.f32.mrf.mxu0
    %v1103 = vadd.f32 %v1001, %v1102
    %1104 = vmatmul.bf16.gmra.mxu0 %v928
    %v1105 = vpop.f32.mrf.mxu0
    %v1106 = vadd.f32 %v1001, %v1105
    %v1107 = vpop.f32.mrf.mxu0
    %v1108 = vadd.f32 %v1001, %v1107
    %1109 = vmatmul.bf16.gmra.mxu0 %v929
    %v1110 = vpop.f32.mrf.mxu0
    %v1111 = vadd.f32 %v1001, %v1110
    %v1112 = vpop.f32.mrf.mxu0
    %v1113 = vadd.f32 %v1001, %v1112
    %1114 = vmatmul.bf16.gmra.mxu0 %v930
    %v1115 = vpop.f32.mrf.mxu0
    %v1116 = vadd.f32 %v1001, %v1115
    %v1117 = vpop.f32.mrf.mxu0
    %v1118 = vadd.f32 %v1001, %v1117
    %1119 = vmatmul.bf16.gmra.mxu0 %v931
    %v1120 = vpop.f32.mrf.mxu0
    %v1121 = vadd.f32 %v1001, %v1120
    %v1122 = vpop.f32.mrf.mxu0
    %v1123 = vadd.f32 %v1001, %v1122
    %1124 = vmatmul.bf16.gmra.mxu0 %v932
    %v1125 = vpop.f32.mrf.mxu0
    %v1126 = vadd.f32 %v1001, %v1125
    %v1127 = vpop.f32.mrf.mxu0
    %v1128 = vadd.f32 %v1001, %v1127
    %1129 = vmatmul.bf16.gmra.mxu0 %v933
    %v1130 = vpop.f32.mrf.mxu0
    %v1131 = vadd.f32 %v1001, %v1130
    %v1132 = vpop.f32.mrf.mxu0
    %v1133 = vadd.f32 %v1001, %v1132
    %1134 = vmatmul.bf16.gmra.mxu0 %v934
    %v1135 = vpop.f32.mrf.mxu0
    %v1136 = vadd.f32 %v1001, %v1135
    %v1137 = vpop.f32.mrf.mxu0
    %v1138 = vadd.f32 %v1001, %v1137
    %1139 = vmatmul.bf16.gmra.mxu0 %v935
    %v1140 = vpop.f32.mrf.mxu0
    %v1141 = vadd.f32 %v1001, %v1140
    %v1142 = vpop.f32.mrf.mxu0
    %v1143 = vadd.f32 %v1001, %v1142
    %1144 = vmatmul.bf16.gmra.mxu0 %v936
    %v1145 = vpop.f32.mrf.mxu0
    %v1146 = vadd.f32 %v1001, %v1145
    %v1147 = vpop.f32.mrf.mxu0
    %v1148 = vadd.f32 %v1001, %v1147
    %1149 = vmatmul.bf16.gmra.mxu0 %v937
    %v1150 = vpop.f32.mrf.mxu0
    %v1151 = vadd.f32 %v1001, %v1150
    %v1152 = vpop.f32.mrf.mxu0
    %v1153 = vadd.f32 %v1001, %v1152
    %1154 = vmatmul.bf16.gmra.mxu0 %v938
    %v1155 = vpop.f32.mrf.mxu0
    %v1156 = vadd.f32 %v1001, %v1155
    %v1157 = vpop.f32.mrf.mxu0
    %v1158 = vadd.f32 %v1001, %v1157
    %1159 = vmatmul.bf16.gmra.mxu0 %v939
    %v1160 = vpop.f32.mrf.mxu0
    %v1161 = vadd.f32 %v1001, %v1160
    %v1162 = vpop.f32.mrf.mxu0
    %v1163 = vadd.f32 %v1001, %v1162
    %1164 = vmatmul.bf16.gmra.mxu0 %v940
    %v1165 = vpop.f32.mrf.mxu0
    %v1166 = vadd.f32 %v1001, %v1165
    %v1167 = vpop.f32.mrf.mxu0
    %v1168 = vadd.f32 %v1001, %v1167
    %1169 = vmatmul.bf16.gmra.mxu0 %v941
    %v1170 = vpop.f32.mrf.mxu0
    %v1171 = vadd.f32 %v1001, %v1170
    %v1172 = vpop.f32.mrf.mxu0
    %v1173 = vadd.f32 %v1001, %v1172
    %1174 = vmatmul.bf16.gmra.mxu0 %v942
    %v1175 = vpop.f32.mrf.mxu0
    %v1176 = vadd.f32 %v1001, %v1175
    %v1177 = vpop.f32.mrf.mxu0
    %v1178 = vadd.f32 %v1001, %v1177
    %1179 = vmatmul.bf16.gmra.mxu0 %v943
    %v1180 = vpop.f32.mrf.mxu0
    %v1181 = vadd.f32 %v1001, %v1180
    %v1182 = vpop.f32.mrf.mxu0
    %v1183 = vadd.f32 %v1001, %v1182
    %1184 = vmatmul.bf16.gmra.mxu0 %v944
    %v1185 = vpop.f32.mrf.mxu0
    %v1186 = vadd.f32 %v1001, %v1185
    %v1187 = vpop.f32.mrf.mxu0
    %v1188 = vadd.f32 %v1001, %v1187
    %1189 = vmatmul.bf16.gmra.mxu0 %v945
    %v1190 = vpop.f32.mrf.mxu0
    %v1191 = vadd.f32 %v1001, %v1190
    %v1192 = vpop.f32.mrf.mxu0
    %v1193 = vadd.f32 %v1001, %v1192
    %1194 = vmatmul.bf16.gmra.mxu0 %v946
    %v1195 = vpop.f32.mrf.mxu0
    %v1196 = vadd.f32 %v1001, %v1195
    %v1197 = vpop.f32.mrf.mxu0
    %v1198 = vadd.f32 %v1001, %v1197
    %1199 = vmatmul.bf16.gmra.mxu0 %v947
    %v1200 = vpop.f32.mrf.mxu0
    %v1201 = vadd.f32 %v1001, %v1200
    %v1202 = vpop.f32.mrf.mxu0
    %v1203 = vadd.f32 %v1001, %v1202
    %1204 = vmatmul.bf16.gmra.mxu0 %v948
    %v1205 = vpop.f32.mrf.mxu0
    %v1206 = vadd.f32 %v1001, %v1205
    %v1207 = vpop.f32.mrf.mxu0
    %v1208 = vadd.f32 %v1001, %v1207
    %1209 = vmatmul.bf16.gmra.mxu0 %v949
    %v1210 = vpop.f32.mrf.mxu0
    %v1211 = vadd.f32 %v1001, %v1210
    %v1212 = vpop.f32.mrf.mxu0
    %v1213 = vadd.f32 %v1001, %v1212
    %1214 = vmatmul.bf16.gmra.mxu0 %v950
    %v1215 = vpop.f32.mrf.mxu0
    %v1216 = vadd.f32 %v1001, %v1215
    %v1217 = vpop.f32.mrf.mxu0
    %v1218 = vadd.f32 %v1001, %v1217
    %1219 = vmatmul.bf16.gmra.mxu0 %v951
    %v1220 = vpop.f32.mrf.mxu0
    %v1221 = vadd.f32 %v1001, %v1220
    %v1222 = vpop.f32.mrf.mxu0
    %v1223 = vadd.f32 %v1001, %v1222
    %1224 = vmatmul.bf16.gmra.mxu0 %v952
    %v1225 = vpop.f32.mrf.mxu0
    %v1226 = vadd.f32 %v1001, %v1225
    %v1227 = vpop.f32.mrf.mxu0
    %v1228 = vadd.f32 %v1001, %v1227
    %1229 = vmatmul.bf16.gmra.mxu0 %v953
    %v1230 = vpop.f32.mrf.mxu0
    %v1231 = vadd.f32 %v1001, %v1230
    %v1232 = vpop.f32.mrf.mxu0
    %v1233 = vadd.f32 %v1001, %v1232
    %1234 = vmatmul.bf16.gmra.mxu0 %v954
    %v1235 = vpop.f32.mrf.mxu0
    %v1236 = vadd.f32 %v1001, %v1235
    %v1237 = vpop.f32.mrf.mxu0
    %v1238 = vadd.f32 %v1001, %v1237
    %1239 = vmatmul.bf16.gmra.mxu0 %v955
    %v1240 = vpop.f32.mrf.mxu0
    %v1241 = vadd.f32 %v1001, %v1240
    %v1242 = vpop.f32.mrf.mxu0
    %v1243 = vadd.f32 %v1001, %v1242
    %1244 = vmatmul.bf16.gmra.mxu0 %v956
    %v1245 = vpop.f32.mrf.mxu0
    %v1246 = vadd.f32 %v1001, %v1245
    %v1247 = vpop.f32.mrf.mxu0
    %v1248 = vadd.f32 %v1001, %v1247
    %1249 = vmatmul.bf16.gmra.mxu0 %v957
    %v1250 = vpop.f32.mrf.mxu0
    %v1251 = vadd.f32 %v1001, %v1250
    %v1252 = vpop.f32.mrf.mxu0
    %v1253 = vadd.f32 %v1001, %v1252
    %1254 = vmatmul.bf16.gmra.mxu0 %v958
    %v1255 = vpop.f32.mrf.mxu0
    %v1256 = vadd.f32 %v1001, %v1255
    %v1257 = vpop.f32.mrf.mxu0
    %v1258 = vadd.f32 %v1001, %v1257
    %1259 = vmatmul.bf16.gmra.mxu0 %v959
    %v1260 = vpop.f32.mrf.mxu0
    %v1261 = vadd.f32 %v1001, %v1260
    %v1262 = vpop.f32.mrf.mxu0
    %v1263 = vadd.f32 %v1001, %v1262
    %1264 = vmatmul.bf16.gmra.mxu0 %v960
    %v1265 = vpop.f32.mrf.mxu0
    %v1266 = vadd.f32 %v1001, %v1265
    %v1267 = vpop.f32.mrf.mxu0
    %v1268 = vadd.f32 %v1001, %v1267
    %1269 = vmatmul.bf16.gmra.mxu0 %v961
    %v1270 = vpop.f32.mrf.mxu0
    %v1271 = vadd.f32 %v1001, %v1270
    %v1272 = vpop.f32.mrf.mxu0
    %v1273 = vadd.f32 %v1001, %v1272
    %1274 = vmatmul.bf16.gmra.mxu0 %v962
    %v1275 = vpop.f32.mrf.mxu0
    %v1276 = vadd.f32 %v1001, %v1275
    %v1277 = vpop.f32.mrf.mxu0
    %v1278 = vadd.f32 %v1001, %v1277
    %1279 = vmatmul.bf16.gmra.mxu0 %v963
    %v1280 = vpop.f32.mrf.mxu0
    %v1281 = vadd.f32 %v1001, %v1280
    %v1282 = vpop.f32.mrf.mxu0
    %v1283 = vadd.f32 %v1001, %v1282
    %1284 = vmatmul.bf16.gmra.mxu0 %v964
    %v1285 = vpop.f32.mrf.mxu0
    %v1286 = vadd.f32 %v1001, %v1285
    %v1287 = vpop.f32.mrf.mxu0
    %v1288 = vadd.f32 %v1001, %v1287
    %1289 = vmatmul.bf16.gmra.mxu0 %v965
    %v1290 = vpop.f32.mrf.mxu0
    %v1291 = vadd.f32 %v1001, %v1290
    %v1292 = vpop.f32.mrf.mxu0
    %v1293 = vadd.f32 %v1001, %v1292
    %1294 = vmatmul.bf16.gmra.mxu0 %v966
    %v1295 = vpop.f32.mrf.mxu0
    %v1296 = vadd.f32 %v1001, %v1295
    %v1297 = vpop.f32.mrf.mxu0
    %v1298 = vadd.f32 %v1001, %v1297
    %1299 = vmatmul.bf16.gmra.mxu0 %v967
    %v1300 = vpop.f32.mrf.mxu0
    %v1301 = vadd.f32 %v1001, %v1300
    %v1302 = vpop.f32.mrf.mxu0
    %v1303 = vadd.f32 %v1001, %v1302
    %1304 = vmatmul.bf16.gmra.mxu0 %v968
    %v1305 = vpop.f32.mrf.mxu0
    %v1306 = vadd.f32 %v1001, %v1305
    %v1307 = vpop.f32.mrf.mxu0
    %v1308 = vadd.f32 %v1001, %v1307
    %1309 = vmatmul.bf16.gmra.mxu0 %v969
    %v1310 = vpop.f32.mrf.mxu0
    %v1311 = vadd.f32 %v1001, %v1310
    %v1312 = vpop.f32.mrf.mxu0
    %v1313 = vadd.f32 %v1001, %v1312
    %1314 = vmatmul.bf16.gmra.mxu0 %v970
    %v1315 = vpop.f32.mrf.mxu0
    %v1316 = vadd.f32 %v1001, %v1315
    %v1317 = vpop.f32.mrf.mxu0
    %v1318 = vadd.f32 %v1001, %v1317
    %1319 = vmatmul.bf16.gmra.mxu0 %v971
    %v1320 = vpop.f32.mrf.mxu0
    %v1321 = vadd.f32 %v1001, %v1320
    %v1322 = vpop.f32.mrf.mxu0
    %v1323 = vadd.f32 %v1001, %v1322
    %1324 = vmatmul.bf16.gmra.mxu0 %v972
    %v1325 = vpop.f32.mrf.mxu0
    %v1326 = vadd.f32 %v1001, %v1325
    %v1327 = vpop.f32.mrf.mxu0
    %v1328 = vadd.f32 %v1001, %v1327
    %1329 = vmatmul.bf16.gmra.mxu0 %v973
    %v1330 = vpop.f32.mrf.mxu0
    %v1331 = vadd.f32 %v1001, %v1330
    %v1332 = vpop.f32.mrf.mxu0
    %v1333 = vadd.f32 %v1001, %v1332
    %1334 = vmatmul.bf16.gmra.mxu0 %v974
    %v1335 = vpop.f32.mrf.mxu0
    %v1336 = vadd.f32 %v1001, %v1335
    %v1337 = vpop.f32.mrf.mxu0
    %v1338 = vadd.f32 %v1001, %v1337
    %1339 = vmatmul.bf16.gmra.mxu0 %v975
    %v1340 = vpop.f32.mrf.mxu0
    %v1341 = vadd.f32 %v1001, %v1340
    %v1342 = vpop.f32.mrf.mxu0
    %v1343 = vadd.f32 %v1001, %v1342
    %1344 = vmatmul.bf16.gmra.mxu0 %v976
    %v1345 = vpop.f32.mrf.mxu0
    %v1346 = vadd.f32 %v1001, %v1345
    %v1347 = vpop.f32.mrf.mxu0
    %v1348 = vadd.f32 %v1001, %v1347
    %1349 = vmatmul.bf16.gmra.mxu0 %v977
    %v1350 = vpop.f32.mrf.mxu0
    %v1351 = vadd.f32 %v1001, %v1350
    %v1352 = vpop.f32.mrf.mxu0
    %v1353 = vadd.f32 %v1001, %v1352
    %1354 = vmatmul.bf16.gmra.mxu0 %v978
    %v1355 = vpop.f32.mrf.mxu0
    %v1356 = vadd.f32 %v1001, %v1355
    %v1357 = vpop.f32.mrf.mxu0
    %v1358 = vadd.f32 %v1001, %v1357
    %1359 = vmatmul.bf16.gmra.mxu0 %v979
    %v1360 = vpop.f32.mrf.mxu0
    %v1361 = vadd.f32 %v1001, %v1360
    %v1362 = vpop.f32.mrf.mxu0
    %v1363 = vadd.f32 %v1001, %v1362
    %1364 = vmatmul.bf16.gmra.mxu0 %v980
    %v1365 = vpop.f32.mrf.mxu0
    %v1366 = vadd.f32 %v1001, %v1365
    %v1367 = vpop.f32.mrf.mxu0
    %v1368 = vadd.f32 %v1001, %v1367
    %1369 = vmatmul.bf16.gmra.mxu0 %v981
    %v1370 = vpop.f32.mrf.mxu0
    %v1371 = vadd.f32 %v1001, %v1370
    %v1372 = vpop.f32.mrf.mxu0
    %v1373 = vadd.f32 %v1001, %v1372
    %1374 = vmatmul.bf16.gmra.mxu0 %v982
    %v1375 = vpop.f32.mrf.mxu0
    %v1376 = vadd.f32 %v1001, %v1375
    %v1377 = vpop.f32.mrf.mxu0
    %v1378 = vadd.f32 %v1001, %v1377
    %1379 = vdwg.mxu0
    %v1380 = vmax.f32 %v1061, 0.0
    %v1381 = vmax.f32 %v1063, 0.0
    %v1382 = vmax.f32 %v1066, 0.0
    %v1383 = vmax.f32 %v1068, 0.0
    %v1384 = vmax.f32 %v1071, 0.0
    %v1385 = vmax.f32 %v1073, 0.0
    %v1386 = vmax.f32 %v1076, 0.0
    %v1387 = vmax.f32 %v1078, 0.0
    %v1388 = vmax.f32 %v1081, 0.0
    %v1389 = vmax.f32 %v1083, 0.0
    %v1390 = vmax.f32 %v1086, 0.0
    %v1391 = vmax.f32 %v1088, 0.0
    %v1392 = vmax.f32 %v1091, 0.0
    %v1393 = vmax.f32 %v1093, 0.0
    %v1394 = vmax.f32 %v1096, 0.0
    %v1395 = vmax.f32 %v1098, 0.0
    %v1396 = vmax.f32 %v1101, 0.0
    %v1397 = vmax.f32 %v1103, 0.0
    %v1398 = vmax.f32 %v1106, 0.0
    %v1399 = vmax.f32 %v1108, 0.0
    %v1400 = vmax.f32 %v1111, 0.0
    %v1401 = vmax.f32 %v1113, 0.0
    %v1402 = vmax.f32 %v1116, 0.0
    %v1403 = vmax.f32 %v1118, 0.0
    %v1404 = vmax.f32 %v1121, 0.0
    %v1405 = vmax.f32 %v1123, 0.0
    %v1406 = vmax.f32 %v1126, 0.0
    %v1407 = vmax.f32 %v1128, 0.0
    %v1408 = vmax.f32 %v1131, 0.0
    %v1409 = vmax.f32 %v1133, 0.0
    %v1410 = vmax.f32 %v1136, 0.0
    %v1411 = vmax.f32 %v1138, 0.0
    %v1412 = vmax.f32 %v1141, 0.0
    %v1413 = vmax.f32 %v1143, 0.0
    %v1414 = vmax.f32 %v1146, 0.0
    %v1415 = vmax.f32 %v1148, 0.0
    %v1416 = vmax.f32 %v1151, 0.0
    %v1417 = vmax.f32 %v1153, 0.0
    %v1418 = vmax.f32 %v1156, 0.0
    %v1419 = vmax.f32 %v1158, 0.0
    %v1420 = vmax.f32 %v1161, 0.0
    %v1421 = vmax.f32 %v1163, 0.0
    %v1422 = vmax.f32 %v1166, 0.0
    %v1423 = vmax.f32 %v1168, 0.0
    %v1424 = vmax.f32 %v1171, 0.0
    %v1425 = vmax.f32 %v1173, 0.0
    %v1426 = vmax.f32 %v1176, 0.0
    %v1427 = vmax.f32 %v1178, 0.0
    %v1428 = vmax.f32 %v1181, 0.0
    %v1429 = vmax.f32 %v1183, 0.0
    %v1430 = vmax.f32 %v1186, 0.0
    %v1431 = vmax.f32 %v1188, 0.0
    %v1432 = vmax.f32 %v1191, 0.0
    %v1433 = vmax.f32 %v1193, 0.0
    %v1434 = vmax.f32 %v1196, 0.0
    %v1435 = vmax.f32 %v1198, 0.0
    %v1436 = vmax.f32 %v1201, 0.0
    %v1437 = vmax.f32 %v1203, 0.0
    %v1438 = vmax.f32 %v1206, 0.0
    %v1439 = vmax.f32 %v1208, 0.0
    %v1440 = vmax.f32 %v1211, 0.0
    %v1441 = vmax.f32 %v1213, 0.0
    %v1442 = vmax.f32 %v1216, 0.0
    %v1443 = vmax.f32 %v1218, 0.0
    %v1444 = vmax.f32 %v1221, 0.0
    %v1445 = vmax.f32 %v1223, 0.0
    %v1446 = vmax.f32 %v1226, 0.0
    %v1447 = vmax.f32 %v1228, 0.0
    %v1448 = vmax.f32 %v1231, 0.0
    %v1449 = vmax.f32 %v1233, 0.0
    %v1450 = vmax.f32 %v1236, 0.0
    %v1451 = vmax.f32 %v1238, 0.0
    %v1452 = vmax.f32 %v1241, 0.0
    %v1453 = vmax.f32 %v1243, 0.0
    %v1454 = vmax.f32 %v1246, 0.0
    %v1455 = vmax.f32 %v1248, 0.0
    %v1456 = vmax.f32 %v1251, 0.0
    %v1457 = vmax.f32 %v1253, 0.0
    %v1458 = vmax.f32 %v1256, 0.0
    %v1459 = vmax.f32 %v1258, 0.0
    %v1460 = vmax.f32 %v1261, 0.0
    %v1461 = vmax.f32 %v1263, 0.0
    %v1462 = vmax.f32 %v1266, 0.0
    %v1463 = vmax.f32 %v1268, 0.0
    %v1464 = vmax.f32 %v1271, 0.0
    %v1465 = vmax.f32 %v1273, 0.0
    %v1466 = vmax.f32 %v1276, 0.0
    %v1467 = vmax.f32 %v1278, 0.0
    %v1468 = vmax.f32 %v1281, 0.0
    %v1469 = vmax.f32 %v1283, 0.0
    %v1470 = vmax.f32 %v1286, 0.0
    %v1471 = vmax.f32 %v1288, 0.0
    %v1472 = vmax.f32 %v1291, 0.0
    %v1473 = vmax.f32 %v1293, 0.0
    %v1474 = vmax.f32 %v1296, 0.0
    %v1475 = vmax.f32 %v1298, 0.0
    %v1476 = vmax.f32 %v1301, 0.0
    %v1477 = vmax.f32 %v1303, 0.0
    %v1478 = vmax.f32 %v1306, 0.0
    %v1479 = vmax.f32 %v1308, 0.0
    %v1480 = vmax.f32 %v1311, 0.0
    %v1481 = vmax.f32 %v1313, 0.0
    %v1482 = vmax.f32 %v1316, 0.0
    %v1483 = vmax.f32 %v1318, 0.0
    %v1484 = vmax.f32 %v1321, 0.0
    %v1485 = vmax.f32 %v1323, 0.0
    %v1486 = vmax.f32 %v1326, 0.0
    %v1487 = vmax.f32 %v1328, 0.0
    %v1488 = vmax.f32 %v1331, 0.0
    %v1489 = vmax.f32 %v1333, 0.0
    %v1490 = vmax.f32 %v1336, 0.0
    %v1491 = vmax.f32 %v1338, 0.0
    %v1492 = vmax.f32 %v1341, 0.0
    %v1493 = vmax.f32 %v1343, 0.0
    %v1494 = vmax.f32 %v1346, 0.0
    %v1495 = vmax.f32 %v1348, 0.0
    %v1496 = vmax.f32 %v1351, 0.0
    %v1497 = vmax.f32 %v1353, 0.0
    %v1498 = vmax.f32 %v1356, 0.0
    %v1499 = vmax.f32 %v1358, 0.0
    %v1500 = vmax.f32 %v1361, 0.0
    %v1501 = vmax.f32 %v1363, 0.0
    %v1502 = vmax.f32 %v1366, 0.0
    %v1503 = vmax.f32 %v1368, 0.0
    %v1504 = vmax.f32 %v1371, 0.0
    %v1505 = vmax.f32 %v1373, 0.0
    %v1506 = vmax.f32 %v1376, 0.0
    %v1507 = vmax.f32 %v1378, 0.0
    %v1508 = vmax.f32 %v1380, %v1384
    %v1509 = vmax.f32 %v1382, %v1386
    %v1510 = vmax.f32 %v1508, %v1388
    %v1511 = vmax.f32 %v1509, %v1390
    %v1512 = vmax.f32 %v1510, %v1392
    %v1513 = vmax.f32 %v1511, %v1394
    %v1514 = vmax.f32 %v1512, %v1396
    %v1515 = vmax.f32 %v1513, %v1398
    %v1516 = vmax.f32 %v1514, %v1400
    %v1517 = vmax.f32 %v1515, %v1402
    %v1518 = vmax.f32 %v1516, %v1404
    %v1519 = vmax.f32 %v1517, %v1406
    %v1520 = vmax.f32 %v1518, %v1408
    %v1521 = vmax.f32 %v1519, %v1410
    %v1522 = vmax.f32 %v1520, %v1412
    %v1523 = vmax.f32 %v1521, %v1414
    %v1524 = vmax.f32 %v1522, %v1416
    %v1525 = vmax.f32 %v1523, %v1418
    %v1526 = vmax.f32 %v1524, %v1420
    %v1527 = vmax.f32 %v1525, %v1422
    %v1528 = vmax.f32 %v1526, %v1424
    %v1529 = vmax.f32 %v1527, %v1426
    %v1530 = vmax.f32 %v1528, %v1428
    %v1531 = vmax.f32 %v1529, %v1430
    %v1532 = vmax.f32 %v1530, %v1432
    %v1533 = vmax.f32 %v1531, %v1434
    %v1534 = vmax.f32 %v1532, %v1436
    %v1535 = vmax.f32 %v1533, %v1438
    %v1536 = vmax.f32 %v1534, %v1440
    %v1537 = vmax.f32 %v1535, %v1442
    %v1538 = vmax.f32 %v1536, %v1444
    %v1539 = vmax.f32 %v1537, %v1446
    %v1540 = vmax.f32 %v1538, %v1448
    %v1541 = vmax.f32 %v1539, %v1450
    %v1542 = vmax.f32 %v1540, %v1452
    %v1543 = vmax.f32 %v1541, %v1454
    %v1544 = vmax.f32 %v1542, %v1456
    %v1545 = vmax.f32 %v1543, %v1458
    %v1546 = vmax.f32 %v1544, %v1460
    %v1547 = vmax.f32 %v1545, %v1462
    %v1548 = vmax.f32 %v1546, %v1464
    %v1549 = vmax.f32 %v1547, %v1466
    %v1550 = vmax.f32 %v1548, %v1468
    %v1551 = vmax.f32 %v1549, %v1470
    %v1552 = vmax.f32 %v1550, %v1472
    %v1553 = vmax.f32 %v1551, %v1474
    %v1554 = vmax.f32 %v1552, %v1476
    %v1555 = vmax.f32 %v1553, %v1478
    %v1556 = vmax.f32 %v1554, %v1480
    %v1557 = vmax.f32 %v1555, %v1482
    %v1558 = vmax.f32 %v1556, %v1484
    %v1559 = vmax.f32 %v1557, %v1486
    %v1560 = vmax.f32 %v1558, %v1488
    %v1561 = vmax.f32 %v1559, %v1490
    %v1562 = vmax.f32 %v1560, %v1492
    %v1563 = vmax.f32 %v1561, %v1494
    %v1564 = vmax.f32 %v1562, %v1496
    %v1565 = vmax.f32 %v1563, %v1498
    %v1566 = vmax.f32 %v1564, %v1500
    %v1567 = vmax.f32 %v1565, %v1502
    %v1568 = vmax.f32 %v1566, %v1504
    %v1569 = vmax.f32 %v1567, %v1506
    %v1570 = vmax.f32 %v1568, %v1569
    %v1571 = vmax.f32 %v1381, %v1385
    %v1572 = vmax.f32 %v1383, %v1387
    %v1573 = vmax.f32 %v1571, %v1389
    %v1574 = vmax.f32 %v1572, %v1391
    %v1575 = vmax.f32 %v1573, %v1393
    %v1576 = vmax.f32 %v1574, %v1395
    %v1577 = vmax.f32 %v1575, %v1397
    %v1578 = vmax.f32 %v1576, %v1399
    %v1579 = vmax.f32 %v1577, %v1401
    %v1580 = vmax.f32 %v1578, %v1403
    %v1581 = vmax.f32 %v1579, %v1405
    %v1582 = vmax.f32 %v1580, %v1407
    %v1583 = vmax.f32 %v1581, %v1409
    %v1584 = vmax.f32 %v1582, %v1411
    %v1585 = vmax.f32 %v1583, %v1413
    %v1586 = vmax.f32 %v1584, %v1415
    %v1587 = vmax.f32 %v1585, %v1417
    %v1588 = vmax.f32 %v1586, %v1419
    %v1589 = vmax.f32 %v1587, %v1421
    %v1590 = vmax.f32 %v1588, %v1423
    %v1591 = vmax.f32 %v1589, %v1425
    %v1592 = vmax.f32 %v1590, %v1427
    %v1593 = vmax.f32 %v1591, %v1429
    %v1594 = vmax.f32 %v1592, %v1431
    %v1595 = vmax.f32 %v1593, %v1433
    %v1596 = vmax.f32 %v1594, %v1435
    %v1597 = vmax.f32 %v1595, %v1437
    %v1598 = vmax.f32 %v1596, %v1439
    %v1599 = vmax.f32 %v1597, %v1441
    %v1600 = vmax.f32 %v1598, %v1443
    %v1601 = vmax.f32 %v1599, %v1445
    %v1602 = vmax.f32 %v1600, %v1447
    %v1603 = vmax.f32 %v1601, %v1449
    %v1604 = vmax.f32 %v1602, %v1451
    %v1605 = vmax.f32 %v1603, %v1453
    %v1606 = vmax.f32 %v1604, %v1455
    %v1607 = vmax.f32 %v1605, %v1457
    %v1608 = vmax.f32 %v1606, %v1459
    %v1609 = vmax.f32 %v1607, %v1461
    %v1610 = vmax.f32 %v1608, %v1463
    %v1611 = vmax.f32 %v1609, %v1465
    %v1612 = vmax.f32 %v1610, %v1467
    %v1613 = vmax.f32 %v1611, %v1469
    %v1614 = vmax.f32 %v1612, %v1471
    %v1615 = vmax.f32 %v1613, %v1473
    %v1616 = vmax.f32 %v1614, %v1475
    %v1617 = vmax.f32 %v1615, %v1477
    %v1618 = vmax.f32 %v1616, %v1479
    %v1619 = vmax.f32 %v1617, %v1481
    %v1620 = vmax.f32 %v1618, %v1483
    %v1621 = vmax.f32 %v1619, %v1485
    %v1622 = vmax.f32 %v1620, %v1487
    %v1623 = vmax.f32 %v1621, %v1489
    %v1624 = vmax.f32 %v1622, %v1491
    %v1625 = vmax.f32 %v1623, %v1493
    %v1626 = vmax.f32 %v1624, %v1495
    %v1627 = vmax.f32 %v1625, %v1497
    %v1628 = vmax.f32 %v1626, %v1499
    %v1629 = vmax.f32 %v1627, %v1501
    %v1630 = vmax.f32 %v1628, %v1503
    %v1631 = vmax.f32 %v1629, %v1505
    %v1632 = vmax.f32 %v1630, %v1507
    %v1633 = vmax.f32 %v1631, %v1632
    %p1634 = scmp.eq.s32.totalorder 0, 0
    // Predicated region
    $region22: #{tpu_custom_call.1} parent=1 // pred_check
      %p1635 = pneg %p1634
    $region23: #{tpu_custom_call.1} parent=1 // pred_check_branch
      %1637 = sbr.rel (%p1635) target = $region25
    $region24: #{tpu_custom_call.1} parent=1 // pred_region
      %1638 = vst [vmem:[#allocation2] sm:$0xff] %v1570
      %1639 = vst [vmem:[#allocation2 + $0x8] sm:$0xff] %v1633
    $region25: #{tpu_custom_call.1} parent=1 // pred_fallthru
      _
    %p1640 = scmp.gt.s32.totalorder 0, 0
    // Predicated region
    $region26: #{tpu_custom_call.1} parent=1 // pred_check
      %p1641 = pneg %p1640
    $region27: #{tpu_custom_call.1} parent=1 // pred_check_branch
      %1643 = sbr.rel (%p1641) target = $region29
    $region28: #{tpu_custom_call.1} parent=1 // pred_region
      %v1644 = vld [vmem:[#allocation2] sm:$0xff]
      %v1645 = vld [vmem:[#allocation2 + $0x8] sm:$0xff]
      %v1646 = vmax.f32 %v1644, %v1570
      %v1647 = vmax.f32 %v1645, %v1633
      %1648 = vst [vmem:[#allocation2] sm:$0xff] %v1646
      %1649 = vst [vmem:[#allocation2 + $0x8] sm:$0xff] %v1647
    $region29: #{tpu_custom_call.1} parent=1 // pred_fallthru
      _
    // Predicated region
    $region30: #{tpu_custom_call.1} parent=1 // pred_check
      %p1650 = pneg %p1634
    $region31: #{tpu_custom_call.1} parent=1 // pred_check_branch
      %1652 = sbr.rel (%p1650) target = $region33
    $region32: #{tpu_custom_call.1} parent=1 // pred_region
      %v1653 = vld [vmem:[#allocation2] sm:$0xff]
      %v1654 = vld [vmem:[#allocation2 + $0x8] sm:$0xff]
      %v1655 = vpack.c.bf16 %v1654, %v1653
      %v1656 = vld [vmem:[%s3] sm:$0xf]
      %v1657 = vld [vmem:[%s3 + $0x4] sm:$0xf]
      %v1658 = vld [vmem:[%s3 + $0x8] sm:$0xf]
      %v1659 = vld [vmem:[%s3 + $0xc] sm:$0xf]
      %v1660 = vld [vmem:[%s3 + $0x10] sm:$0xf]
      %v1661 = vld [vmem:[%s3 + $0x14] sm:$0xf]
      %v1662 = vld [vmem:[%s3 + $0x18] sm:$0xf]
      %v1663 = vld [vmem:[%s3 + $0x1c] sm:$0xf]
      %v1664 = vld [vmem:[%s3 + $0x20] sm:$0xf]
      %v1665 = vld [vmem:[%s3 + $0x24] sm:$0xf]
      %v1666 = vld [vmem:[%s3 + $0x28] sm:$0xf]
      %v1667 = vld [vmem:[%s3 + $0x2c] sm:$0xf]
      %v1668 = vld [vmem:[%s3 + $0x30] sm:$0xf]
      %v1669 = vld [vmem:[%s3 + $0x34] sm:$0xf]
      %v1670 = vld [vmem:[%s3 + $0x38] sm:$0xf]
      %v1671 = vld [vmem:[%s3 + $0x3c] sm:$0xf]
      %v1672 = vld [vmem:[%s4] sm:$0x1]
      %v1674 = vperm.slane %v1672, 0
      %v1692 = vunpack.c.l.b16 %v1656
      %v1693 = vunpack.c.l.b16 %v1657
      %v1694 = vunpack.c.l.b16 %v1658
      %v1695 = vunpack.c.l.b16 %v1659
      %v1696 = vunpack.c.l.b16 %v1660
      %v1697 = vunpack.c.l.b16 %v1661
      %v1698 = vunpack.c.l.b16 %v1662
      %v1699 = vunpack.c.l.b16 %v1663
      %v1700 = vunpack.c.l.b16 %v1664
      %v1701 = vunpack.c.l.b16 %v1665
      %v1702 = vunpack.c.l.b16 %v1666
      %v1703 = vunpack.c.l.b16 %v1667
      %v1704 = vunpack.c.l.b16 %v1668
      %v1705 = vunpack.c.l.b16 %v1669
      %v1706 = vunpack.c.l.b16 %v1670
      %v1707 = vunpack.c.l.b16 %v1671
      %v1708 = vpack.c.b16 %v1693, %v1692
      %v1709 = vpack.c.b16 %v1695, %v1694
      %v1710 = vpack.c.b16 %v1697, %v1696
      %v1711 = vpack.c.b16 %v1699, %v1698
      %v1712 = vpack.c.b16 %v1701, %v1700
      %v1713 = vpack.c.b16 %v1703, %v1702
      %v1714 = vpack.c.b16 %v1705, %v1704
      %v1715 = vpack.c.b16 %v1707, %v1706
      %1724 = vmatpush.bf16.msra.mxu0 %v1715
      %1725 = vmatpush.bf16.msra.mxu0 %v1714
      %1726 = vmatpush.bf16.msra.mxu0 %v1713
      %1727 = vmatpush.bf16.msra.mxu0 %v1712
      %1728 = vmatpush.bf16.msra.mxu0 %v1711
      %1729 = vmatpush.bf16.msra.mxu0 %v1710
      %1730 = vmatpush.bf16.msra.mxu0 %v1709
      %1731 = vmatpush.bf16.msra.mxu0 %v1708
      %1732 = vmatmul.bf16.gmra.mxu0 %v1655
      %v1733 = vpop.f32.mrf.mxu0
      %v1734 = vadd.f32 %v1674, %v1733
      %v1735 = vpop.f32.mrf.mxu0
      %v1736 = vadd.f32 %v1674, %v1735
      %1737 = vdwg.mxu0
      %1738 = vst [vmem:[#allocation3] sm:$0xff] %v1734
      %1739 = vst [vmem:[#allocation3 + $0x8] sm:$0xff] %v1736
    $region33: #{tpu_custom_call.1} parent=1 // pred_fallthru
      _
    // Predicated region
    $region34: #{tpu_custom_call.1} parent=1 // pred_check
      _
    $region35: #{tpu_custom_call.1} parent=1 // pred_check_branch
      %1741 = sbr.rel (0) target = $region37
    $region36: #{tpu_custom_call.1} parent=1 // pred_region
      %1743 = vsyncadd [#allocation4], 0
      %s1744 = sshll.u32 [#allocation3], 4
      %s1745 = int_to_ptr.vmem [resolvable:$true] %s1744
      %s1746 = sshll.u32 %s5, 4
      %s1747 = int_to_ptr.hbm [resolvable:$true] %s1746
      %1752 = dma.vmem_to_hbm [thread:$0]  %s1745, 256, %s1747, [#allocation4], 128, 128, 8
    $region37: #{tpu_custom_call.1} parent=1 // pred_fallthru
      _
    // Predicated region
    $region38: #{tpu_custom_call.1} parent=1 // pred_check
      _
    $region39: #{tpu_custom_call.1} parent=1 // pred_check_branch
      %1754 = sbr.rel (0) target = $region41
    $region40: #{tpu_custom_call.1} parent=1 // pred_region
      %1756 = dma.done [#allocation4], 256
    $region41: #{tpu_custom_call.1} parent=1 // pred_fallthru
      _
    %1757 = vsyncpa [#allocation4], 1

</llo_original>
